<compile_context>
chip_gen: v7x
topology: tpu7x:2x2x1
jax: 0.10.0
libtpu: 0.0.40
codegen_flags: <defaults>
</compile_context>

<pallas_src>
import functools

import jax
import jax.numpy as jnp
from jax import lax
from jax.experimental import pallas as pl
from jax.experimental.pallas import tpu as pltpu


def _mlp_kernel(x_ref, w1_ref, w2_ref, aux_ref, b3_ref, o_ref):
    """Fused MLP for one row-tile of the input.

    Shapes seen inside the kernel:
      x_ref  : (TILE_N, D)        input rows (cast to bf16 on load)
      w1_ref : (H, D)   bf16      fc1 weight, PyTorch (out, in) layout
      w2_ref : (H, H)   bf16      fc2 weight
      aux_ref: (H, 8)   f32       col0 = b1, col1 = b2, col2 = w3 (head column)
      b3_ref : (1,)     f32       head bias scalar (SMEM)
      o_ref  : (1, TILE_N)        lane-dense logits tile
    """
    x = x_ref[...].astype(jnp.bfloat16)                       # (T, D)

    # fc1 + SiLU:  W1 @ x^T -> (H, T).  The rhs "transpose" is expressed via
    # the contracting dims, not materialized.
    h = lax.dot_general(w1_ref[...], x, (((1,), (1,)), ((), ())),
                        preferred_element_type=jnp.float32)
    h = h + aux_ref[:, 0:1]
    h = h * pl.reciprocal(1.0 + jnp.exp(-h), approx=True)     # SiLU (f32)

    # fc2 + SiLU:  (H, H) @ (H, T) -> (H, T), bf16 MXU, f32 accumulate.
    h = jnp.dot(w2_ref[...], h.astype(jnp.bfloat16),
                preferred_element_type=jnp.float32)
    h = h + aux_ref[:, 1:2]
    h = h * pl.reciprocal(1.0 + jnp.exp(-h), approx=True)

    # Head (H -> 1) on the idle MXU: w3^T @ h -> (1, T), lane dense.
    logits = lax.dot_general(aux_ref[:, 2:3], h, (((0,), (0,)), ((), ())),
                             preferred_element_type=jnp.float32)
    o_ref[...] = (logits + b3_ref[0]).astype(o_ref.dtype)


@functools.partial(jax.jit, static_argnames=("tile_n",))
def dual_graph_bond_reactivity(dual_node_emb, params, *, tile_n=1024):
    """Runs the Pallas kernel. Returns bond logits of shape (N,)."""
    w1, b1, w2, b2, w3, b3 = params
    n, d = dual_node_emb.shape
    hd = w1.shape[0]

    # Keep >= 2 grid steps whenever N allows (v7x shards the "parallel" axis
    # across both TensorCores); tile stays a multiple of 128 so every output
    # block is lane-dense even when N is not a tile multiple.
    half_rounded = pl.cdiv(pl.cdiv(n, 2), 128) * 128
    eff_tile = max(128, min(tile_n, half_rounded))
    grid = (pl.cdiv(n, eff_tile),)

    # Weights in bf16 for the MXU (tiny, cast once outside the kernel).
    w1_b = w1.astype(jnp.bfloat16)
    w2_b = w2.astype(jnp.bfloat16)

    # Pack per-channel vectors into a single (H, 8) f32 block:
    #   col 0: b1, col 1: b2, col 2: w3 (head weight as a column), rest zero.
    aux = jnp.concatenate(
        [b1.reshape(hd, 1), b2.reshape(hd, 1), w3.reshape(hd, 1),
         jnp.zeros((hd, 5), jnp.float32)], axis=1).astype(jnp.float32)
    b3_vec = b3.reshape(1).astype(jnp.float32)

    full = lambda i: (0, 0)
    out = pl.pallas_call(
        _mlp_kernel,
        out_shape=jax.ShapeDtypeStruct((1, n), jnp.float32),
        grid_spec=pltpu.PrefetchScalarGridSpec(
            num_scalar_prefetch=0,
            grid=grid,
            in_specs=[
                pl.BlockSpec((eff_tile, d), lambda i: (i, 0)),      # x tile
                pl.BlockSpec((hd, d), full),                        # W1
                pl.BlockSpec((hd, hd), full),                       # W2
                pl.BlockSpec((hd, 8), full),                        # [b1|b2|w3]
                pl.BlockSpec(memory_space=pltpu.MemorySpace.SMEM),  # b3 scalar
            ],
            out_specs=pl.BlockSpec((1, eff_tile), lambda i: (0, i)),
        ),
        compiler_params=pltpu.CompilerParams(
            dimension_semantics=("parallel",),
        ),
    )(dual_node_emb, w1_b, w2_b, aux, b3_vec)

    return out[0]  # (N,) == PyTorch .squeeze(-1)


def init_params(key, dual_node_emb_dim, hidden_dim):
    """Deterministic synthetic parameters in PyTorch nn.Linear layout:
       weight (out_features, in_features), bias (out_features,)."""
    k1, k2, k3, k4, k5, k6 = jax.random.split(key, 6)

    def uinit(k, fan_in, shape):
        bound = 1.0 / jnp.sqrt(fan_in)
        return jax.random.uniform(k, shape, jnp.float32, -bound, bound)

    w1 = uinit(k1, dual_node_emb_dim, (hidden_dim, dual_node_emb_dim))
    b1 = uinit(k2, dual_node_emb_dim, (hidden_dim,))
    w2 = uinit(k3, hidden_dim, (hidden_dim, hidden_dim))
    b2 = uinit(k4, hidden_dim, (hidden_dim,))
    w3 = uinit(k5, hidden_dim, (1, hidden_dim))
    b3 = uinit(k6, hidden_dim, (1,))
    return (w1, b1, w2, b2, w3, b3)


def reference_forward(x, params):
    """Pure-JAX f32 reference matching the PyTorch module."""
    w1, b1, w2, b2, w3, b3 = params
    h = jax.nn.silu(x @ w1.T + b1)
    h = jax.nn.silu(h @ w2.T + b2)
    return (h @ w3.T + b3)[:, 0]


if __name__ == "__main__":
    # N dual-graph nodes (bonds), embedding dim D, hidden dim H.
    # N is deliberately NOT a tile multiple to exercise ragged-block handling;
    # eff_tile=1024 -> a 2-step "parallel" grid (both v7x TensorCores busy).
    N, D, H = 2000, 32, 128

    key = jax.random.PRNGKey(0)
    k_x, k_p = jax.random.split(key)
    x = jax.random.normal(k_x, (N, D), dtype=jnp.float32)
    params = init_params(k_p, D, H)

    logits = dual_graph_bond_reactivity(x, params)
    logits = jax.block_until_ready(logits)

    ref = reference_forward(x, params)
    assert logits.shape == (N,)
    # bf16 MXU inputs + approx-reciprocal sigmoid => slightly looser tolerance
    # than pure-f32 (accumulation stays f32).
    assert jnp.allclose(logits, ref, atol=3e-2, rtol=3e-2), float(
        jnp.max(jnp.abs(logits - ref)))

    print("KERNEL_OK")
</pallas_src>

<mosaic_0001>
module attributes {stable_mosaic.version = 11 : i64} {
  func.func @_mlp_kernel(%arg0: i32, %arg1: memref<1024x32xf32, #tpu.memory_space<vmem>>, %arg2: memref<128x32xbf16, #tpu.memory_space<vmem>>, %arg3: memref<128x128xbf16, #tpu.memory_space<vmem>>, %arg4: memref<128x8xf32, #tpu.memory_space<vmem>>, %arg5: memref<1xf32, #tpu.memory_space<smem>>, %arg6: memref<1x1024xf32, #tpu.memory_space<vmem>>) attributes {dimension_semantics = [#tpu.dimension_semantics<parallel>], iteration_bounds = array<i64: 2>, scalar_prefetch = 0 : i64, scratch_operands = 0 : i64, tpu.core_type = #tpu.core_type<tc>, window_params = [{transform_indices = @transform_0, window_bounds = array<i64: 1024, 32>}, {pipeline_mode = #tpu.pipeline_mode<synchronous>, transform_indices = @transform_1, window_bounds = array<i64: 128, 32>}, {pipeline_mode = #tpu.pipeline_mode<synchronous>, transform_indices = @transform_2, window_bounds = array<i64: 128, 128>}, {pipeline_mode = #tpu.pipeline_mode<synchronous>, transform_indices = @transform_3, window_bounds = array<i64: 128, 8>}, {transform_indices = @transform_4, window_bounds = array<i64: 1>}, {transform_indices = @transform_5, window_bounds = array<i64: 1, 1024>}]} {
    %c0 = arith.constant 0 : index
    %c0_0 = arith.constant 0 : index
    %0 = vector.load %arg1[%c0, %c0_0] : memref<1024x32xf32, #tpu.memory_space<vmem>>, vector<1024x32xf32>
    %1 = arith.truncf %0 : vector<1024x32xf32> to vector<1024x32xbf16>
    %c0_1 = arith.constant 0 : index
    %c0_2 = arith.constant 0 : index
    %2 = vector.load %arg2[%c0_1, %c0_2] : memref<128x32xbf16, #tpu.memory_space<vmem>>, vector<128x32xbf16>
    %cst = arith.constant dense<0.000000e+00> : vector<128x1024xf32>
    %3 = tpu.matmul %2, %1, %cst {dimension_numbers = #tpu.dot_dimension_numbers<[1], [1], [0], [0], [0, 0, 1, 0], [], []>} : vector<128x32xbf16>, vector<1024x32xbf16>, vector<128x1024xf32> -> vector<128x1024xf32>
    %c0_3 = arith.constant 0 : index
    %c0_4 = arith.constant 0 : index
    %4 = vector.load %arg4[%c0_3, %c0_4] : memref<128x8xf32, #tpu.memory_space<vmem>>, vector<128x1xf32>
    %5 = vector.broadcast %4 : vector<128x1xf32> to vector<128x1024xf32>
    %6 = arith.addf %3, %5 : vector<128x1024xf32>
    %cst_5 = arith.constant 0.000000e+00 : f32
    %7 = vector.broadcast %cst_5 : f32 to vector<128x1024xf32>
    %8 = arith.subf %7, %6 : vector<128x1024xf32>
    %9 = math.exp %8 : vector<128x1024xf32>
    %cst_6 = arith.constant 1.000000e+00 : f32
    %10 = vector.broadcast %cst_6 : f32 to vector<128x1024xf32>
    %11 = arith.addf %10, %9 : vector<128x1024xf32>
    %12 = tpu.reciprocal %11 {approx = true} : vector<128x1024xf32> -> vector<128x1024xf32>
    %13 = arith.mulf %6, %12 : vector<128x1024xf32>
    %c0_7 = arith.constant 0 : index
    %c0_8 = arith.constant 0 : index
    %14 = vector.load %arg3[%c0_7, %c0_8] : memref<128x128xbf16, #tpu.memory_space<vmem>>, vector<128x128xbf16>
    %15 = arith.truncf %13 : vector<128x1024xf32> to vector<128x1024xbf16>
    %cst_9 = arith.constant dense<0.000000e+00> : vector<128x1024xf32>
    %16 = tpu.matmul %14, %15, %cst_9 {dimension_numbers = #tpu.dot_dimension_numbers<[1], [0], [0], [1], [0, 0, 1, 1], [], []>} : vector<128x128xbf16>, vector<128x1024xbf16>, vector<128x1024xf32> -> vector<128x1024xf32>
    %c0_10 = arith.constant 0 : index
    %c1 = arith.constant 1 : index
    %17 = vector.load %arg4[%c0_10, %c1] : memref<128x8xf32, #tpu.memory_space<vmem>>, vector<128x1xf32>
    %18 = vector.broadcast %17 : vector<128x1xf32> to vector<128x1024xf32>
    %19 = arith.addf %16, %18 : vector<128x1024xf32>
    %cst_11 = arith.constant 0.000000e+00 : f32
    %20 = vector.broadcast %cst_11 : f32 to vector<128x1024xf32>
    %21 = arith.subf %20, %19 : vector<128x1024xf32>
    %22 = math.exp %21 : vector<128x1024xf32>
    %cst_12 = arith.constant 1.000000e+00 : f32
    %23 = vector.broadcast %cst_12 : f32 to vector<128x1024xf32>
    %24 = arith.addf %23, %22 : vector<128x1024xf32>
    %25 = tpu.reciprocal %24 {approx = true} : vector<128x1024xf32> -> vector<128x1024xf32>
    %26 = arith.mulf %19, %25 : vector<128x1024xf32>
    %c0_13 = arith.constant 0 : index
    %c2 = arith.constant 2 : index
    %27 = vector.load %arg4[%c0_13, %c2] : memref<128x8xf32, #tpu.memory_space<vmem>>, vector<128x1xf32>
    %cst_14 = arith.constant dense<0.000000e+00> : vector<1x1024xf32>
    %28 = tpu.matmul %27, %26, %cst_14 {dimension_numbers = #tpu.dot_dimension_numbers<[0], [0], [1], [1], [0, 1, 1, 1], [], []>} : vector<128x1xf32>, vector<128x1024xf32>, vector<1x1024xf32> -> vector<1x1024xf32>
    %c0_15 = arith.constant 0 : index
    %29 = memref.load %arg5[%c0_15] : memref<1xf32, #tpu.memory_space<smem>>
    %30 = vector.broadcast %29 : f32 to vector<1x1024xf32>
    %31 = arith.addf %28, %30 : vector<1x1024xf32>
    %c0_16 = arith.constant 0 : index
    %c0_17 = arith.constant 0 : index
    %32 = vector.load %arg6[%c0_16, %c0_17] : memref<1x1024xf32, #tpu.memory_space<vmem>>, vector<1x1024xf32>
    tpu.vector_store %arg6[%c0_16, %c0_17], %31 {strides = array<i32>} : memref<1x1024xf32, #tpu.memory_space<vmem>>, vector<1x1024xf32>,
    return
  }
  func.func @transform_0(%arg0: i32) -> (i32, i32) {
    %c0_i32 = arith.constant 0 : i32
    %c0_i32_0 = arith.constant 0 : i32
    return %arg0, %c0_i32 : i32, i32
  }
  func.func @transform_1(%arg0: i32) -> (i32, i32) {
    %c0_i32 = arith.constant 0 : i32
    %c0_i32_0 = arith.constant 0 : i32
    %c0_i32_1 = arith.constant 0 : i32
    return %c0_i32, %c0_i32_0 : i32, i32
  }
  func.func @transform_2(%arg0: i32) -> (i32, i32) {
    %c0_i32 = arith.constant 0 : i32
    %c0_i32_0 = arith.constant 0 : i32
    %c0_i32_1 = arith.constant 0 : i32
    return %c0_i32, %c0_i32_0 : i32, i32
  }
  func.func @transform_3(%arg0: i32) -> (i32, i32) {
    %c0_i32 = arith.constant 0 : i32
    %c0_i32_0 = arith.constant 0 : i32
    %c0_i32_1 = arith.constant 0 : i32
    return %c0_i32, %c0_i32_0 : i32, i32
  }
  func.func @transform_4(%arg0: i32) -> i32 {
    %c0_i32 = arith.constant 0 : i32
    %c0_i32_0 = arith.constant 0 : i32
    return %c0_i32 : i32
  }
  func.func @transform_5(%arg0: i32) -> (i32, i32) {
    %c0_i32 = arith.constant 0 : i32
    %c0_i32_0 = arith.constant 0 : i32
    return %c0_i32, %arg0 : i32, i32
  }
}

</mosaic_0001>

<llo_original>
// kernel: dual_graph_bond_reactivity.1
$region0: #{dual_graph_bond_reactivity.1}
  #allocation0 [shape = 'u32[]', space=smem, size = 0x4, offset = 0x4, fixed_abs, tag = 'smem constant byte address 0x4 - core index']
  #allocation1 [shape = 'u32[144,128]{1,0:T(1,128)}', space=vmem, size = 0x12000, scoped, tag = 'internal scratch']
  #allocation2 [shape = 'f32[1]{0:T(128)S(6)}', space=smem, size = 0x200, scoped, tag = 'scoped memory for dual_graph_bond_reactivity.1']
  %s0 = inlined_call_operand.vmem [shape: f32[2000,32], index: 0, kind: input, shape index: {}]
  %s1 = inlined_call_operand.vmem [shape: bf16[128,32], index: 1, kind: input, shape index: {}]
  %s2 = inlined_call_operand.vmem [shape: bf16[128,128], index: 2, kind: input, shape index: {}]
  %s3 = inlined_call_operand.vmem [shape: f32[128,8], index: 3, kind: input, shape index: {}]
  %s4 = inlined_call_operand.<no memory space> [shape: f32[1], index: 4, kind: input, shape index: {}]
  %s5 = inlined_call_operand.hbm [shape: f32[1,2000], index: 5, kind: output, shape index: {}]
  %s6 = sld [smem:[#allocation0]]
  $region53: #{dual_graph_bond_reactivity.1} parent=0
    _
  %s8 = ssub.s32 1, %s6
  %s9 = scalar_select 0, %s8, %s6
  %10 = sst [smem:[#allocation2]] %s4
  $region1: #{dual_graph_bond_reactivity.1} parent=0
    #allocation3 [shape = 'u8[8192]{0}', space=vmem, size = 0x2000, scoped, tag = 'output window, operand 0']
    #allocation4 [shape = 's32[2]{0}', space=sflag, size = 0x8, scoped, tag = 'scoped memory for dual_graph_bond_reactivity.1']
    %11 = vsyncpa [#allocation4], 0
    %s12 = scalar_lea.sflag [#allocation4], 1
    %13 = vsyncpa %s12, 0
    loop: start=0, step=1, limit=4
    $region2: #{dual_graph_bond_reactivity.1} parent=1 // loop_pre_header
      _
    $region3: #{dual_graph_bond_reactivity.1} parent=1 // loop_header
      %s15 = sphi 0, %s19
      %p16 = scmp.ge.s32.totalorder %s15, 4
      %s25 = sphi 0, %s27
      %s28 = sphi 0, %s25
      %s29 = sphi 0, %s28
      %s45 = sphi 0, %s29
      %s49 = sphi 0, %s49
      %s51 = sphi 0, %s49
      %s52 = sphi 0, %s51
      %s66 = sphi 0, %s52
      %s70 = sphi 0, %s70
      %s72 = sphi 0, %s70
      %s73 = sphi 0, %s72
      %s87 = sphi 0, %s73
      %s91 = sphi 0, %s91
      %s93 = sphi 0, %s91
      %s94 = sphi 0, %s93
      %s108 = sphi 0, %s94
      %s112 = sphi 0, %s112
      %s114 = sphi 0, %s112
      %s115 = sphi 0, %s114
      %s129 = sphi 0, %s115
      %s135 = sphi 0, %s137
      %s138 = sphi 0, %s135
      %s139 = sphi 0, %s138
      %s155 = sphi 0, %s139
    $region4: #{dual_graph_bond_reactivity.1} parent=1 // loop_header_branch
      %18 = sbr.rel (%p16) target = $region8
    $region5: #{dual_graph_bond_reactivity.1} parent=1 // loop_body
      %s20 = ssub.s32 %s15, 1
      %s21 = ssub.s32 %s15, 2
      %s22 = sadd.s32 %s15, 1
      %s23 = ssub.s32 %s15, %s22
      %p24 = scmp.eq.s32.totalorder %s23, 0
      %s26 = sadd.s32 %s25, 1
      %s27 = scalar_select %p24, %s25, %s26
      %p30 = pneg %p24
      %p31 = scmp.eq.s32.totalorder %s15, 1
      %p32 = por %p30, %p31
      %p33 = scmp.ne.s32.totalorder %s25, %s28
      %p34 = scmp.eq.s32.totalorder %s15, 0
      %p35 = por %p33, %p34
      %p36 = scmp.ne.s32.totalorder %s25, %s28
      %p37 = scmp.eq.s32.totalorder %s20, 1
      %p38 = por %p36, %p37
      %p39 = scmp.ne.s32.totalorder %s28, %s29
      %p40 = scmp.eq.s32.totalorder %s20, 0
      %p41 = por %p39, %p40
      %p42 = scmp.ne.s32.totalorder %s28, %s29
      %p43 = scmp.eq.s32.totalorder %s21, 1
      %p44 = por %p42, %p43
      %p46 = scmp.ne.s32.totalorder %s29, %s45
      %p47 = scmp.eq.s32.totalorder %s21, 0
      %p48 = por %p46, %p47
      %s50 = sadd.s32 %s49, 1
      %p53 = scmp.eq.s32.totalorder %s15, 1
      %p54 = scmp.ne.s32.totalorder %s49, %s51
      %p55 = scmp.eq.s32.totalorder %s15, 0
      %p56 = por %p54, %p55
      %p57 = scmp.ne.s32.totalorder %s49, %s51
      %p58 = scmp.eq.s32.totalorder %s20, 1
      %p59 = por %p57, %p58
      %p60 = scmp.ne.s32.totalorder %s51, %s52
      %p61 = scmp.eq.s32.totalorder %s20, 0
      %p62 = por %p60, %p61
      %p63 = scmp.ne.s32.totalorder %s51, %s52
      %p64 = scmp.eq.s32.totalorder %s21, 1
      %p65 = por %p63, %p64
      %p67 = scmp.ne.s32.totalorder %s52, %s66
      %p68 = scmp.eq.s32.totalorder %s21, 0
      %p69 = por %p67, %p68
      %s71 = sadd.s32 %s70, 1
      %p74 = scmp.eq.s32.totalorder %s15, 1
      %p75 = scmp.ne.s32.totalorder %s70, %s72
      %p76 = scmp.eq.s32.totalorder %s15, 0
      %p77 = por %p75, %p76
      %p78 = scmp.ne.s32.totalorder %s70, %s72
      %p79 = scmp.eq.s32.totalorder %s20, 1
      %p80 = por %p78, %p79
      %p81 = scmp.ne.s32.totalorder %s72, %s73
      %p82 = scmp.eq.s32.totalorder %s20, 0
      %p83 = por %p81, %p82
      %p84 = scmp.ne.s32.totalorder %s72, %s73
      %p85 = scmp.eq.s32.totalorder %s21, 1
      %p86 = por %p84, %p85
      %p88 = scmp.ne.s32.totalorder %s73, %s87
      %p89 = scmp.eq.s32.totalorder %s21, 0
      %p90 = por %p88, %p89
      %s92 = sadd.s32 %s91, 1
      %p95 = scmp.eq.s32.totalorder %s15, 1
      %p96 = scmp.ne.s32.totalorder %s91, %s93
      %p97 = scmp.eq.s32.totalorder %s15, 0
      %p98 = por %p96, %p97
      %p99 = scmp.ne.s32.totalorder %s91, %s93
      %p100 = scmp.eq.s32.totalorder %s20, 1
      %p101 = por %p99, %p100
      %p102 = scmp.ne.s32.totalorder %s93, %s94
      %p103 = scmp.eq.s32.totalorder %s20, 0
      %p104 = por %p102, %p103
      %p105 = scmp.ne.s32.totalorder %s93, %s94
      %p106 = scmp.eq.s32.totalorder %s21, 1
      %p107 = por %p105, %p106
      %p109 = scmp.ne.s32.totalorder %s94, %s108
      %p110 = scmp.eq.s32.totalorder %s21, 0
      %p111 = por %p109, %p110
      %s113 = sadd.s32 %s112, 1
      %p116 = scmp.eq.s32.totalorder %s15, 1
      %p117 = scmp.ne.s32.totalorder %s112, %s114
      %p118 = scmp.eq.s32.totalorder %s15, 0
      %p119 = por %p117, %p118
      %p120 = scmp.ne.s32.totalorder %s112, %s114
      %p121 = scmp.eq.s32.totalorder %s20, 1
      %p122 = por %p120, %p121
      %p123 = scmp.ne.s32.totalorder %s114, %s115
      %p124 = scmp.eq.s32.totalorder %s20, 0
      %p125 = por %p123, %p124
      %p126 = scmp.ne.s32.totalorder %s114, %s115
      %p127 = scmp.eq.s32.totalorder %s21, 1
      %p128 = por %p126, %p127
      %p130 = scmp.ne.s32.totalorder %s115, %s129
      %p131 = scmp.eq.s32.totalorder %s21, 0
      %p132 = por %p130, %p131
      %s133 = ssub.s32 %s15, %s22
      %p134 = scmp.eq.s32.totalorder %s133, 0
      %s136 = sadd.s32 %s135, 1
      %s137 = scalar_select %p134, %s135, %s136
      %p140 = pneg %p134
      %p141 = scmp.eq.s32.totalorder %s15, 1
      %p142 = por %p140, %p141
      %p143 = scmp.ne.s32.totalorder %s135, %s138
      %p144 = scmp.eq.s32.totalorder %s15, 0
      %p145 = por %p143, %p144
      %p146 = scmp.ne.s32.totalorder %s135, %s138
      %p147 = scmp.eq.s32.totalorder %s20, 1
      %p148 = por %p146, %p147
      %p149 = scmp.ne.s32.totalorder %s138, %s139
      %p150 = scmp.eq.s32.totalorder %s20, 0
      %p151 = por %p149, %p150
      %p152 = scmp.ne.s32.totalorder %s138, %s139
      %p153 = scmp.eq.s32.totalorder %s21, 1
      %p154 = por %p152, %p153
      %p156 = scmp.ne.s32.totalorder %s139, %s155
      %p157 = scmp.eq.s32.totalorder %s21, 0
      %p158 = por %p156, %p157
      %p159 = scmp.le.s32.totalorder 1, %s15
      %p160 = scmp.lt.s32.totalorder %s15, 3
      %p161 = pnand %p159, %p160
      %p162 = pneg %p161
      // Predicated region
      $region9: #{dual_graph_bond_reactivity.1} parent=5 // pred_check
        _
      $region10: #{dual_graph_bond_reactivity.1} parent=5 // pred_check_branch
        %164 = sbr.rel (%p161) target = $region12
      $region11: #{dual_graph_bond_reactivity.1} parent=5 // pred_region
        %s165 = ssub.s32 %s15, 1
        // Predicated region
        $region13: #{dual_graph_bond_reactivity.1} parent=11 // pred_check
          %p166 = pneg %p62
        $region14: #{dual_graph_bond_reactivity.1} parent=11 // pred_check_branch
          %168 = sbr.rel (%p166) target = $region16
        $region15: #{dual_graph_bond_reactivity.1} parent=11 // pred_region
          _
        $region16: #{dual_graph_bond_reactivity.1} parent=11 // pred_fallthru
          _
        // Predicated region
        $region17: #{dual_graph_bond_reactivity.1} parent=11 // pred_check
          %p169 = pneg %p83
        $region18: #{dual_graph_bond_reactivity.1} parent=11 // pred_check_branch
          %171 = sbr.rel (%p169) target = $region20
        $region19: #{dual_graph_bond_reactivity.1} parent=11 // pred_region
          _
        $region20: #{dual_graph_bond_reactivity.1} parent=11 // pred_fallthru
          _
        // Predicated region
        $region21: #{dual_graph_bond_reactivity.1} parent=11 // pred_check
          %p172 = pneg %p104
        $region22: #{dual_graph_bond_reactivity.1} parent=11 // pred_check_branch
          %174 = sbr.rel (%p172) target = $region24
        $region23: #{dual_graph_bond_reactivity.1} parent=11 // pred_region
          _
        $region24: #{dual_graph_bond_reactivity.1} parent=11 // pred_fallthru
          _
        // Predicated region
        $region25: #{dual_graph_bond_reactivity.1} parent=11 // pred_check
          %p175 = pneg %p125
        $region26: #{dual_graph_bond_reactivity.1} parent=11 // pred_check_branch
          %177 = sbr.rel (%p175) target = $region28
        $region27: #{dual_graph_bond_reactivity.1} parent=11 // pred_region
          _
        $region28: #{dual_graph_bond_reactivity.1} parent=11 // pred_fallthru
          _
      $region12: #{dual_graph_bond_reactivity.1} parent=5 // pred_fallthru
        _
      %p178 = scmp.lt.s32.totalorder %s15, 2
      // Predicated region
      $region29: #{dual_graph_bond_reactivity.1} parent=5 // pred_check
        %p179 = pneg %p178
      $region30: #{dual_graph_bond_reactivity.1} parent=5 // pred_check_branch
        %181 = sbr.rel (%p179) target = $region32
      $region31: #{dual_graph_bond_reactivity.1} parent=5 // pred_region
        // Predicated region
        $region33: #{dual_graph_bond_reactivity.1} parent=31 // pred_check
          %p182 = pneg %p35
        $region34: #{dual_graph_bond_reactivity.1} parent=31 // pred_check_branch
          %184 = sbr.rel (%p182) target = $region36
        $region35: #{dual_graph_bond_reactivity.1} parent=31 // pred_region
          %s185 = smul.u32 128, %s15
          %s186 = ssub.s32 250, %s185
          %p187 = scmp.lt.s32.totalorder %s186, 128
          %s188 = scalar_select %p187, %s186, 128
          %s189 = smul.u32 128, %s188
          %p190 = scmp.lt.s32.totalorder %s185, 249
          %s191 = scalar_select %p190, %s185, 249
          %s192 = smul.addr %s191, 8
          %s193 = scalar_lea.vmem %s0, %s192
          %s194 = smul.u32 128, %s15
          %s195 = ssub.s32 250, %s194
          %p196 = scmp.lt.s32.totalorder %s195, 128
          %s197 = scalar_select %p196, %s195, 128
          %s198 = smul.u32 128, %s197
        $region36: #{dual_graph_bond_reactivity.1} parent=31 // pred_fallthru
          _
      $region32: #{dual_graph_bond_reactivity.1} parent=5 // pred_fallthru
        _
      %p199 = scmp.le.s32.totalorder 1, %s15
      %p200 = scmp.lt.s32.totalorder %s15, 3
      %p201 = pnand %p199, %p200
      %p202 = pneg %p201
      // Predicated region
      $region37: #{dual_graph_bond_reactivity.1} parent=5 // pred_check
        _
      $region38: #{dual_graph_bond_reactivity.1} parent=5 // pred_check_branch
        %204 = sbr.rel (%p201) target = $region40
      $region39: #{dual_graph_bond_reactivity.1} parent=5 // pred_region
        %s205 = ssub.s32 %s15, 1
        %s206 = smul.u32 128, %s20
        %s207 = ssub.s32 250, %s206
        %p208 = scmp.lt.s32.totalorder %s207, 128
        %s209 = scalar_select %p208, %s207, 128
        %s210 = smul.u32 128, %s209
        %p211 = scmp.lt.s32.totalorder %s206, 249
        %s212 = scalar_select %p211, %s206, 249
        %s213 = smul.addr %s212, 8
        %s214 = scalar_lea.vmem %s0, %s213
        %p215 = pneg %p41
        %p216 = pneg %p38
        %p217 = pneg %p62
        %p218 = pneg %p59
        %p219 = pneg %p83
        %p220 = pneg %p80
        %p221 = pneg %p104
        %p222 = pneg %p101
        %p223 = pneg %p125
        %p224 = pneg %p122
        %p225 = pneg %p151
        %p226 = pneg %p148
        %s227 = sand.u32 %s138, 1
        %s228 = scalar_lea.sflag [#allocation4], %s227
        %s229 = sand.u32 %s138, 1
        %s230 = smul.addr %s229, 8
        %s231 = scalar_lea.vmem [#allocation3], %s230
        %s232 = smul.u32 128, %s20
        %s233 = ssub.s32 250, %s232
        %p234 = scmp.lt.s32.totalorder %s233, 128
        %s235 = scalar_select %p234, %s233, 128
        %s236 = smul.u32 128, %s235
        %p237 = scmp.lt.s32.totalorder %s232, 249
        %s238 = scalar_select %p237, %s232, 249
        %s239 = smul.addr %s238, 8
        %s240 = scalar_lea.vmem %s0, %s239
        %s241 = smul.u32 128, %s20
        %s242 = ssub.s32 250, %s241
        %p243 = scmp.lt.s32.totalorder %s242, 128
        %s244 = scalar_select %p243, %s242, 128
        %s245 = smul.u32 128, %s244
        %s246 = smul.u32 8, %s20
        %v248 = vld [vmem:[%s240] sm:$0xff]
        %v249 = vld [vmem:[%s240 + $0x8] sm:$0xff]
        %v250 = vld [vmem:[%s240 + $0x10] sm:$0xff]
        %v251 = vld [vmem:[%s240 + $0x18] sm:$0xff]
        %v252 = vld [vmem:[%s240 + $0x20] sm:$0xff]
        %v253 = vld [vmem:[%s240 + $0x28] sm:$0xff]
        %v254 = vld [vmem:[%s240 + $0x30] sm:$0xff]
        %v255 = vld [vmem:[%s240 + $0x38] sm:$0xff]
        %v256 = vld [vmem:[%s240 + $0x40] sm:$0xff]
        %v257 = vld [vmem:[%s240 + $0x48] sm:$0xff]
        %v258 = vld [vmem:[%s240 + $0x50] sm:$0xff]
        %v259 = vld [vmem:[%s240 + $0x58] sm:$0xff]
        %v260 = vld [vmem:[%s240 + $0x60] sm:$0xff]
        %v261 = vld [vmem:[%s240 + $0x68] sm:$0xff]
        %v262 = vld [vmem:[%s240 + $0x70] sm:$0xff]
        %v263 = vld [vmem:[%s240 + $0x78] sm:$0xff]
        %v264 = vld [vmem:[%s240 + $0x80] sm:$0xff]
        %v265 = vld [vmem:[%s240 + $0x88] sm:$0xff]
        %v266 = vld [vmem:[%s240 + $0x90] sm:$0xff]
        %v267 = vld [vmem:[%s240 + $0x98] sm:$0xff]
        %v268 = vld [vmem:[%s240 + $0xa0] sm:$0xff]
        %v269 = vld [vmem:[%s240 + $0xa8] sm:$0xff]
        %v270 = vld [vmem:[%s240 + $0xb0] sm:$0xff]
        %v271 = vld [vmem:[%s240 + $0xb8] sm:$0xff]
        %v272 = vld [vmem:[%s240 + $0xc0] sm:$0xff]
        %v273 = vld [vmem:[%s240 + $0xc8] sm:$0xff]
        %v274 = vld [vmem:[%s240 + $0xd0] sm:$0xff]
        %v275 = vld [vmem:[%s240 + $0xd8] sm:$0xff]
        %v276 = vld [vmem:[%s240 + $0xe0] sm:$0xff]
        %v277 = vld [vmem:[%s240 + $0xe8] sm:$0xff]
        %v278 = vld [vmem:[%s240 + $0xf0] sm:$0xff]
        %v279 = vld [vmem:[%s240 + $0xf8] sm:$0xff]
        %v280 = vld [vmem:[%s240 + $0x100] sm:$0xff]
        %v281 = vld [vmem:[%s240 + $0x108] sm:$0xff]
        %v282 = vld [vmem:[%s240 + $0x110] sm:$0xff]
        %v283 = vld [vmem:[%s240 + $0x118] sm:$0xff]
        %v284 = vld [vmem:[%s240 + $0x120] sm:$0xff]
        %v285 = vld [vmem:[%s240 + $0x128] sm:$0xff]
        %v286 = vld [vmem:[%s240 + $0x130] sm:$0xff]
        %v287 = vld [vmem:[%s240 + $0x138] sm:$0xff]
        %v288 = vld [vmem:[%s240 + $0x140] sm:$0xff]
        %v289 = vld [vmem:[%s240 + $0x148] sm:$0xff]
        %v290 = vld [vmem:[%s240 + $0x150] sm:$0xff]
        %v291 = vld [vmem:[%s240 + $0x158] sm:$0xff]
        %v292 = vld [vmem:[%s240 + $0x160] sm:$0xff]
        %v293 = vld [vmem:[%s240 + $0x168] sm:$0xff]
        %v294 = vld [vmem:[%s240 + $0x170] sm:$0xff]
        %v295 = vld [vmem:[%s240 + $0x178] sm:$0xff]
        %v296 = vld [vmem:[%s240 + $0x180] sm:$0xff]
        %v297 = vld [vmem:[%s240 + $0x188] sm:$0xff]
        %v298 = vld [vmem:[%s240 + $0x190] sm:$0xff]
        %v299 = vld [vmem:[%s240 + $0x198] sm:$0xff]
        %v300 = vld [vmem:[%s240 + $0x1a0] sm:$0xff]
        %v301 = vld [vmem:[%s240 + $0x1a8] sm:$0xff]
        %v302 = vld [vmem:[%s240 + $0x1b0] sm:$0xff]
        %v303 = vld [vmem:[%s240 + $0x1b8] sm:$0xff]
        %v304 = vld [vmem:[%s240 + $0x1c0] sm:$0xff]
        %v305 = vld [vmem:[%s240 + $0x1c8] sm:$0xff]
        %v306 = vld [vmem:[%s240 + $0x1d0] sm:$0xff]
        %v307 = vld [vmem:[%s240 + $0x1d8] sm:$0xff]
        %v308 = vld [vmem:[%s240 + $0x1e0] sm:$0xff]
        %v309 = vld [vmem:[%s240 + $0x1e8] sm:$0xff]
        %v310 = vld [vmem:[%s240 + $0x1f0] sm:$0xff]
        %v311 = vld [vmem:[%s240 + $0x1f8] sm:$0xff]
        %v312 = vld [vmem:[%s240 + $0x200] sm:$0xff]
        %v313 = vld [vmem:[%s240 + $0x208] sm:$0xff]
        %v314 = vld [vmem:[%s240 + $0x210] sm:$0xff]
        %v315 = vld [vmem:[%s240 + $0x218] sm:$0xff]
        %v316 = vld [vmem:[%s240 + $0x220] sm:$0xff]
        %v317 = vld [vmem:[%s240 + $0x228] sm:$0xff]
        %v318 = vld [vmem:[%s240 + $0x230] sm:$0xff]
        %v319 = vld [vmem:[%s240 + $0x238] sm:$0xff]
        %v320 = vld [vmem:[%s240 + $0x240] sm:$0xff]
        %v321 = vld [vmem:[%s240 + $0x248] sm:$0xff]
        %v322 = vld [vmem:[%s240 + $0x250] sm:$0xff]
        %v323 = vld [vmem:[%s240 + $0x258] sm:$0xff]
        %v324 = vld [vmem:[%s240 + $0x260] sm:$0xff]
        %v325 = vld [vmem:[%s240 + $0x268] sm:$0xff]
        %v326 = vld [vmem:[%s240 + $0x270] sm:$0xff]
        %v327 = vld [vmem:[%s240 + $0x278] sm:$0xff]
        %v328 = vld [vmem:[%s240 + $0x280] sm:$0xff]
        %v329 = vld [vmem:[%s240 + $0x288] sm:$0xff]
        %v330 = vld [vmem:[%s240 + $0x290] sm:$0xff]
        %v331 = vld [vmem:[%s240 + $0x298] sm:$0xff]
        %v332 = vld [vmem:[%s240 + $0x2a0] sm:$0xff]
        %v333 = vld [vmem:[%s240 + $0x2a8] sm:$0xff]
        %v334 = vld [vmem:[%s240 + $0x2b0] sm:$0xff]
        %v335 = vld [vmem:[%s240 + $0x2b8] sm:$0xff]
        %v336 = vld [vmem:[%s240 + $0x2c0] sm:$0xff]
        %v337 = vld [vmem:[%s240 + $0x2c8] sm:$0xff]
        %v338 = vld [vmem:[%s240 + $0x2d0] sm:$0xff]
        %v339 = vld [vmem:[%s240 + $0x2d8] sm:$0xff]
        %v340 = vld [vmem:[%s240 + $0x2e0] sm:$0xff]
        %v341 = vld [vmem:[%s240 + $0x2e8] sm:$0xff]
        %v342 = vld [vmem:[%s240 + $0x2f0] sm:$0xff]
        %v343 = vld [vmem:[%s240 + $0x2f8] sm:$0xff]
        %v344 = vld [vmem:[%s240 + $0x300] sm:$0xff]
        %v345 = vld [vmem:[%s240 + $0x308] sm:$0xff]
        %v346 = vld [vmem:[%s240 + $0x310] sm:$0xff]
        %v347 = vld [vmem:[%s240 + $0x318] sm:$0xff]
        %v348 = vld [vmem:[%s240 + $0x320] sm:$0xff]
        %v349 = vld [vmem:[%s240 + $0x328] sm:$0xff]
        %v350 = vld [vmem:[%s240 + $0x330] sm:$0xff]
        %v351 = vld [vmem:[%s240 + $0x338] sm:$0xff]
        %v352 = vld [vmem:[%s240 + $0x340] sm:$0xff]
        %v353 = vld [vmem:[%s240 + $0x348] sm:$0xff]
        %v354 = vld [vmem:[%s240 + $0x350] sm:$0xff]
        %v355 = vld [vmem:[%s240 + $0x358] sm:$0xff]
        %v356 = vld [vmem:[%s240 + $0x360] sm:$0xff]
        %v357 = vld [vmem:[%s240 + $0x368] sm:$0xff]
        %v358 = vld [vmem:[%s240 + $0x370] sm:$0xff]
        %v359 = vld [vmem:[%s240 + $0x378] sm:$0xff]
        %v360 = vld [vmem:[%s240 + $0x380] sm:$0xff]
        %v361 = vld [vmem:[%s240 + $0x388] sm:$0xff]
        %v362 = vld [vmem:[%s240 + $0x390] sm:$0xff]
        %v363 = vld [vmem:[%s240 + $0x398] sm:$0xff]
        %v364 = vld [vmem:[%s240 + $0x3a0] sm:$0xff]
        %v365 = vld [vmem:[%s240 + $0x3a8] sm:$0xff]
        %v366 = vld [vmem:[%s240 + $0x3b0] sm:$0xff]
        %v367 = vld [vmem:[%s240 + $0x3b8] sm:$0xff]
        %v368 = vld [vmem:[%s240 + $0x3c0] sm:$0xff]
        %v369 = vld [vmem:[%s240 + $0x3c8] sm:$0xff]
        %v370 = vld [vmem:[%s240 + $0x3d0] sm:$0xff]
        %v371 = vld [vmem:[%s240 + $0x3d8] sm:$0xff]
        %v372 = vld [vmem:[%s240 + $0x3e0] sm:$0xff]
        %v373 = vld [vmem:[%s240 + $0x3e8] sm:$0xff]
        %v374 = vld [vmem:[%s240 + $0x3f0] sm:$0xff]
        %v375 = vld [vmem:[%s240 + $0x3f8] sm:$0xff]
        %v376 = vpack.c.bf16 %v249, %v248
        %v377 = vpack.c.bf16 %v251, %v250
        %v378 = vpack.c.bf16 %v253, %v252
        %v379 = vpack.c.bf16 %v255, %v254
        %v380 = vpack.c.bf16 %v257, %v256
        %v381 = vpack.c.bf16 %v259, %v258
        %v382 = vpack.c.bf16 %v261, %v260
        %v383 = vpack.c.bf16 %v263, %v262
        %v384 = vpack.c.bf16 %v265, %v264
        %v385 = vpack.c.bf16 %v267, %v266
        %v386 = vpack.c.bf16 %v269, %v268
        %v387 = vpack.c.bf16 %v271, %v270
        %v388 = vpack.c.bf16 %v273, %v272
        %v389 = vpack.c.bf16 %v275, %v274
        %v390 = vpack.c.bf16 %v277, %v276
        %v391 = vpack.c.bf16 %v279, %v278
        %v392 = vpack.c.bf16 %v281, %v280
        %v393 = vpack.c.bf16 %v283, %v282
        %v394 = vpack.c.bf16 %v285, %v284
        %v395 = vpack.c.bf16 %v287, %v286
        %v396 = vpack.c.bf16 %v289, %v288
        %v397 = vpack.c.bf16 %v291, %v290
        %v398 = vpack.c.bf16 %v293, %v292
        %v399 = vpack.c.bf16 %v295, %v294
        %v400 = vpack.c.bf16 %v297, %v296
        %v401 = vpack.c.bf16 %v299, %v298
        %v402 = vpack.c.bf16 %v301, %v300
        %v403 = vpack.c.bf16 %v303, %v302
        %v404 = vpack.c.bf16 %v305, %v304
        %v405 = vpack.c.bf16 %v307, %v306
        %v406 = vpack.c.bf16 %v309, %v308
        %v407 = vpack.c.bf16 %v311, %v310
        %v408 = vpack.c.bf16 %v313, %v312
        %v409 = vpack.c.bf16 %v315, %v314
        %v410 = vpack.c.bf16 %v317, %v316
        %v411 = vpack.c.bf16 %v319, %v318
        %v412 = vpack.c.bf16 %v321, %v320
        %v413 = vpack.c.bf16 %v323, %v322
        %v414 = vpack.c.bf16 %v325, %v324
        %v415 = vpack.c.bf16 %v327, %v326
        %v416 = vpack.c.bf16 %v329, %v328
        %v417 = vpack.c.bf16 %v331, %v330
        %v418 = vpack.c.bf16 %v333, %v332
        %v419 = vpack.c.bf16 %v335, %v334
        %v420 = vpack.c.bf16 %v337, %v336
        %v421 = vpack.c.bf16 %v339, %v338
        %v422 = vpack.c.bf16 %v341, %v340
        %v423 = vpack.c.bf16 %v343, %v342
        %v424 = vpack.c.bf16 %v345, %v344
        %v425 = vpack.c.bf16 %v347, %v346
        %v426 = vpack.c.bf16 %v349, %v348
        %v427 = vpack.c.bf16 %v351, %v350
        %v428 = vpack.c.bf16 %v353, %v352
        %v429 = vpack.c.bf16 %v355, %v354
        %v430 = vpack.c.bf16 %v357, %v356
        %v431 = vpack.c.bf16 %v359, %v358
        %v432 = vpack.c.bf16 %v361, %v360
        %v433 = vpack.c.bf16 %v363, %v362
        %v434 = vpack.c.bf16 %v365, %v364
        %v435 = vpack.c.bf16 %v367, %v366
        %v436 = vpack.c.bf16 %v369, %v368
        %v437 = vpack.c.bf16 %v371, %v370
        %v438 = vpack.c.bf16 %v373, %v372
        %v439 = vpack.c.bf16 %v375, %v374
        %v440 = vld [vmem:[%s1] sm:$0xf]
        %v441 = vld [vmem:[%s1 + $0x4] sm:$0xf]
        %v442 = vld [vmem:[%s1 + $0x8] sm:$0xf]
        %v443 = vld [vmem:[%s1 + $0xc] sm:$0xf]
        %v444 = vld [vmem:[%s1 + $0x10] sm:$0xf]
        %v445 = vld [vmem:[%s1 + $0x14] sm:$0xf]
        %v446 = vld [vmem:[%s1 + $0x18] sm:$0xf]
        %v447 = vld [vmem:[%s1 + $0x1c] sm:$0xf]
        %v448 = vld [vmem:[%s1 + $0x20] sm:$0xf]
        %v449 = vld [vmem:[%s1 + $0x24] sm:$0xf]
        %v450 = vld [vmem:[%s1 + $0x28] sm:$0xf]
        %v451 = vld [vmem:[%s1 + $0x2c] sm:$0xf]
        %v452 = vld [vmem:[%s1 + $0x30] sm:$0xf]
        %v453 = vld [vmem:[%s1 + $0x34] sm:$0xf]
        %v454 = vld [vmem:[%s1 + $0x38] sm:$0xf]
        %v455 = vld [vmem:[%s1 + $0x3c] sm:$0xf]
        %v456 = vld [vmem:[%s3] sm:$0xff]
        %v457 = vld [vmem:[%s3 + $0x8] sm:$0xff]
        %v458 = vld [vmem:[%s3 + $0x10] sm:$0xff]
        %v459 = vld [vmem:[%s3 + $0x18] sm:$0xff]
        %v460 = vld [vmem:[%s3 + $0x20] sm:$0xff]
        %v461 = vld [vmem:[%s3 + $0x28] sm:$0xff]
        %v462 = vld [vmem:[%s3 + $0x30] sm:$0xff]
        %v463 = vld [vmem:[%s3 + $0x38] sm:$0xff]
        %v464 = vld [vmem:[%s3 + $0x40] sm:$0xff]
        %v465 = vld [vmem:[%s3 + $0x48] sm:$0xff]
        %v466 = vld [vmem:[%s3 + $0x50] sm:$0xff]
        %v467 = vld [vmem:[%s3 + $0x58] sm:$0xff]
        %v468 = vld [vmem:[%s3 + $0x60] sm:$0xff]
        %v469 = vld [vmem:[%s3 + $0x68] sm:$0xff]
        %v470 = vld [vmem:[%s3 + $0x70] sm:$0xff]
        %v471 = vld [vmem:[%s3 + $0x78] sm:$0xff]
        %473 = vset.pattern.permute.xlu0 0
        %474 = vperm.xlu0 %473, %v456
        %v475 = vpop.permute.xlu0 %474
        %478 = vset.pattern.permute.xlu0 0
        %479 = vperm.xlu0 %478, %v457
        %v480 = vpop.permute.xlu0 %479
        %483 = vset.pattern.permute.xlu0 0
        %484 = vperm.xlu0 %483, %v458
        %v485 = vpop.permute.xlu0 %484
        %488 = vset.pattern.permute.xlu0 0
        %489 = vperm.xlu0 %488, %v459
        %v490 = vpop.permute.xlu0 %489
        %493 = vset.pattern.permute.xlu0 0
        %494 = vperm.xlu0 %493, %v460
        %v495 = vpop.permute.xlu0 %494
        %498 = vset.pattern.permute.xlu0 0
        %499 = vperm.xlu0 %498, %v461
        %v500 = vpop.permute.xlu0 %499
        %503 = vset.pattern.permute.xlu0 0
        %504 = vperm.xlu0 %503, %v462
        %v505 = vpop.permute.xlu0 %504
        %508 = vset.pattern.permute.xlu0 0
        %509 = vperm.xlu0 %508, %v463
        %v510 = vpop.permute.xlu0 %509
        %513 = vset.pattern.permute.xlu0 0
        %514 = vperm.xlu0 %513, %v464
        %v515 = vpop.permute.xlu0 %514
        %518 = vset.pattern.permute.xlu0 0
        %519 = vperm.xlu0 %518, %v465
        %v520 = vpop.permute.xlu0 %519
        %523 = vset.pattern.permute.xlu0 0
        %524 = vperm.xlu0 %523, %v466
        %v525 = vpop.permute.xlu0 %524
        %528 = vset.pattern.permute.xlu0 0
        %529 = vperm.xlu0 %528, %v467
        %v530 = vpop.permute.xlu0 %529
        %533 = vset.pattern.permute.xlu0 0
        %534 = vperm.xlu0 %533, %v468
        %v535 = vpop.permute.xlu0 %534
        %538 = vset.pattern.permute.xlu0 0
        %539 = vperm.xlu0 %538, %v469
        %v540 = vpop.permute.xlu0 %539
        %543 = vset.pattern.permute.xlu0 0
        %544 = vperm.xlu0 %543, %v470
        %v545 = vpop.permute.xlu0 %544
        %548 = vset.pattern.permute.xlu0 0
        %549 = vperm.xlu0 %548, %v471
        %v550 = vpop.permute.xlu0 %549
        %v568 = vunpack.c.l.b16 %v440
        %v569 = vunpack.c.l.b16 %v441
        %v570 = vunpack.c.l.b16 %v442
        %v571 = vunpack.c.l.b16 %v443
        %v572 = vunpack.c.l.b16 %v444
        %v573 = vunpack.c.l.b16 %v445
        %v574 = vunpack.c.l.b16 %v446
        %v575 = vunpack.c.l.b16 %v447
        %v576 = vunpack.c.l.b16 %v448
        %v577 = vunpack.c.l.b16 %v449
        %v578 = vunpack.c.l.b16 %v450
        %v579 = vunpack.c.l.b16 %v451
        %v580 = vunpack.c.l.b16 %v452
        %v581 = vunpack.c.l.b16 %v453
        %v582 = vunpack.c.l.b16 %v454
        %v583 = vunpack.c.l.b16 %v455
        %v584 = vpack.c.b16 %v569, %v568
        %v585 = vpack.c.b16 %v571, %v570
        %v586 = vpack.c.b16 %v573, %v572
        %v587 = vpack.c.b16 %v575, %v574
        %v588 = vpack.c.b16 %v577, %v576
        %v589 = vpack.c.b16 %v579, %v578
        %v590 = vpack.c.b16 %v581, %v580
        %v591 = vpack.c.b16 %v583, %v582
        %vm592 = vcmask 261120
        %v594 = vsel %vm592, %v584, 0
        %v597 = vsel %vm592, %v585, 0
        %v600 = vsel %vm592, %v586, 0
        %v603 = vsel %vm592, %v587, 0
        %v606 = vsel %vm592, %v588, 0
        %v609 = vsel %vm592, %v589, 0
        %v612 = vsel %vm592, %v590, 0
        %v615 = vsel %vm592, %v591, 0
        %v618 = vsel %vm592, %v376, 0
        %v621 = vsel %vm592, %v377, 0
        %v624 = vsel %vm592, %v378, 0
        %v627 = vsel %vm592, %v379, 0
        %v630 = vsel %vm592, %v380, 0
        %v633 = vsel %vm592, %v381, 0
        %v636 = vsel %vm592, %v382, 0
        %v639 = vsel %vm592, %v383, 0
        %v642 = vsel %vm592, %v384, 0
        %v645 = vsel %vm592, %v385, 0
        %v648 = vsel %vm592, %v386, 0
        %v651 = vsel %vm592, %v387, 0
        %v654 = vsel %vm592, %v388, 0
        %v657 = vsel %vm592, %v389, 0
        %v660 = vsel %vm592, %v390, 0
        %v663 = vsel %vm592, %v391, 0
        %v666 = vsel %vm592, %v392, 0
        %v669 = vsel %vm592, %v393, 0
        %v672 = vsel %vm592, %v394, 0
        %v675 = vsel %vm592, %v395, 0
        %v678 = vsel %vm592, %v396, 0
        %v681 = vsel %vm592, %v397, 0
        %v684 = vsel %vm592, %v398, 0
        %v687 = vsel %vm592, %v399, 0
        %v690 = vsel %vm592, %v400, 0
        %v693 = vsel %vm592, %v401, 0
        %v696 = vsel %vm592, %v402, 0
        %v699 = vsel %vm592, %v403, 0
        %v702 = vsel %vm592, %v404, 0
        %v705 = vsel %vm592, %v405, 0
        %v708 = vsel %vm592, %v406, 0
        %v711 = vsel %vm592, %v407, 0
        %v714 = vsel %vm592, %v408, 0
        %v717 = vsel %vm592, %v409, 0
        %v720 = vsel %vm592, %v410, 0
        %v723 = vsel %vm592, %v411, 0
        %v726 = vsel %vm592, %v412, 0
        %v729 = vsel %vm592, %v413, 0
        %v732 = vsel %vm592, %v414, 0
        %v735 = vsel %vm592, %v415, 0
        %v738 = vsel %vm592, %v416, 0
        %v741 = vsel %vm592, %v417, 0
        %v744 = vsel %vm592, %v418, 0
        %v747 = vsel %vm592, %v419, 0
        %v750 = vsel %vm592, %v420, 0
        %v753 = vsel %vm592, %v421, 0
        %v756 = vsel %vm592, %v422, 0
        %v759 = vsel %vm592, %v423, 0
        %v762 = vsel %vm592, %v424, 0
        %v765 = vsel %vm592, %v425, 0
        %v768 = vsel %vm592, %v426, 0
        %v771 = vsel %vm592, %v427, 0
        %v774 = vsel %vm592, %v428, 0
        %v777 = vsel %vm592, %v429, 0
        %v780 = vsel %vm592, %v430, 0
        %v783 = vsel %vm592, %v431, 0
        %v786 = vsel %vm592, %v432, 0
        %v789 = vsel %vm592, %v433, 0
        %v792 = vsel %vm592, %v434, 0
        %v795 = vsel %vm592, %v435, 0
        %v798 = vsel %vm592, %v436, 0
        %v801 = vsel %vm592, %v437, 0
        %v804 = vsel %vm592, %v438, 0
        %v807 = vsel %vm592, %v439, 0
        %809 = vmatprep.subr.bf16.mxu0 0
        %810 = vmatpush1.bf16.xpose.msra.mxu0 %v618
        %811 = vmatprep.subr.bf16.mxu0 0
        %812 = vmatpush1.bf16.xpose.msra.mxu0 %v621
        %813 = vmatprep.subr.bf16.mxu0 0
        %814 = vmatpush1.bf16.xpose.msra.mxu0 %v624
        %815 = vmatprep.subr.bf16.mxu0 0
        %816 = vmatpush1.bf16.xpose.msra.mxu0 %v627
        %817 = vmatprep.subr.bf16.mxu0 0
        %818 = vmatpush1.bf16.xpose.msra.mxu0 %v630
        %819 = vmatprep.subr.bf16.mxu0 0
        %820 = vmatpush1.bf16.xpose.msra.mxu0 %v633
        %821 = vmatprep.subr.bf16.mxu0 0
        %822 = vmatpush1.bf16.xpose.msra.mxu0 %v636
        %823 = vmatprep.subr.bf16.mxu0 0
        %824 = vmatpush1.bf16.xpose.msra.mxu0 %v639
        %825 = vmatprep.subr.bf16.mxu0 0
        %826 = vmatpush1.bf16.xpose.msra.mxu0 %v642
        %827 = vmatprep.subr.bf16.mxu0 0
        %828 = vmatpush1.bf16.xpose.msra.mxu0 %v645
        %829 = vmatprep.subr.bf16.mxu0 0
        %830 = vmatpush1.bf16.xpose.msra.mxu0 %v648
        %831 = vmatprep.subr.bf16.mxu0 0
        %832 = vmatpush1.bf16.xpose.msra.mxu0 %v651
        %833 = vmatprep.subr.bf16.mxu0 0
        %834 = vmatpush1.bf16.xpose.msra.mxu0 %v654
        %835 = vmatprep.subr.bf16.mxu0 0
        %836 = vmatpush1.bf16.xpose.msra.mxu0 %v657
        %837 = vmatprep.subr.bf16.mxu0 0
        %838 = vmatpush1.bf16.xpose.msra.mxu0 %v660
        %839 = vmatprep.subr.bf16.mxu0 0
        %840 = vmatpush1.bf16.xpose.msra.mxu0 %v663
        %841 = vmatprep.mubr.bf16.mxu0 0
        %842 = vmatmul.mubr.bf16.gmra.mrb[0].mxu0 %v594
        %v843 = vpop.f32.mrb[0].mxu0
        %v844 = vadd.f32 %v475, %v843
        %v845 = vpop.f32.mrb[0].mxu0
        %v846 = vadd.f32 %v475, %v845
        %v847 = vpop.f32.mrb[0].mxu0
        %v848 = vadd.f32 %v480, %v847
        %v849 = vpop.f32.mrb[0].mxu0
        %v850 = vadd.f32 %v480, %v849
        %851 = vmatprep.mubr.bf16.mxu0 0
        %852 = vmatmul.mubr.bf16.gmra.mrb[0].mxu0 %v597
        %v853 = vpop.f32.mrb[0].mxu0
        %v854 = vadd.f32 %v485, %v853
        %v855 = vpop.f32.mrb[0].mxu0
        %v856 = vadd.f32 %v485, %v855
        %v857 = vpop.f32.mrb[0].mxu0
        %v858 = vadd.f32 %v490, %v857
        %v859 = vpop.f32.mrb[0].mxu0
        %v860 = vadd.f32 %v490, %v859
        %861 = vmatprep.mubr.bf16.mxu0 0
        %862 = vmatmul.mubr.bf16.gmra.mrb[0].mxu0 %v600
        %v863 = vpop.f32.mrb[0].mxu0
        %v864 = vadd.f32 %v495, %v863
        %v865 = vpop.f32.mrb[0].mxu0
        %v866 = vadd.f32 %v495, %v865
        %v867 = vpop.f32.mrb[0].mxu0
        %v868 = vadd.f32 %v500, %v867
        %v869 = vpop.f32.mrb[0].mxu0
        %v870 = vadd.f32 %v500, %v869
        %871 = vmatprep.mubr.bf16.mxu0 0
        %872 = vmatmul.mubr.bf16.gmra.mrb[0].mxu0 %v603
        %v873 = vpop.f32.mrb[0].mxu0
        %v874 = vadd.f32 %v505, %v873
        %v875 = vpop.f32.mrb[0].mxu0
        %v876 = vadd.f32 %v505, %v875
        %v877 = vpop.f32.mrb[0].mxu0
        %v878 = vadd.f32 %v510, %v877
        %v879 = vpop.f32.mrb[0].mxu0
        %v880 = vadd.f32 %v510, %v879
        %881 = vmatprep.mubr.bf16.mxu0 0
        %882 = vmatmul.mubr.bf16.gmra.mrb[0].mxu0 %v606
        %v883 = vpop.f32.mrb[0].mxu0
        %v884 = vadd.f32 %v515, %v883
        %v885 = vpop.f32.mrb[0].mxu0
        %v886 = vadd.f32 %v515, %v885
        %v887 = vpop.f32.mrb[0].mxu0
        %v888 = vadd.f32 %v520, %v887
        %v889 = vpop.f32.mrb[0].mxu0
        %v890 = vadd.f32 %v520, %v889
        %891 = vmatprep.mubr.bf16.mxu0 0
        %892 = vmatmul.mubr.bf16.gmra.mrb[0].mxu0 %v609
        %v893 = vpop.f32.mrb[0].mxu0
        %v894 = vadd.f32 %v525, %v893
        %v895 = vpop.f32.mrb[0].mxu0
        %v896 = vadd.f32 %v525, %v895
        %v897 = vpop.f32.mrb[0].mxu0
        %v898 = vadd.f32 %v530, %v897
        %v899 = vpop.f32.mrb[0].mxu0
        %v900 = vadd.f32 %v530, %v899
        %901 = vmatprep.mubr.bf16.mxu0 0
        %902 = vmatmul.mubr.bf16.gmra.mrb[0].mxu0 %v612
        %v903 = vpop.f32.mrb[0].mxu0
        %v904 = vadd.f32 %v535, %v903
        %v905 = vpop.f32.mrb[0].mxu0
        %v906 = vadd.f32 %v535, %v905
        %v907 = vpop.f32.mrb[0].mxu0
        %v908 = vadd.f32 %v540, %v907
        %v909 = vpop.f32.mrb[0].mxu0
        %v910 = vadd.f32 %v540, %v909
        %911 = vmatprep.mubr.bf16.mxu0 0
        %912 = vmatmul.mubr.bf16.gmra.mrb[0].mxu0 %v615
        %v913 = vpop.f32.mrb[0].mxu0
        %v914 = vadd.f32 %v545, %v913
        %v915 = vpop.f32.mrb[0].mxu0
        %v916 = vadd.f32 %v545, %v915
        %v917 = vpop.f32.mrb[0].mxu0
        %v918 = vadd.f32 %v550, %v917
        %v919 = vpop.f32.mrb[0].mxu0
        %v920 = vadd.f32 %v550, %v919
        %921 = vdwg.mxu0
        %922 = vmatprep.subr.bf16.mxu0 0
        %923 = vmatpush1.bf16.xpose.msra.mxu0 %v666
        %924 = vmatprep.subr.bf16.mxu0 0
        %925 = vmatpush1.bf16.xpose.msra.mxu0 %v669
        %926 = vmatprep.subr.bf16.mxu0 0
        %927 = vmatpush1.bf16.xpose.msra.mxu0 %v672
        %928 = vmatprep.subr.bf16.mxu0 0
        %929 = vmatpush1.bf16.xpose.msra.mxu0 %v675
        %930 = vmatprep.subr.bf16.mxu0 0
        %931 = vmatpush1.bf16.xpose.msra.mxu0 %v678
        %932 = vmatprep.subr.bf16.mxu0 0
        %933 = vmatpush1.bf16.xpose.msra.mxu0 %v681
        %934 = vmatprep.subr.bf16.mxu0 0
        %935 = vmatpush1.bf16.xpose.msra.mxu0 %v684
        %936 = vmatprep.subr.bf16.mxu0 0
        %937 = vmatpush1.bf16.xpose.msra.mxu0 %v687
        %938 = vmatprep.subr.bf16.mxu0 0
        %939 = vmatpush1.bf16.xpose.msra.mxu0 %v690
        %940 = vmatprep.subr.bf16.mxu0 0
        %941 = vmatpush1.bf16.xpose.msra.mxu0 %v693
        %942 = vmatprep.subr.bf16.mxu0 0
        %943 = vmatpush1.bf16.xpose.msra.mxu0 %v696
        %944 = vmatprep.subr.bf16.mxu0 0
        %945 = vmatpush1.bf16.xpose.msra.mxu0 %v699
        %946 = vmatprep.subr.bf16.mxu0 0
        %947 = vmatpush1.bf16.xpose.msra.mxu0 %v702
        %948 = vmatprep.subr.bf16.mxu0 0
        %949 = vmatpush1.bf16.xpose.msra.mxu0 %v705
        %950 = vmatprep.subr.bf16.mxu0 0
        %951 = vmatpush1.bf16.xpose.msra.mxu0 %v708
        %952 = vmatprep.subr.bf16.mxu0 0
        %953 = vmatpush1.bf16.xpose.msra.mxu0 %v711
        %954 = vmatprep.mubr.bf16.mxu0 0
        %955 = vmatmul.mubr.bf16.gmra.mrb[0].mxu0 %v594
        %v956 = vpop.f32.mrb[0].mxu0
        %v957 = vadd.f32 %v475, %v956
        %v958 = vpop.f32.mrb[0].mxu0
        %v959 = vadd.f32 %v475, %v958
        %v960 = vpop.f32.mrb[0].mxu0
        %v961 = vadd.f32 %v480, %v960
        %v962 = vpop.f32.mrb[0].mxu0
        %v963 = vadd.f32 %v480, %v962
        %964 = vmatprep.mubr.bf16.mxu0 0
        %965 = vmatmul.mubr.bf16.gmra.mrb[0].mxu0 %v597
        %v966 = vpop.f32.mrb[0].mxu0
        %v967 = vadd.f32 %v485, %v966
        %v968 = vpop.f32.mrb[0].mxu0
        %v969 = vadd.f32 %v485, %v968
        %v970 = vpop.f32.mrb[0].mxu0
        %v971 = vadd.f32 %v490, %v970
        %v972 = vpop.f32.mrb[0].mxu0
        %v973 = vadd.f32 %v490, %v972
        %974 = vmatprep.mubr.bf16.mxu0 0
        %975 = vmatmul.mubr.bf16.gmra.mrb[0].mxu0 %v600
        %v976 = vpop.f32.mrb[0].mxu0
        %v977 = vadd.f32 %v495, %v976
        %v978 = vpop.f32.mrb[0].mxu0
        %v979 = vadd.f32 %v495, %v978
        %v980 = vpop.f32.mrb[0].mxu0
        %v981 = vadd.f32 %v500, %v980
        %v982 = vpop.f32.mrb[0].mxu0
        %v983 = vadd.f32 %v500, %v982
        %984 = vmatprep.mubr.bf16.mxu0 0
        %985 = vmatmul.mubr.bf16.gmra.mrb[0].mxu0 %v603
        %v986 = vpop.f32.mrb[0].mxu0
        %v987 = vadd.f32 %v505, %v986
        %v988 = vpop.f32.mrb[0].mxu0
        %v989 = vadd.f32 %v505, %v988
        %v990 = vpop.f32.mrb[0].mxu0
        %v991 = vadd.f32 %v510, %v990
        %v992 = vpop.f32.mrb[0].mxu0
        %v993 = vadd.f32 %v510, %v992
        %994 = vmatprep.mubr.bf16.mxu0 0
        %995 = vmatmul.mubr.bf16.gmra.mrb[0].mxu0 %v606
        %v996 = vpop.f32.mrb[0].mxu0
        %v997 = vadd.f32 %v515, %v996
        %v998 = vpop.f32.mrb[0].mxu0
        %v999 = vadd.f32 %v515, %v998
        %v1000 = vpop.f32.mrb[0].mxu0
        %v1001 = vadd.f32 %v520, %v1000
        %v1002 = vpop.f32.mrb[0].mxu0
        %v1003 = vadd.f32 %v520, %v1002
        %1004 = vmatprep.mubr.bf16.mxu0 0
        %1005 = vmatmul.mubr.bf16.gmra.mrb[0].mxu0 %v609
        %v1006 = vpop.f32.mrb[0].mxu0
        %v1007 = vadd.f32 %v525, %v1006
        %v1008 = vpop.f32.mrb[0].mxu0
        %v1009 = vadd.f32 %v525, %v1008
        %v1010 = vpop.f32.mrb[0].mxu0
        %v1011 = vadd.f32 %v530, %v1010
        %v1012 = vpop.f32.mrb[0].mxu0
        %v1013 = vadd.f32 %v530, %v1012
        %1014 = vmatprep.mubr.bf16.mxu0 0
        %1015 = vmatmul.mubr.bf16.gmra.mrb[0].mxu0 %v612
        %v1016 = vpop.f32.mrb[0].mxu0
        %v1017 = vadd.f32 %v535, %v1016
        %v1018 = vpop.f32.mrb[0].mxu0
        %v1019 = vadd.f32 %v535, %v1018
        %v1020 = vpop.f32.mrb[0].mxu0
        %v1021 = vadd.f32 %v540, %v1020
        %v1022 = vpop.f32.mrb[0].mxu0
        %v1023 = vadd.f32 %v540, %v1022
        %1024 = vmatprep.mubr.bf16.mxu0 0
        %1025 = vmatmul.mubr.bf16.gmra.mrb[0].mxu0 %v615
        %v1026 = vpop.f32.mrb[0].mxu0
        %v1027 = vadd.f32 %v545, %v1026
        %v1028 = vpop.f32.mrb[0].mxu0
        %v1029 = vadd.f32 %v545, %v1028
        %v1030 = vpop.f32.mrb[0].mxu0
        %v1031 = vadd.f32 %v550, %v1030
        %v1032 = vpop.f32.mrb[0].mxu0
        %v1033 = vadd.f32 %v550, %v1032
        %1034 = vdwg.mxu0
        %1035 = vmatprep.subr.bf16.mxu0 0
        %1036 = vmatpush1.bf16.xpose.msra.mxu0 %v714
        %1037 = vmatprep.subr.bf16.mxu0 0
        %1038 = vmatpush1.bf16.xpose.msra.mxu0 %v717
        %1039 = vmatprep.subr.bf16.mxu0 0
        %1040 = vmatpush1.bf16.xpose.msra.mxu0 %v720
        %1041 = vmatprep.subr.bf16.mxu0 0
        %1042 = vmatpush1.bf16.xpose.msra.mxu0 %v723
        %1043 = vmatprep.subr.bf16.mxu0 0
        %1044 = vmatpush1.bf16.xpose.msra.mxu0 %v726
        %1045 = vmatprep.subr.bf16.mxu0 0
        %1046 = vmatpush1.bf16.xpose.msra.mxu0 %v729
        %1047 = vmatprep.subr.bf16.mxu0 0
        %1048 = vmatpush1.bf16.xpose.msra.mxu0 %v732
        %1049 = vmatprep.subr.bf16.mxu0 0
        %1050 = vmatpush1.bf16.xpose.msra.mxu0 %v735
        %1051 = vmatprep.subr.bf16.mxu0 0
        %1052 = vmatpush1.bf16.xpose.msra.mxu0 %v738
        %1053 = vmatprep.subr.bf16.mxu0 0
        %1054 = vmatpush1.bf16.xpose.msra.mxu0 %v741
        %1055 = vmatprep.subr.bf16.mxu0 0
        %1056 = vmatpush1.bf16.xpose.msra.mxu0 %v744
        %1057 = vmatprep.subr.bf16.mxu0 0
        %1058 = vmatpush1.bf16.xpose.msra.mxu0 %v747
        %1059 = vmatprep.subr.bf16.mxu0 0
        %1060 = vmatpush1.bf16.xpose.msra.mxu0 %v750
        %1061 = vmatprep.subr.bf16.mxu0 0
        %1062 = vmatpush1.bf16.xpose.msra.mxu0 %v753
        %1063 = vmatprep.subr.bf16.mxu0 0
        %1064 = vmatpush1.bf16.xpose.msra.mxu0 %v756
        %1065 = vmatprep.subr.bf16.mxu0 0
        %1066 = vmatpush1.bf16.xpose.msra.mxu0 %v759
        %1067 = vmatprep.mubr.bf16.mxu0 0
        %1068 = vmatmul.mubr.bf16.gmra.mrb[0].mxu0 %v594
        %v1069 = vpop.f32.mrb[0].mxu0
        %v1070 = vadd.f32 %v475, %v1069
        %v1071 = vpop.f32.mrb[0].mxu0
        %v1072 = vadd.f32 %v475, %v1071
        %v1073 = vpop.f32.mrb[0].mxu0
        %v1074 = vadd.f32 %v480, %v1073
        %v1075 = vpop.f32.mrb[0].mxu0
        %v1076 = vadd.f32 %v480, %v1075
        %1077 = vmatprep.mubr.bf16.mxu0 0
        %1078 = vmatmul.mubr.bf16.gmra.mrb[0].mxu0 %v597
        %v1079 = vpop.f32.mrb[0].mxu0
        %v1080 = vadd.f32 %v485, %v1079
        %v1081 = vpop.f32.mrb[0].mxu0
        %v1082 = vadd.f32 %v485, %v1081
        %v1083 = vpop.f32.mrb[0].mxu0
        %v1084 = vadd.f32 %v490, %v1083
        %v1085 = vpop.f32.mrb[0].mxu0
        %v1086 = vadd.f32 %v490, %v1085
        %1087 = vmatprep.mubr.bf16.mxu0 0
        %1088 = vmatmul.mubr.bf16.gmra.mrb[0].mxu0 %v600
        %v1089 = vpop.f32.mrb[0].mxu0
        %v1090 = vadd.f32 %v495, %v1089
        %v1091 = vpop.f32.mrb[0].mxu0
        %v1092 = vadd.f32 %v495, %v1091
        %v1093 = vpop.f32.mrb[0].mxu0
        %v1094 = vadd.f32 %v500, %v1093
        %v1095 = vpop.f32.mrb[0].mxu0
        %v1096 = vadd.f32 %v500, %v1095
        %1097 = vmatprep.mubr.bf16.mxu0 0
        %1098 = vmatmul.mubr.bf16.gmra.mrb[0].mxu0 %v603
        %v1099 = vpop.f32.mrb[0].mxu0
        %v1100 = vadd.f32 %v505, %v1099
        %v1101 = vpop.f32.mrb[0].mxu0
        %v1102 = vadd.f32 %v505, %v1101
        %v1103 = vpop.f32.mrb[0].mxu0
        %v1104 = vadd.f32 %v510, %v1103
        %v1105 = vpop.f32.mrb[0].mxu0
        %v1106 = vadd.f32 %v510, %v1105
        %1107 = vmatprep.mubr.bf16.mxu0 0
        %1108 = vmatmul.mubr.bf16.gmra.mrb[0].mxu0 %v606
        %v1109 = vpop.f32.mrb[0].mxu0
        %v1110 = vadd.f32 %v515, %v1109
        %v1111 = vpop.f32.mrb[0].mxu0
        %v1112 = vadd.f32 %v515, %v1111
        %v1113 = vpop.f32.mrb[0].mxu0
        %v1114 = vadd.f32 %v520, %v1113
        %v1115 = vpop.f32.mrb[0].mxu0
        %v1116 = vadd.f32 %v520, %v1115
        %1117 = vmatprep.mubr.bf16.mxu0 0
        %1118 = vmatmul.mubr.bf16.gmra.mrb[0].mxu0 %v609
        %v1119 = vpop.f32.mrb[0].mxu0
        %v1120 = vadd.f32 %v525, %v1119
        %v1121 = vpop.f32.mrb[0].mxu0
        %v1122 = vadd.f32 %v525, %v1121
        %v1123 = vpop.f32.mrb[0].mxu0
        %v1124 = vadd.f32 %v530, %v1123
        %v1125 = vpop.f32.mrb[0].mxu0
        %v1126 = vadd.f32 %v530, %v1125
        %1127 = vmatprep.mubr.bf16.mxu0 0
        %1128 = vmatmul.mubr.bf16.gmra.mrb[0].mxu0 %v612
        %v1129 = vpop.f32.mrb[0].mxu0
        %v1130 = vadd.f32 %v535, %v1129
        %v1131 = vpop.f32.mrb[0].mxu0
        %v1132 = vadd.f32 %v535, %v1131
        %v1133 = vpop.f32.mrb[0].mxu0
        %v1134 = vadd.f32 %v540, %v1133
        %v1135 = vpop.f32.mrb[0].mxu0
        %v1136 = vadd.f32 %v540, %v1135
        %1137 = vmatprep.mubr.bf16.mxu0 0
        %1138 = vmatmul.mubr.bf16.gmra.mrb[0].mxu0 %v615
        %v1139 = vpop.f32.mrb[0].mxu0
        %v1140 = vadd.f32 %v545, %v1139
        %v1141 = vpop.f32.mrb[0].mxu0
        %v1142 = vadd.f32 %v545, %v1141
        %v1143 = vpop.f32.mrb[0].mxu0
        %v1144 = vadd.f32 %v550, %v1143
        %v1145 = vpop.f32.mrb[0].mxu0
        %v1146 = vadd.f32 %v550, %v1145
        %1147 = vdwg.mxu0
        %1148 = vmatprep.subr.bf16.mxu0 0
        %1149 = vmatpush1.bf16.xpose.msra.mxu0 %v762
        %1150 = vmatprep.subr.bf16.mxu0 0
        %1151 = vmatpush1.bf16.xpose.msra.mxu0 %v765
        %1152 = vmatprep.subr.bf16.mxu0 0
        %1153 = vmatpush1.bf16.xpose.msra.mxu0 %v768
        %1154 = vmatprep.subr.bf16.mxu0 0
        %1155 = vmatpush1.bf16.xpose.msra.mxu0 %v771
        %1156 = vmatprep.subr.bf16.mxu0 0
        %1157 = vmatpush1.bf16.xpose.msra.mxu0 %v774
        %1158 = vmatprep.subr.bf16.mxu0 0
        %1159 = vmatpush1.bf16.xpose.msra.mxu0 %v777
        %1160 = vmatprep.subr.bf16.mxu0 0
        %1161 = vmatpush1.bf16.xpose.msra.mxu0 %v780
        %1162 = vmatprep.subr.bf16.mxu0 0
        %1163 = vmatpush1.bf16.xpose.msra.mxu0 %v783
        %1164 = vmatprep.subr.bf16.mxu0 0
        %1165 = vmatpush1.bf16.xpose.msra.mxu0 %v786
        %1166 = vmatprep.subr.bf16.mxu0 0
        %1167 = vmatpush1.bf16.xpose.msra.mxu0 %v789
        %1168 = vmatprep.subr.bf16.mxu0 0
        %1169 = vmatpush1.bf16.xpose.msra.mxu0 %v792
        %1170 = vmatprep.subr.bf16.mxu0 0
        %1171 = vmatpush1.bf16.xpose.msra.mxu0 %v795
        %1172 = vmatprep.subr.bf16.mxu0 0
        %1173 = vmatpush1.bf16.xpose.msra.mxu0 %v798
        %1174 = vmatprep.subr.bf16.mxu0 0
        %1175 = vmatpush1.bf16.xpose.msra.mxu0 %v801
        %1176 = vmatprep.subr.bf16.mxu0 0
        %1177 = vmatpush1.bf16.xpose.msra.mxu0 %v804
        %1178 = vmatprep.subr.bf16.mxu0 0
        %1179 = vmatpush1.bf16.xpose.msra.mxu0 %v807
        %1180 = vmatprep.mubr.bf16.mxu0 0
        %1181 = vmatmul.mubr.bf16.gmra.mrb[0].mxu0 %v594
        %v1182 = vpop.f32.mrb[0].mxu0
        %v1183 = vadd.f32 %v475, %v1182
        %v1184 = vpop.f32.mrb[0].mxu0
        %v1185 = vadd.f32 %v475, %v1184
        %v1186 = vpop.f32.mrb[0].mxu0
        %v1187 = vadd.f32 %v480, %v1186
        %v1188 = vpop.f32.mrb[0].mxu0
        %v1189 = vadd.f32 %v480, %v1188
        %1190 = vmatprep.mubr.bf16.mxu0 0
        %1191 = vmatmul.mubr.bf16.gmra.mrb[0].mxu0 %v597
        %v1192 = vpop.f32.mrb[0].mxu0
        %v1193 = vadd.f32 %v485, %v1192
        %v1194 = vpop.f32.mrb[0].mxu0
        %v1195 = vadd.f32 %v485, %v1194
        %v1196 = vpop.f32.mrb[0].mxu0
        %v1197 = vadd.f32 %v490, %v1196
        %v1198 = vpop.f32.mrb[0].mxu0
        %v1199 = vadd.f32 %v490, %v1198
        %1200 = vmatprep.mubr.bf16.mxu0 0
        %1201 = vmatmul.mubr.bf16.gmra.mrb[0].mxu0 %v600
        %v1202 = vpop.f32.mrb[0].mxu0
        %v1203 = vadd.f32 %v495, %v1202
        %v1204 = vpop.f32.mrb[0].mxu0
        %v1205 = vadd.f32 %v495, %v1204
        %v1206 = vpop.f32.mrb[0].mxu0
        %v1207 = vadd.f32 %v500, %v1206
        %v1208 = vpop.f32.mrb[0].mxu0
        %v1209 = vadd.f32 %v500, %v1208
        %1210 = vmatprep.mubr.bf16.mxu0 0
        %1211 = vmatmul.mubr.bf16.gmra.mrb[0].mxu0 %v603
        %v1212 = vpop.f32.mrb[0].mxu0
        %v1213 = vadd.f32 %v505, %v1212
        %v1214 = vpop.f32.mrb[0].mxu0
        %v1215 = vadd.f32 %v505, %v1214
        %v1216 = vpop.f32.mrb[0].mxu0
        %v1217 = vadd.f32 %v510, %v1216
        %v1218 = vpop.f32.mrb[0].mxu0
        %v1219 = vadd.f32 %v510, %v1218
        %1220 = vmatprep.mubr.bf16.mxu0 0
        %1221 = vmatmul.mubr.bf16.gmra.mrb[0].mxu0 %v606
        %v1222 = vpop.f32.mrb[0].mxu0
        %v1223 = vadd.f32 %v515, %v1222
        %v1224 = vpop.f32.mrb[0].mxu0
        %v1225 = vadd.f32 %v515, %v1224
        %v1226 = vpop.f32.mrb[0].mxu0
        %v1227 = vadd.f32 %v520, %v1226
        %v1228 = vpop.f32.mrb[0].mxu0
        %v1229 = vadd.f32 %v520, %v1228
        %1230 = vmatprep.mubr.bf16.mxu0 0
        %1231 = vmatmul.mubr.bf16.gmra.mrb[0].mxu0 %v609
        %v1232 = vpop.f32.mrb[0].mxu0
        %v1233 = vadd.f32 %v525, %v1232
        %v1234 = vpop.f32.mrb[0].mxu0
        %v1235 = vadd.f32 %v525, %v1234
        %v1236 = vpop.f32.mrb[0].mxu0
        %v1237 = vadd.f32 %v530, %v1236
        %v1238 = vpop.f32.mrb[0].mxu0
        %v1239 = vadd.f32 %v530, %v1238
        %1240 = vmatprep.mubr.bf16.mxu0 0
        %1241 = vmatmul.mubr.bf16.gmra.mrb[0].mxu0 %v612
        %v1242 = vpop.f32.mrb[0].mxu0
        %v1243 = vadd.f32 %v535, %v1242
        %v1244 = vpop.f32.mrb[0].mxu0
        %v1245 = vadd.f32 %v535, %v1244
        %v1246 = vpop.f32.mrb[0].mxu0
        %v1247 = vadd.f32 %v540, %v1246
        %v1248 = vpop.f32.mrb[0].mxu0
        %v1249 = vadd.f32 %v540, %v1248
        %1250 = vmatprep.mubr.bf16.mxu0 0
        %1251 = vmatmul.mubr.bf16.gmra.mrb[0].mxu0 %v615
        %v1252 = vpop.f32.mrb[0].mxu0
        %v1253 = vadd.f32 %v545, %v1252
        %v1254 = vpop.f32.mrb[0].mxu0
        %v1255 = vadd.f32 %v545, %v1254
        %v1256 = vpop.f32.mrb[0].mxu0
        %v1257 = vadd.f32 %v550, %v1256
        %v1258 = vpop.f32.mrb[0].mxu0
        %v1259 = vadd.f32 %v550, %v1258
        %1260 = vdwg.mxu0
        %v1261 = vsub.f32 0.0, %v844
        %v1262 = vsub.f32 0.0, %v846
        %v1263 = vsub.f32 0.0, %v957
        %v1264 = vsub.f32 0.0, %v959
        %v1265 = vsub.f32 0.0, %v1070
        %v1266 = vsub.f32 0.0, %v1072
        %v1267 = vsub.f32 0.0, %v1183
        %v1268 = vsub.f32 0.0, %v1185
        %v1269 = vsub.f32 0.0, %v848
        %v1270 = vsub.f32 0.0, %v850
        %v1271 = vsub.f32 0.0, %v961
        %v1272 = vsub.f32 0.0, %v963
        %v1273 = vsub.f32 0.0, %v1074
        %v1274 = vsub.f32 0.0, %v1076
        %v1275 = vsub.f32 0.0, %v1187
        %v1276 = vsub.f32 0.0, %v1189
        %v1277 = vsub.f32 0.0, %v854
        %v1278 = vsub.f32 0.0, %v856
        %v1279 = vsub.f32 0.0, %v967
        %v1280 = vsub.f32 0.0, %v969
        %v1281 = vsub.f32 0.0, %v1080
        %v1282 = vsub.f32 0.0, %v1082
        %v1283 = vsub.f32 0.0, %v1193
        %v1284 = vsub.f32 0.0, %v1195
        %v1285 = vsub.f32 0.0, %v858
        %v1286 = vsub.f32 0.0, %v860
        %v1287 = vsub.f32 0.0, %v971
        %v1288 = vsub.f32 0.0, %v973
        %v1289 = vsub.f32 0.0, %v1084
        %v1290 = vsub.f32 0.0, %v1086
        %v1291 = vsub.f32 0.0, %v1197
        %v1292 = vsub.f32 0.0, %v1199
        %v1293 = vsub.f32 0.0, %v864
        %v1294 = vsub.f32 0.0, %v866
        %v1295 = vsub.f32 0.0, %v977
        %v1296 = vsub.f32 0.0, %v979
        %v1297 = vsub.f32 0.0, %v1090
        %v1298 = vsub.f32 0.0, %v1092
        %v1299 = vsub.f32 0.0, %v1203
        %v1300 = vsub.f32 0.0, %v1205
        %v1301 = vsub.f32 0.0, %v868
        %v1302 = vsub.f32 0.0, %v870
        %v1303 = vsub.f32 0.0, %v981
        %v1304 = vsub.f32 0.0, %v983
        %v1305 = vsub.f32 0.0, %v1094
        %v1306 = vsub.f32 0.0, %v1096
        %v1307 = vsub.f32 0.0, %v1207
        %v1308 = vsub.f32 0.0, %v1209
        %v1309 = vsub.f32 0.0, %v874
        %v1310 = vsub.f32 0.0, %v876
        %v1311 = vsub.f32 0.0, %v987
        %v1312 = vsub.f32 0.0, %v989
        %v1313 = vsub.f32 0.0, %v1100
        %v1314 = vsub.f32 0.0, %v1102
        %v1315 = vsub.f32 0.0, %v1213
        %v1316 = vsub.f32 0.0, %v1215
        %v1317 = vsub.f32 0.0, %v878
        %v1318 = vsub.f32 0.0, %v880
        %v1319 = vsub.f32 0.0, %v991
        %v1320 = vsub.f32 0.0, %v993
        %v1321 = vsub.f32 0.0, %v1104
        %v1322 = vsub.f32 0.0, %v1106
        %v1323 = vsub.f32 0.0, %v1217
        %v1324 = vsub.f32 0.0, %v1219
        %v1325 = vsub.f32 0.0, %v884
        %v1326 = vsub.f32 0.0, %v886
        %v1327 = vsub.f32 0.0, %v997
        %v1328 = vsub.f32 0.0, %v999
        %v1329 = vsub.f32 0.0, %v1110
        %v1330 = vsub.f32 0.0, %v1112
        %v1331 = vsub.f32 0.0, %v1223
        %v1332 = vsub.f32 0.0, %v1225
        %v1333 = vsub.f32 0.0, %v888
        %v1334 = vsub.f32 0.0, %v890
        %v1335 = vsub.f32 0.0, %v1001
        %v1336 = vsub.f32 0.0, %v1003
        %v1337 = vsub.f32 0.0, %v1114
        %v1338 = vsub.f32 0.0, %v1116
        %v1339 = vsub.f32 0.0, %v1227
        %v1340 = vsub.f32 0.0, %v1229
        %v1341 = vsub.f32 0.0, %v894
        %v1342 = vsub.f32 0.0, %v896
        %v1343 = vsub.f32 0.0, %v1007
        %v1344 = vsub.f32 0.0, %v1009
        %v1345 = vsub.f32 0.0, %v1120
        %v1346 = vsub.f32 0.0, %v1122
        %v1347 = vsub.f32 0.0, %v1233
        %v1348 = vsub.f32 0.0, %v1235
        %v1349 = vsub.f32 0.0, %v898
        %v1350 = vsub.f32 0.0, %v900
        %v1351 = vsub.f32 0.0, %v1011
        %v1352 = vsub.f32 0.0, %v1013
        %v1353 = vsub.f32 0.0, %v1124
        %v1354 = vsub.f32 0.0, %v1126
        %v1355 = vsub.f32 0.0, %v1237
        %v1356 = vsub.f32 0.0, %v1239
        %v1357 = vsub.f32 0.0, %v904
        %v1358 = vsub.f32 0.0, %v906
        %v1359 = vsub.f32 0.0, %v1017
        %v1360 = vsub.f32 0.0, %v1019
        %v1361 = vsub.f32 0.0, %v1130
        %v1362 = vsub.f32 0.0, %v1132
        %v1363 = vsub.f32 0.0, %v1243
        %v1364 = vsub.f32 0.0, %v1245
        %v1365 = vsub.f32 0.0, %v908
        %v1366 = vsub.f32 0.0, %v910
        %v1367 = vsub.f32 0.0, %v1021
        %v1368 = vsub.f32 0.0, %v1023
        %v1369 = vsub.f32 0.0, %v1134
        %v1370 = vsub.f32 0.0, %v1136
        %v1371 = vsub.f32 0.0, %v1247
        %v1372 = vsub.f32 0.0, %v1249
        %v1373 = vsub.f32 0.0, %v914
        %v1374 = vsub.f32 0.0, %v916
        %v1375 = vsub.f32 0.0, %v1027
        %v1376 = vsub.f32 0.0, %v1029
        %v1377 = vsub.f32 0.0, %v1140
        %v1378 = vsub.f32 0.0, %v1142
        %v1379 = vsub.f32 0.0, %v1253
        %v1380 = vsub.f32 0.0, %v1255
        %v1381 = vsub.f32 0.0, %v918
        %v1382 = vsub.f32 0.0, %v920
        %v1383 = vsub.f32 0.0, %v1031
        %v1384 = vsub.f32 0.0, %v1033
        %v1385 = vsub.f32 0.0, %v1144
        %v1386 = vsub.f32 0.0, %v1146
        %v1387 = vsub.f32 0.0, %v1257
        %v1388 = vsub.f32 0.0, %v1259
        %v1389 = vmul.f32 %v1261, 1.442695
        %v1390 = vpow.pop %v1389
        %v1391 = vmul.f32 %v1262, 1.442695
        %v1392 = vpow.pop %v1391
        %v1393 = vmul.f32 %v1263, 1.442695
        %v1394 = vpow.pop %v1393
        %v1395 = vmul.f32 %v1264, 1.442695
        %v1396 = vpow.pop %v1395
        %v1397 = vmul.f32 %v1265, 1.442695
        %v1398 = vpow.pop %v1397
        %v1399 = vmul.f32 %v1266, 1.442695
        %v1400 = vpow.pop %v1399
        %v1401 = vmul.f32 %v1267, 1.442695
        %v1402 = vpow.pop %v1401
        %v1403 = vmul.f32 %v1268, 1.442695
        %v1404 = vpow.pop %v1403
        %v1405 = vmul.f32 %v1269, 1.442695
        %v1406 = vpow.pop %v1405
        %v1407 = vmul.f32 %v1270, 1.442695
        %v1408 = vpow.pop %v1407
        %v1409 = vmul.f32 %v1271, 1.442695
        %v1410 = vpow.pop %v1409
        %v1411 = vmul.f32 %v1272, 1.442695
        %v1412 = vpow.pop %v1411
        %v1413 = vmul.f32 %v1273, 1.442695
        %v1414 = vpow.pop %v1413
        %v1415 = vmul.f32 %v1274, 1.442695
        %v1416 = vpow.pop %v1415
        %v1417 = vmul.f32 %v1275, 1.442695
        %v1418 = vpow.pop %v1417
        %v1419 = vmul.f32 %v1276, 1.442695
        %v1420 = vpow.pop %v1419
        %v1421 = vmul.f32 %v1277, 1.442695
        %v1422 = vpow.pop %v1421
        %v1423 = vmul.f32 %v1278, 1.442695
        %v1424 = vpow.pop %v1423
        %v1425 = vmul.f32 %v1279, 1.442695
        %v1426 = vpow.pop %v1425
        %v1427 = vmul.f32 %v1280, 1.442695
        %v1428 = vpow.pop %v1427
        %v1429 = vmul.f32 %v1281, 1.442695
        %v1430 = vpow.pop %v1429
        %v1431 = vmul.f32 %v1282, 1.442695
        %v1432 = vpow.pop %v1431
        %v1433 = vmul.f32 %v1283, 1.442695
        %v1434 = vpow.pop %v1433
        %v1435 = vmul.f32 %v1284, 1.442695
        %v1436 = vpow.pop %v1435
        %v1437 = vmul.f32 %v1285, 1.442695
        %v1438 = vpow.pop %v1437
        %v1439 = vmul.f32 %v1286, 1.442695
        %v1440 = vpow.pop %v1439
        %v1441 = vmul.f32 %v1287, 1.442695
        %v1442 = vpow.pop %v1441
        %v1443 = vmul.f32 %v1288, 1.442695
        %v1444 = vpow.pop %v1443
        %v1445 = vmul.f32 %v1289, 1.442695
        %v1446 = vpow.pop %v1445
        %v1447 = vmul.f32 %v1290, 1.442695
        %v1448 = vpow.pop %v1447
        %v1449 = vmul.f32 %v1291, 1.442695
        %v1450 = vpow.pop %v1449
        %v1451 = vmul.f32 %v1292, 1.442695
        %v1452 = vpow.pop %v1451
        %v1453 = vmul.f32 %v1293, 1.442695
        %v1454 = vpow.pop %v1453
        %v1455 = vmul.f32 %v1294, 1.442695
        %v1456 = vpow.pop %v1455
        %v1457 = vmul.f32 %v1295, 1.442695
        %v1458 = vpow.pop %v1457
        %v1459 = vmul.f32 %v1296, 1.442695
        %v1460 = vpow.pop %v1459
        %v1461 = vmul.f32 %v1297, 1.442695
        %v1462 = vpow.pop %v1461
        %v1463 = vmul.f32 %v1298, 1.442695
        %v1464 = vpow.pop %v1463
        %v1465 = vmul.f32 %v1299, 1.442695
        %v1466 = vpow.pop %v1465
        %v1467 = vmul.f32 %v1300, 1.442695
        %v1468 = vpow.pop %v1467
        %v1469 = vmul.f32 %v1301, 1.442695
        %v1470 = vpow.pop %v1469
        %v1471 = vmul.f32 %v1302, 1.442695
        %v1472 = vpow.pop %v1471
        %v1473 = vmul.f32 %v1303, 1.442695
        %v1474 = vpow.pop %v1473
        %v1475 = vmul.f32 %v1304, 1.442695
        %v1476 = vpow.pop %v1475
        %v1477 = vmul.f32 %v1305, 1.442695
        %v1478 = vpow.pop %v1477
        %v1479 = vmul.f32 %v1306, 1.442695
        %v1480 = vpow.pop %v1479
        %v1481 = vmul.f32 %v1307, 1.442695
        %v1482 = vpow.pop %v1481
        %v1483 = vmul.f32 %v1308, 1.442695
        %v1484 = vpow.pop %v1483
        %v1485 = vmul.f32 %v1309, 1.442695
        %v1486 = vpow.pop %v1485
        %v1487 = vmul.f32 %v1310, 1.442695
        %v1488 = vpow.pop %v1487
        %v1489 = vmul.f32 %v1311, 1.442695
        %v1490 = vpow.pop %v1489
        %v1491 = vmul.f32 %v1312, 1.442695
        %v1492 = vpow.pop %v1491
        %v1493 = vmul.f32 %v1313, 1.442695
        %v1494 = vpow.pop %v1493
        %v1495 = vmul.f32 %v1314, 1.442695
        %v1496 = vpow.pop %v1495
        %v1497 = vmul.f32 %v1315, 1.442695
        %v1498 = vpow.pop %v1497
        %v1499 = vmul.f32 %v1316, 1.442695
        %v1500 = vpow.pop %v1499
        %v1501 = vmul.f32 %v1317, 1.442695
        %v1502 = vpow.pop %v1501
        %v1503 = vmul.f32 %v1318, 1.442695
        %v1504 = vpow.pop %v1503
        %v1505 = vmul.f32 %v1319, 1.442695
        %v1506 = vpow.pop %v1505
        %v1507 = vmul.f32 %v1320, 1.442695
        %v1508 = vpow.pop %v1507
        %v1509 = vmul.f32 %v1321, 1.442695
        %v1510 = vpow.pop %v1509
        %v1511 = vmul.f32 %v1322, 1.442695
        %v1512 = vpow.pop %v1511
        %v1513 = vmul.f32 %v1323, 1.442695
        %v1514 = vpow.pop %v1513
        %v1515 = vmul.f32 %v1324, 1.442695
        %v1516 = vpow.pop %v1515
        %v1517 = vmul.f32 %v1325, 1.442695
        %v1518 = vpow.pop %v1517
        %v1519 = vmul.f32 %v1326, 1.442695
        %v1520 = vpow.pop %v1519
        %v1521 = vmul.f32 %v1327, 1.442695
        %v1522 = vpow.pop %v1521
        %v1523 = vmul.f32 %v1328, 1.442695
        %v1524 = vpow.pop %v1523
        %v1525 = vmul.f32 %v1329, 1.442695
        %v1526 = vpow.pop %v1525
        %v1527 = vmul.f32 %v1330, 1.442695
        %v1528 = vpow.pop %v1527
        %v1529 = vmul.f32 %v1331, 1.442695
        %v1530 = vpow.pop %v1529
        %v1531 = vmul.f32 %v1332, 1.442695
        %v1532 = vpow.pop %v1531
        %v1533 = vmul.f32 %v1333, 1.442695
        %v1534 = vpow.pop %v1533
        %v1535 = vmul.f32 %v1334, 1.442695
        %v1536 = vpow.pop %v1535
        %v1537 = vmul.f32 %v1335, 1.442695
        %v1538 = vpow.pop %v1537
        %v1539 = vmul.f32 %v1336, 1.442695
        %v1540 = vpow.pop %v1539
        %v1541 = vmul.f32 %v1337, 1.442695
        %v1542 = vpow.pop %v1541
        %v1543 = vmul.f32 %v1338, 1.442695
        %v1544 = vpow.pop %v1543
        %v1545 = vmul.f32 %v1339, 1.442695
        %v1546 = vpow.pop %v1545
        %v1547 = vmul.f32 %v1340, 1.442695
        %v1548 = vpow.pop %v1547
        %v1549 = vmul.f32 %v1341, 1.442695
        %v1550 = vpow.pop %v1549
        %v1551 = vmul.f32 %v1342, 1.442695
        %v1552 = vpow.pop %v1551
        %v1553 = vmul.f32 %v1343, 1.442695
        %v1554 = vpow.pop %v1553
        %v1555 = vmul.f32 %v1344, 1.442695
        %v1556 = vpow.pop %v1555
        %v1557 = vmul.f32 %v1345, 1.442695
        %v1558 = vpow.pop %v1557
        %v1559 = vmul.f32 %v1346, 1.442695
        %v1560 = vpow.pop %v1559
        %v1561 = vmul.f32 %v1347, 1.442695
        %v1562 = vpow.pop %v1561
        %v1563 = vmul.f32 %v1348, 1.442695
        %v1564 = vpow.pop %v1563
        %v1565 = vmul.f32 %v1349, 1.442695
        %v1566 = vpow.pop %v1565
        %v1567 = vmul.f32 %v1350, 1.442695
        %v1568 = vpow.pop %v1567
        %v1569 = vmul.f32 %v1351, 1.442695
        %v1570 = vpow.pop %v1569
        %v1571 = vmul.f32 %v1352, 1.442695
        %v1572 = vpow.pop %v1571
        %v1573 = vmul.f32 %v1353, 1.442695
        %v1574 = vpow.pop %v1573
        %v1575 = vmul.f32 %v1354, 1.442695
        %v1576 = vpow.pop %v1575
        %v1577 = vmul.f32 %v1355, 1.442695
        %v1578 = vpow.pop %v1577
        %v1579 = vmul.f32 %v1356, 1.442695
        %v1580 = vpow.pop %v1579
        %v1581 = vmul.f32 %v1357, 1.442695
        %v1582 = vpow.pop %v1581
        %v1583 = vmul.f32 %v1358, 1.442695
        %v1584 = vpow.pop %v1583
        %v1585 = vmul.f32 %v1359, 1.442695
        %v1586 = vpow.pop %v1585
        %v1587 = vmul.f32 %v1360, 1.442695
        %v1588 = vpow.pop %v1587
        %v1589 = vmul.f32 %v1361, 1.442695
        %v1590 = vpow.pop %v1589
        %v1591 = vmul.f32 %v1362, 1.442695
        %v1592 = vpow.pop %v1591
        %v1593 = vmul.f32 %v1363, 1.442695
        %v1594 = vpow.pop %v1593
        %v1595 = vmul.f32 %v1364, 1.442695
        %v1596 = vpow.pop %v1595
        %v1597 = vmul.f32 %v1365, 1.442695
        %v1598 = vpow.pop %v1597
        %v1599 = vmul.f32 %v1366, 1.442695
        %v1600 = vpow.pop %v1599
        %v1601 = vmul.f32 %v1367, 1.442695
        %v1602 = vpow.pop %v1601
        %v1603 = vmul.f32 %v1368, 1.442695
        %v1604 = vpow.pop %v1603
        %v1605 = vmul.f32 %v1369, 1.442695
        %v1606 = vpow.pop %v1605
        %v1607 = vmul.f32 %v1370, 1.442695
        %v1608 = vpow.pop %v1607
        %v1609 = vmul.f32 %v1371, 1.442695
        %v1610 = vpow.pop %v1609
        %v1611 = vmul.f32 %v1372, 1.442695
        %v1612 = vpow.pop %v1611
        %v1613 = vmul.f32 %v1373, 1.442695
        %v1614 = vpow.pop %v1613
        %v1615 = vmul.f32 %v1374, 1.442695
        %v1616 = vpow.pop %v1615
        %v1617 = vmul.f32 %v1375, 1.442695
        %v1618 = vpow.pop %v1617
        %v1619 = vmul.f32 %v1376, 1.442695
        %v1620 = vpow.pop %v1619
        %v1621 = vmul.f32 %v1377, 1.442695
        %v1622 = vpow.pop %v1621
        %v1623 = vmul.f32 %v1378, 1.442695
        %v1624 = vpow.pop %v1623
        %v1625 = vmul.f32 %v1379, 1.442695
        %v1626 = vpow.pop %v1625
        %v1627 = vmul.f32 %v1380, 1.442695
        %v1628 = vpow.pop %v1627
        %v1629 = vmul.f32 %v1381, 1.442695
        %v1630 = vpow.pop %v1629
        %v1631 = vmul.f32 %v1382, 1.442695
        %v1632 = vpow.pop %v1631
        %v1633 = vmul.f32 %v1383, 1.442695
        %v1634 = vpow.pop %v1633
        %v1635 = vmul.f32 %v1384, 1.442695
        %v1636 = vpow.pop %v1635
        %v1637 = vmul.f32 %v1385, 1.442695
        %v1638 = vpow.pop %v1637
        %v1639 = vmul.f32 %v1386, 1.442695
        %v1640 = vpow.pop %v1639
        %v1641 = vmul.f32 %v1387, 1.442695
        %v1642 = vpow.pop %v1641
        %v1643 = vmul.f32 %v1388, 1.442695
        %v1644 = vpow.pop %v1643
        %v1645 = vadd.f32 %v1390, 1.0
        %v1646 = vadd.f32 %v1392, 1.0
        %v1647 = vadd.f32 %v1394, 1.0
        %v1648 = vadd.f32 %v1396, 1.0
        %v1649 = vadd.f32 %v1398, 1.0
        %v1650 = vadd.f32 %v1400, 1.0
        %v1651 = vadd.f32 %v1402, 1.0
        %v1652 = vadd.f32 %v1404, 1.0
        %v1653 = vadd.f32 %v1406, 1.0
        %v1654 = vadd.f32 %v1408, 1.0
        %v1655 = vadd.f32 %v1410, 1.0
        %v1656 = vadd.f32 %v1412, 1.0
        %v1657 = vadd.f32 %v1414, 1.0
        %v1658 = vadd.f32 %v1416, 1.0
        %v1659 = vadd.f32 %v1418, 1.0
        %v1660 = vadd.f32 %v1420, 1.0
        %v1661 = vadd.f32 %v1422, 1.0
        %v1662 = vadd.f32 %v1424, 1.0
        %v1663 = vadd.f32 %v1426, 1.0
        %v1664 = vadd.f32 %v1428, 1.0
        %v1665 = vadd.f32 %v1430, 1.0
        %v1666 = vadd.f32 %v1432, 1.0
        %v1667 = vadd.f32 %v1434, 1.0
        %v1668 = vadd.f32 %v1436, 1.0
        %v1669 = vadd.f32 %v1438, 1.0
        %v1670 = vadd.f32 %v1440, 1.0
        %v1671 = vadd.f32 %v1442, 1.0
        %v1672 = vadd.f32 %v1444, 1.0
        %v1673 = vadd.f32 %v1446, 1.0
        %v1674 = vadd.f32 %v1448, 1.0
        %v1675 = vadd.f32 %v1450, 1.0
        %v1676 = vadd.f32 %v1452, 1.0
        %v1677 = vadd.f32 %v1454, 1.0
        %v1678 = vadd.f32 %v1456, 1.0
        %v1679 = vadd.f32 %v1458, 1.0
        %v1680 = vadd.f32 %v1460, 1.0
        %v1681 = vadd.f32 %v1462, 1.0
        %v1682 = vadd.f32 %v1464, 1.0
        %v1683 = vadd.f32 %v1466, 1.0
        %v1684 = vadd.f32 %v1468, 1.0
        %v1685 = vadd.f32 %v1470, 1.0
        %v1686 = vadd.f32 %v1472, 1.0
        %v1687 = vadd.f32 %v1474, 1.0
        %v1688 = vadd.f32 %v1476, 1.0
        %v1689 = vadd.f32 %v1478, 1.0
        %v1690 = vadd.f32 %v1480, 1.0
        %v1691 = vadd.f32 %v1482, 1.0
        %v1692 = vadd.f32 %v1484, 1.0
        %v1693 = vadd.f32 %v1486, 1.0
        %v1694 = vadd.f32 %v1488, 1.0
        %v1695 = vadd.f32 %v1490, 1.0
        %v1696 = vadd.f32 %v1492, 1.0
        %v1697 = vadd.f32 %v1494, 1.0
        %v1698 = vadd.f32 %v1496, 1.0
        %v1699 = vadd.f32 %v1498, 1.0
        %v1700 = vadd.f32 %v1500, 1.0
        %v1701 = vadd.f32 %v1502, 1.0
        %v1702 = vadd.f32 %v1504, 1.0
        %v1703 = vadd.f32 %v1506, 1.0
        %v1704 = vadd.f32 %v1508, 1.0
        %v1705 = vadd.f32 %v1510, 1.0
        %v1706 = vadd.f32 %v1512, 1.0
        %v1707 = vadd.f32 %v1514, 1.0
        %v1708 = vadd.f32 %v1516, 1.0
        %v1709 = vadd.f32 %v1518, 1.0
        %v1710 = vadd.f32 %v1520, 1.0
        %v1711 = vadd.f32 %v1522, 1.0
        %v1712 = vadd.f32 %v1524, 1.0
        %v1713 = vadd.f32 %v1526, 1.0
        %v1714 = vadd.f32 %v1528, 1.0
        %v1715 = vadd.f32 %v1530, 1.0
        %v1716 = vadd.f32 %v1532, 1.0
        %v1717 = vadd.f32 %v1534, 1.0
        %v1718 = vadd.f32 %v1536, 1.0
        %v1719 = vadd.f32 %v1538, 1.0
        %v1720 = vadd.f32 %v1540, 1.0
        %v1721 = vadd.f32 %v1542, 1.0
        %v1722 = vadd.f32 %v1544, 1.0
        %v1723 = vadd.f32 %v1546, 1.0
        %v1724 = vadd.f32 %v1548, 1.0
        %v1725 = vadd.f32 %v1550, 1.0
        %v1726 = vadd.f32 %v1552, 1.0
        %v1727 = vadd.f32 %v1554, 1.0
        %v1728 = vadd.f32 %v1556, 1.0
        %v1729 = vadd.f32 %v1558, 1.0
        %v1730 = vadd.f32 %v1560, 1.0
        %v1731 = vadd.f32 %v1562, 1.0
        %v1732 = vadd.f32 %v1564, 1.0
        %v1733 = vadd.f32 %v1566, 1.0
        %v1734 = vadd.f32 %v1568, 1.0
        %v1735 = vadd.f32 %v1570, 1.0
        %v1736 = vadd.f32 %v1572, 1.0
        %v1737 = vadd.f32 %v1574, 1.0
        %v1738 = vadd.f32 %v1576, 1.0
        %v1739 = vadd.f32 %v1578, 1.0
        %v1740 = vadd.f32 %v1580, 1.0
        %v1741 = vadd.f32 %v1582, 1.0
        %v1742 = vadd.f32 %v1584, 1.0
        %v1743 = vadd.f32 %v1586, 1.0
        %v1744 = vadd.f32 %v1588, 1.0
        %v1745 = vadd.f32 %v1590, 1.0
        %v1746 = vadd.f32 %v1592, 1.0
        %v1747 = vadd.f32 %v1594, 1.0
        %v1748 = vadd.f32 %v1596, 1.0
        %v1749 = vadd.f32 %v1598, 1.0
        %v1750 = vadd.f32 %v1600, 1.0
        %v1751 = vadd.f32 %v1602, 1.0
        %v1752 = vadd.f32 %v1604, 1.0
        %v1753 = vadd.f32 %v1606, 1.0
        %v1754 = vadd.f32 %v1608, 1.0
        %v1755 = vadd.f32 %v1610, 1.0
        %v1756 = vadd.f32 %v1612, 1.0
        %v1757 = vadd.f32 %v1614, 1.0
        %v1758 = vadd.f32 %v1616, 1.0
        %v1759 = vadd.f32 %v1618, 1.0
        %v1760 = vadd.f32 %v1620, 1.0
        %v1761 = vadd.f32 %v1622, 1.0
        %v1762 = vadd.f32 %v1624, 1.0
        %v1763 = vadd.f32 %v1626, 1.0
        %v1764 = vadd.f32 %v1628, 1.0
        %v1765 = vadd.f32 %v1630, 1.0
        %v1766 = vadd.f32 %v1632, 1.0
        %v1767 = vadd.f32 %v1634, 1.0
        %v1768 = vadd.f32 %v1636, 1.0
        %v1769 = vadd.f32 %v1638, 1.0
        %v1770 = vadd.f32 %v1640, 1.0
        %v1771 = vadd.f32 %v1642, 1.0
        %v1772 = vadd.f32 %v1644, 1.0
        %v1773 = vrcp.pop %v1645
        %v1774 = vrcp.pop %v1646
        %v1775 = vrcp.pop %v1647
        %v1776 = vrcp.pop %v1648
        %v1777 = vrcp.pop %v1649
        %v1778 = vrcp.pop %v1650
        %v1779 = vrcp.pop %v1651
        %v1780 = vrcp.pop %v1652
        %v1781 = vrcp.pop %v1653
        %v1782 = vrcp.pop %v1654
        %v1783 = vrcp.pop %v1655
        %v1784 = vrcp.pop %v1656
        %v1785 = vrcp.pop %v1657
        %v1786 = vrcp.pop %v1658
        %v1787 = vrcp.pop %v1659
        %v1788 = vrcp.pop %v1660
        %v1789 = vrcp.pop %v1661
        %v1790 = vrcp.pop %v1662
        %v1791 = vrcp.pop %v1663
        %v1792 = vrcp.pop %v1664
        %v1793 = vrcp.pop %v1665
        %v1794 = vrcp.pop %v1666
        %v1795 = vrcp.pop %v1667
        %v1796 = vrcp.pop %v1668
        %v1797 = vrcp.pop %v1669
        %v1798 = vrcp.pop %v1670
        %v1799 = vrcp.pop %v1671
        %v1800 = vrcp.pop %v1672
        %v1801 = vrcp.pop %v1673
        %v1802 = vrcp.pop %v1674
        %v1803 = vrcp.pop %v1675
        %v1804 = vrcp.pop %v1676
        %v1805 = vrcp.pop %v1677
        %v1806 = vrcp.pop %v1678
        %v1807 = vrcp.pop %v1679
        %v1808 = vrcp.pop %v1680
        %v1809 = vrcp.pop %v1681
        %v1810 = vrcp.pop %v1682
        %v1811 = vrcp.pop %v1683
        %v1812 = vrcp.pop %v1684
        %v1813 = vrcp.pop %v1685
        %v1814 = vrcp.pop %v1686
        %v1815 = vrcp.pop %v1687
        %v1816 = vrcp.pop %v1688
        %v1817 = vrcp.pop %v1689
        %v1818 = vrcp.pop %v1690
        %v1819 = vrcp.pop %v1691
        %v1820 = vrcp.pop %v1692
        %v1821 = vrcp.pop %v1693
        %v1822 = vrcp.pop %v1694
        %v1823 = vrcp.pop %v1695
        %v1824 = vrcp.pop %v1696
        %v1825 = vrcp.pop %v1697
        %v1826 = vrcp.pop %v1698
        %v1827 = vrcp.pop %v1699
        %v1828 = vrcp.pop %v1700
        %v1829 = vrcp.pop %v1701
        %v1830 = vrcp.pop %v1702
        %v1831 = vrcp.pop %v1703
        %v1832 = vrcp.pop %v1704
        %v1833 = vrcp.pop %v1705
        %v1834 = vrcp.pop %v1706
        %v1835 = vrcp.pop %v1707
        %v1836 = vrcp.pop %v1708
        %v1837 = vrcp.pop %v1709
        %v1838 = vrcp.pop %v1710
        %v1839 = vrcp.pop %v1711
        %v1840 = vrcp.pop %v1712
        %v1841 = vrcp.pop %v1713
        %v1842 = vrcp.pop %v1714
        %v1843 = vrcp.pop %v1715
        %v1844 = vrcp.pop %v1716
        %v1845 = vrcp.pop %v1717
        %v1846 = vrcp.pop %v1718
        %v1847 = vrcp.pop %v1719
        %v1848 = vrcp.pop %v1720
        %v1849 = vrcp.pop %v1721
        %v1850 = vrcp.pop %v1722
        %v1851 = vrcp.pop %v1723
        %v1852 = vrcp.pop %v1724
        %v1853 = vrcp.pop %v1725
        %v1854 = vrcp.pop %v1726
        %v1855 = vrcp.pop %v1727
        %v1856 = vrcp.pop %v1728
        %v1857 = vrcp.pop %v1729
        %v1858 = vrcp.pop %v1730
        %v1859 = vrcp.pop %v1731
        %v1860 = vrcp.pop %v1732
        %v1861 = vrcp.pop %v1733
        %v1862 = vrcp.pop %v1734
        %v1863 = vrcp.pop %v1735
        %v1864 = vrcp.pop %v1736
        %v1865 = vrcp.pop %v1737
        %v1866 = vrcp.pop %v1738
        %v1867 = vrcp.pop %v1739
        %v1868 = vrcp.pop %v1740
        %v1869 = vrcp.pop %v1741
        %v1870 = vrcp.pop %v1742
        %v1871 = vrcp.pop %v1743
        %v1872 = vrcp.pop %v1744
        %v1873 = vrcp.pop %v1745
        %v1874 = vrcp.pop %v1746
        %v1875 = vrcp.pop %v1747
        %v1876 = vrcp.pop %v1748
        %v1877 = vrcp.pop %v1749
        %v1878 = vrcp.pop %v1750
        %v1879 = vrcp.pop %v1751
        %v1880 = vrcp.pop %v1752
        %v1881 = vrcp.pop %v1753
        %v1882 = vrcp.pop %v1754
        %v1883 = vrcp.pop %v1755
        %v1884 = vrcp.pop %v1756
        %v1885 = vrcp.pop %v1757
        %v1886 = vrcp.pop %v1758
        %v1887 = vrcp.pop %v1759
        %v1888 = vrcp.pop %v1760
        %v1889 = vrcp.pop %v1761
        %v1890 = vrcp.pop %v1762
        %v1891 = vrcp.pop %v1763
        %v1892 = vrcp.pop %v1764
        %v1893 = vrcp.pop %v1765
        %v1894 = vrcp.pop %v1766
        %v1895 = vrcp.pop %v1767
        %v1896 = vrcp.pop %v1768
        %v1897 = vrcp.pop %v1769
        %v1898 = vrcp.pop %v1770
        %v1899 = vrcp.pop %v1771
        %v1900 = vrcp.pop %v1772
        %v1901 = vmul.f32 %v844, %v1773
        %v1902 = vmul.f32 %v846, %v1774
        %v1903 = vmul.f32 %v957, %v1775
        %v1904 = vmul.f32 %v959, %v1776
        %v1905 = vmul.f32 %v1070, %v1777
        %v1906 = vmul.f32 %v1072, %v1778
        %v1907 = vmul.f32 %v1183, %v1779
        %v1908 = vmul.f32 %v1185, %v1780
        %v1909 = vmul.f32 %v848, %v1781
        %v1910 = vmul.f32 %v850, %v1782
        %v1911 = vmul.f32 %v961, %v1783
        %v1912 = vmul.f32 %v963, %v1784
        %v1913 = vmul.f32 %v1074, %v1785
        %v1914 = vmul.f32 %v1076, %v1786
        %v1915 = vmul.f32 %v1187, %v1787
        %v1916 = vmul.f32 %v1189, %v1788
        %v1917 = vmul.f32 %v854, %v1789
        %v1918 = vmul.f32 %v856, %v1790
        %v1919 = vmul.f32 %v967, %v1791
        %v1920 = vmul.f32 %v969, %v1792
        %v1921 = vmul.f32 %v1080, %v1793
        %v1922 = vmul.f32 %v1082, %v1794
        %v1923 = vmul.f32 %v1193, %v1795
        %v1924 = vmul.f32 %v1195, %v1796
        %v1925 = vmul.f32 %v858, %v1797
        %v1926 = vmul.f32 %v860, %v1798
        %v1927 = vmul.f32 %v971, %v1799
        %v1928 = vmul.f32 %v973, %v1800
        %v1929 = vmul.f32 %v1084, %v1801
        %v1930 = vmul.f32 %v1086, %v1802
        %v1931 = vmul.f32 %v1197, %v1803
        %v1932 = vmul.f32 %v1199, %v1804
        %v1933 = vmul.f32 %v864, %v1805
        %v1934 = vmul.f32 %v866, %v1806
        %v1935 = vmul.f32 %v977, %v1807
        %v1936 = vmul.f32 %v979, %v1808
        %v1937 = vmul.f32 %v1090, %v1809
        %v1938 = vmul.f32 %v1092, %v1810
        %v1939 = vmul.f32 %v1203, %v1811
        %v1940 = vmul.f32 %v1205, %v1812
        %v1941 = vmul.f32 %v868, %v1813
        %v1942 = vmul.f32 %v870, %v1814
        %v1943 = vmul.f32 %v981, %v1815
        %v1944 = vmul.f32 %v983, %v1816
        %v1945 = vmul.f32 %v1094, %v1817
        %v1946 = vmul.f32 %v1096, %v1818
        %v1947 = vmul.f32 %v1207, %v1819
        %v1948 = vmul.f32 %v1209, %v1820
        %v1949 = vmul.f32 %v874, %v1821
        %v1950 = vmul.f32 %v876, %v1822
        %v1951 = vmul.f32 %v987, %v1823
        %v1952 = vmul.f32 %v989, %v1824
        %v1953 = vmul.f32 %v1100, %v1825
        %v1954 = vmul.f32 %v1102, %v1826
        %v1955 = vmul.f32 %v1213, %v1827
        %v1956 = vmul.f32 %v1215, %v1828
        %v1957 = vmul.f32 %v878, %v1829
        %v1958 = vmul.f32 %v880, %v1830
        %v1959 = vmul.f32 %v991, %v1831
        %v1960 = vmul.f32 %v993, %v1832
        %v1961 = vmul.f32 %v1104, %v1833
        %v1962 = vmul.f32 %v1106, %v1834
        %v1963 = vmul.f32 %v1217, %v1835
        %v1964 = vmul.f32 %v1219, %v1836
        %v1965 = vmul.f32 %v884, %v1837
        %v1966 = vmul.f32 %v886, %v1838
        %v1967 = vmul.f32 %v997, %v1839
        %v1968 = vmul.f32 %v999, %v1840
        %v1969 = vmul.f32 %v1110, %v1841
        %v1970 = vmul.f32 %v1112, %v1842
        %v1971 = vmul.f32 %v1223, %v1843
        %v1972 = vmul.f32 %v1225, %v1844
        %v1973 = vmul.f32 %v888, %v1845
        %v1974 = vmul.f32 %v890, %v1846
        %v1975 = vmul.f32 %v1001, %v1847
        %v1976 = vmul.f32 %v1003, %v1848
        %v1977 = vmul.f32 %v1114, %v1849
        %v1978 = vmul.f32 %v1116, %v1850
        %v1979 = vmul.f32 %v1227, %v1851
        %v1980 = vmul.f32 %v1229, %v1852
        %v1981 = vmul.f32 %v894, %v1853
        %v1982 = vmul.f32 %v896, %v1854
        %v1983 = vmul.f32 %v1007, %v1855
        %v1984 = vmul.f32 %v1009, %v1856
        %v1985 = vmul.f32 %v1120, %v1857
        %v1986 = vmul.f32 %v1122, %v1858
        %v1987 = vmul.f32 %v1233, %v1859
        %v1988 = vmul.f32 %v1235, %v1860
        %v1989 = vmul.f32 %v898, %v1861
        %v1990 = vmul.f32 %v900, %v1862
        %v1991 = vmul.f32 %v1011, %v1863
        %v1992 = vmul.f32 %v1013, %v1864
        %v1993 = vmul.f32 %v1124, %v1865
        %v1994 = vmul.f32 %v1126, %v1866
        %v1995 = vmul.f32 %v1237, %v1867
        %v1996 = vmul.f32 %v1239, %v1868
        %v1997 = vmul.f32 %v904, %v1869
        %v1998 = vmul.f32 %v906, %v1870
        %v1999 = vmul.f32 %v1017, %v1871
        %v2000 = vmul.f32 %v1019, %v1872
        %v2001 = vmul.f32 %v1130, %v1873
        %v2002 = vmul.f32 %v1132, %v1874
        %v2003 = vmul.f32 %v1243, %v1875
        %v2004 = vmul.f32 %v1245, %v1876
        %v2005 = vmul.f32 %v908, %v1877
        %v2006 = vmul.f32 %v910, %v1878
        %v2007 = vmul.f32 %v1021, %v1879
        %v2008 = vmul.f32 %v1023, %v1880
        %v2009 = vmul.f32 %v1134, %v1881
        %v2010 = vmul.f32 %v1136, %v1882
        %v2011 = vmul.f32 %v1247, %v1883
        %v2012 = vmul.f32 %v1249, %v1884
        %v2013 = vmul.f32 %v914, %v1885
        %v2014 = vmul.f32 %v916, %v1886
        %v2015 = vmul.f32 %v1027, %v1887
        %v2016 = vmul.f32 %v1029, %v1888
        %v2017 = vmul.f32 %v1140, %v1889
        %v2018 = vmul.f32 %v1142, %v1890
        %v2019 = vmul.f32 %v1253, %v1891
        %v2020 = vmul.f32 %v1255, %v1892
        %v2021 = vmul.f32 %v918, %v1893
        %v2022 = vmul.f32 %v920, %v1894
        %v2023 = vmul.f32 %v1031, %v1895
        %v2024 = vmul.f32 %v1033, %v1896
        %v2025 = vmul.f32 %v1144, %v1897
        %v2026 = vmul.f32 %v1146, %v1898
        %v2027 = vmul.f32 %v1257, %v1899
        %v2028 = vmul.f32 %v1259, %v1900
        %v2029 = vld [vmem:[%s2] sm:$0xf]
        %v2030 = vld [vmem:[%s2 + $0x4] sm:$0xf]
        %v2031 = vld [vmem:[%s2 + $0x8] sm:$0xf]
        %v2032 = vld [vmem:[%s2 + $0xc] sm:$0xf]
        %v2033 = vld [vmem:[%s2 + $0x10] sm:$0xf]
        %v2034 = vld [vmem:[%s2 + $0x14] sm:$0xf]
        %v2035 = vld [vmem:[%s2 + $0x18] sm:$0xf]
        %v2036 = vld [vmem:[%s2 + $0x1c] sm:$0xf]
        %v2037 = vld [vmem:[%s2 + $0x20] sm:$0xf]
        %v2038 = vld [vmem:[%s2 + $0x24] sm:$0xf]
        %v2039 = vld [vmem:[%s2 + $0x28] sm:$0xf]
        %v2040 = vld [vmem:[%s2 + $0x2c] sm:$0xf]
        %v2041 = vld [vmem:[%s2 + $0x30] sm:$0xf]
        %v2042 = vld [vmem:[%s2 + $0x34] sm:$0xf]
        %v2043 = vld [vmem:[%s2 + $0x38] sm:$0xf]
        %v2044 = vld [vmem:[%s2 + $0x3c] sm:$0xf]
        %v2045 = vpack.c.bf16 %v1909, %v1901
        %v2046 = vpack.c.bf16 %v1910, %v1902
        %v2047 = vpack.c.bf16 %v1911, %v1903
        %v2048 = vpack.c.bf16 %v1912, %v1904
        %v2049 = vpack.c.bf16 %v1913, %v1905
        %v2050 = vpack.c.bf16 %v1914, %v1906
        %v2051 = vpack.c.bf16 %v1915, %v1907
        %v2052 = vpack.c.bf16 %v1916, %v1908
        %v2053 = vpack.c.bf16 %v1925, %v1917
        %v2054 = vpack.c.bf16 %v1926, %v1918
        %v2055 = vpack.c.bf16 %v1927, %v1919
        %v2056 = vpack.c.bf16 %v1928, %v1920
        %v2057 = vpack.c.bf16 %v1929, %v1921
        %v2058 = vpack.c.bf16 %v1930, %v1922
        %v2059 = vpack.c.bf16 %v1931, %v1923
        %v2060 = vpack.c.bf16 %v1932, %v1924
        %v2061 = vpack.c.bf16 %v1941, %v1933
        %v2062 = vpack.c.bf16 %v1942, %v1934
        %v2063 = vpack.c.bf16 %v1943, %v1935
        %v2064 = vpack.c.bf16 %v1944, %v1936
        %v2065 = vpack.c.bf16 %v1945, %v1937
        %v2066 = vpack.c.bf16 %v1946, %v1938
        %v2067 = vpack.c.bf16 %v1947, %v1939
        %v2068 = vpack.c.bf16 %v1948, %v1940
        %v2069 = vpack.c.bf16 %v1957, %v1949
        %v2070 = vpack.c.bf16 %v1958, %v1950
        %v2071 = vpack.c.bf16 %v1959, %v1951
        %v2072 = vpack.c.bf16 %v1960, %v1952
        %v2073 = vpack.c.bf16 %v1961, %v1953
        %v2074 = vpack.c.bf16 %v1962, %v1954
        %v2075 = vpack.c.bf16 %v1963, %v1955
        %v2076 = vpack.c.bf16 %v1964, %v1956
        %v2077 = vpack.c.bf16 %v1973, %v1965
        %v2078 = vpack.c.bf16 %v1974, %v1966
        %v2079 = vpack.c.bf16 %v1975, %v1967
        %v2080 = vpack.c.bf16 %v1976, %v1968
        %v2081 = vpack.c.bf16 %v1977, %v1969
        %v2082 = vpack.c.bf16 %v1978, %v1970
        %v2083 = vpack.c.bf16 %v1979, %v1971
        %v2084 = vpack.c.bf16 %v1980, %v1972
        %v2085 = vpack.c.bf16 %v1989, %v1981
        %v2086 = vpack.c.bf16 %v1990, %v1982
        %v2087 = vpack.c.bf16 %v1991, %v1983
        %v2088 = vpack.c.bf16 %v1992, %v1984
        %v2089 = vpack.c.bf16 %v1993, %v1985
        %v2090 = vpack.c.bf16 %v1994, %v1986
        %v2091 = vpack.c.bf16 %v1995, %v1987
        %v2092 = vpack.c.bf16 %v1996, %v1988
        %v2093 = vpack.c.bf16 %v2005, %v1997
        %v2094 = vpack.c.bf16 %v2006, %v1998
        %v2095 = vpack.c.bf16 %v2007, %v1999
        %v2096 = vpack.c.bf16 %v2008, %v2000
        %v2097 = vpack.c.bf16 %v2009, %v2001
        %v2098 = vpack.c.bf16 %v2010, %v2002
        %v2099 = vpack.c.bf16 %v2011, %v2003
        %v2100 = vpack.c.bf16 %v2012, %v2004
        %v2101 = vpack.c.bf16 %v2021, %v2013
        %v2102 = vpack.c.bf16 %v2022, %v2014
        %v2103 = vpack.c.bf16 %v2023, %v2015
        %v2104 = vpack.c.bf16 %v2024, %v2016
        %v2105 = vpack.c.bf16 %v2025, %v2017
        %v2106 = vpack.c.bf16 %v2026, %v2018
        %v2107 = vpack.c.bf16 %v2027, %v2019
        %v2108 = vpack.c.bf16 %v2028, %v2020
        %2109 = vset.pattern.permute.xlu0 1
        %2110 = vperm.xlu0 %2109, %v456
        %v2111 = vpop.permute.xlu0 %2110
        %2113 = vset.pattern.permute.xlu0 1
        %2114 = vperm.xlu0 %2113, %v457
        %v2115 = vpop.permute.xlu0 %2114
        %2117 = vset.pattern.permute.xlu0 1
        %2118 = vperm.xlu0 %2117, %v458
        %v2119 = vpop.permute.xlu0 %2118
        %2121 = vset.pattern.permute.xlu0 1
        %2122 = vperm.xlu0 %2121, %v459
        %v2123 = vpop.permute.xlu0 %2122
        %2125 = vset.pattern.permute.xlu0 1
        %2126 = vperm.xlu0 %2125, %v460
        %v2127 = vpop.permute.xlu0 %2126
        %2129 = vset.pattern.permute.xlu0 1
        %2130 = vperm.xlu0 %2129, %v461
        %v2131 = vpop.permute.xlu0 %2130
        %2133 = vset.pattern.permute.xlu0 1
        %2134 = vperm.xlu0 %2133, %v462
        %v2135 = vpop.permute.xlu0 %2134
        %2137 = vset.pattern.permute.xlu0 1
        %2138 = vperm.xlu0 %2137, %v463
        %v2139 = vpop.permute.xlu0 %2138
        %2141 = vset.pattern.permute.xlu0 1
        %2142 = vperm.xlu0 %2141, %v464
        %v2143 = vpop.permute.xlu0 %2142
        %2145 = vset.pattern.permute.xlu0 1
        %2146 = vperm.xlu0 %2145, %v465
        %v2147 = vpop.permute.xlu0 %2146
        %2149 = vset.pattern.permute.xlu0 1
        %2150 = vperm.xlu0 %2149, %v466
        %v2151 = vpop.permute.xlu0 %2150
        %2153 = vset.pattern.permute.xlu0 1
        %2154 = vperm.xlu0 %2153, %v467
        %v2155 = vpop.permute.xlu0 %2154
        %2157 = vset.pattern.permute.xlu0 1
        %2158 = vperm.xlu0 %2157, %v468
        %v2159 = vpop.permute.xlu0 %2158
        %2161 = vset.pattern.permute.xlu0 1
        %2162 = vperm.xlu0 %2161, %v469
        %v2163 = vpop.permute.xlu0 %2162
        %2165 = vset.pattern.permute.xlu0 1
        %2166 = vperm.xlu0 %2165, %v470
        %v2167 = vpop.permute.xlu0 %2166
        %2169 = vset.pattern.permute.xlu0 1
        %2170 = vperm.xlu0 %2169, %v471
        %v2171 = vpop.permute.xlu0 %2170
        %v2189 = vunpack.c.l.b16 %v2029
        %v2190 = vunpack.c.l.b16 %v2030
        %v2191 = vunpack.c.l.b16 %v2031
        %v2192 = vunpack.c.l.b16 %v2032
        %v2193 = vunpack.c.l.b16 %v2033
        %v2194 = vunpack.c.l.b16 %v2034
        %v2195 = vunpack.c.l.b16 %v2035
        %v2196 = vunpack.c.l.b16 %v2036
        %v2197 = vunpack.c.l.b16 %v2037
        %v2198 = vunpack.c.l.b16 %v2038
        %v2199 = vunpack.c.l.b16 %v2039
        %v2200 = vunpack.c.l.b16 %v2040
        %v2201 = vunpack.c.l.b16 %v2041
        %v2202 = vunpack.c.l.b16 %v2042
        %v2203 = vunpack.c.l.b16 %v2043
        %v2204 = vunpack.c.l.b16 %v2044
        %v2205 = vpack.c.b16 %v2190, %v2189
        %v2206 = vpack.c.b16 %v2192, %v2191
        %v2207 = vpack.c.b16 %v2194, %v2193
        %v2208 = vpack.c.b16 %v2196, %v2195
        %v2209 = vpack.c.b16 %v2198, %v2197
        %v2210 = vpack.c.b16 %v2200, %v2199
        %v2211 = vpack.c.b16 %v2202, %v2201
        %v2212 = vpack.c.b16 %v2204, %v2203
        %2221 = vmatprep.subr.bf16.mxu0 %v2046
        %2222 = vmatpush1.bf16.msra.mxu0 %v2045
        %2223 = vmatprep.subr.bf16.mxu0 %v2054
        %2224 = vmatpush1.bf16.msra.mxu0 %v2053
        %2225 = vmatprep.subr.bf16.mxu0 %v2062
        %2226 = vmatpush1.bf16.msra.mxu0 %v2061
        %2227 = vmatprep.subr.bf16.mxu0 %v2070
        %2228 = vmatpush1.bf16.msra.mxu0 %v2069
        %2229 = vmatprep.subr.bf16.mxu0 %v2078
        %2230 = vmatpush1.bf16.msra.mxu0 %v2077
        %2231 = vmatprep.subr.bf16.mxu0 %v2086
        %2232 = vmatpush1.bf16.msra.mxu0 %v2085
        %2233 = vmatprep.subr.bf16.mxu0 %v2094
        %2234 = vmatpush1.bf16.msra.mxu0 %v2093
        %2235 = vmatprep.subr.bf16.mxu0 %v2102
        %2236 = vmatpush1.bf16.msra.mxu0 %v2101
        %2237 = vmatprep.subr.bf16.mxu0 0
        %2238 = vmatpush1.bf16.msra.mxu0 0
        %2239 = vmatprep.subr.bf16.mxu0 0
        %2240 = vmatpush1.bf16.msra.mxu0 0
        %2241 = vmatprep.subr.bf16.mxu0 0
        %2242 = vmatpush1.bf16.msra.mxu0 0
        %2243 = vmatprep.subr.bf16.mxu0 0
        %2244 = vmatpush1.bf16.msra.mxu0 0
        %2245 = vmatprep.subr.bf16.mxu0 0
        %2246 = vmatpush1.bf16.msra.mxu0 0
        %2247 = vmatprep.subr.bf16.mxu0 0
        %2248 = vmatpush1.bf16.msra.mxu0 0
        %2249 = vmatprep.subr.bf16.mxu0 0
        %2250 = vmatpush1.bf16.msra.mxu0 0
        %2251 = vmatprep.subr.bf16.mxu0 0
        %2252 = vmatpush1.bf16.msra.mxu0 0
        %2253 = vmatprep.mubr.bf16.mxu0 0
        %2254 = vmatmul.mubr.bf16.gmra.mrb[0].mxu0 %v2205
        %v2255 = vpop.f32.mrb[0].mxu0
        %v2256 = vadd.f32 %v2111, %v2255
        %v2257 = vpop.f32.mrb[0].mxu0
        %v2258 = vadd.f32 %v2111, %v2257
        %v2259 = vpop.f32.mrb[0].mxu0
        %v2260 = vadd.f32 %v2115, %v2259
        %v2261 = vpop.f32.mrb[0].mxu0
        %v2262 = vadd.f32 %v2115, %v2261
        %2263 = vmatprep.mubr.bf16.mxu0 0
        %2264 = vmatmul.mubr.bf16.gmra.mrb[0].mxu0 %v2206
        %v2265 = vpop.f32.mrb[0].mxu0
        %v2266 = vadd.f32 %v2119, %v2265
        %v2267 = vpop.f32.mrb[0].mxu0
        %v2268 = vadd.f32 %v2119, %v2267
        %v2269 = vpop.f32.mrb[0].mxu0
        %v2270 = vadd.f32 %v2123, %v2269
        %v2271 = vpop.f32.mrb[0].mxu0
        %v2272 = vadd.f32 %v2123, %v2271
        %2273 = vmatprep.mubr.bf16.mxu0 0
        %2274 = vmatmul.mubr.bf16.gmra.mrb[0].mxu0 %v2207
        %v2275 = vpop.f32.mrb[0].mxu0
        %v2276 = vadd.f32 %v2127, %v2275
        %v2277 = vpop.f32.mrb[0].mxu0
        %v2278 = vadd.f32 %v2127, %v2277
        %v2279 = vpop.f32.mrb[0].mxu0
        %v2280 = vadd.f32 %v2131, %v2279
        %v2281 = vpop.f32.mrb[0].mxu0
        %v2282 = vadd.f32 %v2131, %v2281
        %2283 = vmatprep.mubr.bf16.mxu0 0
        %2284 = vmatmul.mubr.bf16.gmra.mrb[0].mxu0 %v2208
        %v2285 = vpop.f32.mrb[0].mxu0
        %v2286 = vadd.f32 %v2135, %v2285
        %v2287 = vpop.f32.mrb[0].mxu0
        %v2288 = vadd.f32 %v2135, %v2287
        %v2289 = vpop.f32.mrb[0].mxu0
        %v2290 = vadd.f32 %v2139, %v2289
        %v2291 = vpop.f32.mrb[0].mxu0
        %v2292 = vadd.f32 %v2139, %v2291
        %2293 = vmatprep.mubr.bf16.mxu0 0
        %2294 = vmatmul.mubr.bf16.gmra.mrb[0].mxu0 %v2209
        %v2295 = vpop.f32.mrb[0].mxu0
        %v2296 = vadd.f32 %v2143, %v2295
        %v2297 = vpop.f32.mrb[0].mxu0
        %v2298 = vadd.f32 %v2143, %v2297
        %v2299 = vpop.f32.mrb[0].mxu0
        %v2300 = vadd.f32 %v2147, %v2299
        %v2301 = vpop.f32.mrb[0].mxu0
        %v2302 = vadd.f32 %v2147, %v2301
        %2303 = vmatprep.mubr.bf16.mxu0 0
        %2304 = vmatmul.mubr.bf16.gmra.mrb[0].mxu0 %v2210
        %v2305 = vpop.f32.mrb[0].mxu0
        %v2306 = vadd.f32 %v2151, %v2305
        %v2307 = vpop.f32.mrb[0].mxu0
        %v2308 = vadd.f32 %v2151, %v2307
        %v2309 = vpop.f32.mrb[0].mxu0
        %v2310 = vadd.f32 %v2155, %v2309
        %v2311 = vpop.f32.mrb[0].mxu0
        %v2312 = vadd.f32 %v2155, %v2311
        %2313 = vmatprep.mubr.bf16.mxu0 0
        %2314 = vmatmul.mubr.bf16.gmra.mrb[0].mxu0 %v2211
        %v2315 = vpop.f32.mrb[0].mxu0
        %v2316 = vadd.f32 %v2159, %v2315
        %v2317 = vpop.f32.mrb[0].mxu0
        %v2318 = vadd.f32 %v2159, %v2317
        %v2319 = vpop.f32.mrb[0].mxu0
        %v2320 = vadd.f32 %v2163, %v2319
        %v2321 = vpop.f32.mrb[0].mxu0
        %v2322 = vadd.f32 %v2163, %v2321
        %2323 = vmatprep.mubr.bf16.mxu0 0
        %2324 = vmatmul.mubr.bf16.gmra.mrb[0].mxu0 %v2212
        %v2325 = vpop.f32.mrb[0].mxu0
        %v2326 = vadd.f32 %v2167, %v2325
        %v2327 = vpop.f32.mrb[0].mxu0
        %v2328 = vadd.f32 %v2167, %v2327
        %v2329 = vpop.f32.mrb[0].mxu0
        %v2330 = vadd.f32 %v2171, %v2329
        %v2331 = vpop.f32.mrb[0].mxu0
        %v2332 = vadd.f32 %v2171, %v2331
        %2333 = vdwg.mxu0
        %2334 = vmatprep.subr.bf16.mxu0 %v2048
        %2335 = vmatpush1.bf16.msra.mxu0 %v2047
        %2336 = vmatprep.subr.bf16.mxu0 %v2056
        %2337 = vmatpush1.bf16.msra.mxu0 %v2055
        %2338 = vmatprep.subr.bf16.mxu0 %v2064
        %2339 = vmatpush1.bf16.msra.mxu0 %v2063
        %2340 = vmatprep.subr.bf16.mxu0 %v2072
        %2341 = vmatpush1.bf16.msra.mxu0 %v2071
        %2342 = vmatprep.subr.bf16.mxu0 %v2080
        %2343 = vmatpush1.bf16.msra.mxu0 %v2079
        %2344 = vmatprep.subr.bf16.mxu0 %v2088
        %2345 = vmatpush1.bf16.msra.mxu0 %v2087
        %2346 = vmatprep.subr.bf16.mxu0 %v2096
        %2347 = vmatpush1.bf16.msra.mxu0 %v2095
        %2348 = vmatprep.subr.bf16.mxu0 %v2104
        %2349 = vmatpush1.bf16.msra.mxu0 %v2103
        %2350 = vmatprep.subr.bf16.mxu0 0
        %2351 = vmatpush1.bf16.msra.mxu0 0
        %2352 = vmatprep.subr.bf16.mxu0 0
        %2353 = vmatpush1.bf16.msra.mxu0 0
        %2354 = vmatprep.subr.bf16.mxu0 0
        %2355 = vmatpush1.bf16.msra.mxu0 0
        %2356 = vmatprep.subr.bf16.mxu0 0
        %2357 = vmatpush1.bf16.msra.mxu0 0
        %2358 = vmatprep.subr.bf16.mxu0 0
        %2359 = vmatpush1.bf16.msra.mxu0 0
        %2360 = vmatprep.subr.bf16.mxu0 0
        %2361 = vmatpush1.bf16.msra.mxu0 0
        %2362 = vmatprep.subr.bf16.mxu0 0
        %2363 = vmatpush1.bf16.msra.mxu0 0
        %2364 = vmatprep.subr.bf16.mxu0 0
        %2365 = vmatpush1.bf16.msra.mxu0 0
        %2366 = vmatprep.mubr.bf16.mxu0 0
        %2367 = vmatmul.mubr.bf16.gmra.mrb[0].mxu0 %v2205
        %v2368 = vpop.f32.mrb[0].mxu0
        %v2369 = vadd.f32 %v2111, %v2368
        %v2370 = vpop.f32.mrb[0].mxu0
        %v2371 = vadd.f32 %v2111, %v2370
        %v2372 = vpop.f32.mrb[0].mxu0
        %v2373 = vadd.f32 %v2115, %v2372
        %v2374 = vpop.f32.mrb[0].mxu0
        %v2375 = vadd.f32 %v2115, %v2374
        %2376 = vmatprep.mubr.bf16.mxu0 0
        %2377 = vmatmul.mubr.bf16.gmra.mrb[0].mxu0 %v2206
        %v2378 = vpop.f32.mrb[0].mxu0
        %v2379 = vadd.f32 %v2119, %v2378
        %v2380 = vpop.f32.mrb[0].mxu0
        %v2381 = vadd.f32 %v2119, %v2380
        %v2382 = vpop.f32.mrb[0].mxu0
        %v2383 = vadd.f32 %v2123, %v2382
        %v2384 = vpop.f32.mrb[0].mxu0
        %v2385 = vadd.f32 %v2123, %v2384
        %2386 = vmatprep.mubr.bf16.mxu0 0
        %2387 = vmatmul.mubr.bf16.gmra.mrb[0].mxu0 %v2207
        %v2388 = vpop.f32.mrb[0].mxu0
        %v2389 = vadd.f32 %v2127, %v2388
        %v2390 = vpop.f32.mrb[0].mxu0
        %v2391 = vadd.f32 %v2127, %v2390
        %v2392 = vpop.f32.mrb[0].mxu0
        %v2393 = vadd.f32 %v2131, %v2392
        %v2394 = vpop.f32.mrb[0].mxu0
        %v2395 = vadd.f32 %v2131, %v2394
        %2396 = vmatprep.mubr.bf16.mxu0 0
        %2397 = vmatmul.mubr.bf16.gmra.mrb[0].mxu0 %v2208
        %v2398 = vpop.f32.mrb[0].mxu0
        %v2399 = vadd.f32 %v2135, %v2398
        %v2400 = vpop.f32.mrb[0].mxu0
        %v2401 = vadd.f32 %v2135, %v2400
        %v2402 = vpop.f32.mrb[0].mxu0
        %v2403 = vadd.f32 %v2139, %v2402
        %v2404 = vpop.f32.mrb[0].mxu0
        %v2405 = vadd.f32 %v2139, %v2404
        %2406 = vmatprep.mubr.bf16.mxu0 0
        %2407 = vmatmul.mubr.bf16.gmra.mrb[0].mxu0 %v2209
        %v2408 = vpop.f32.mrb[0].mxu0
        %v2409 = vadd.f32 %v2143, %v2408
        %v2410 = vpop.f32.mrb[0].mxu0
        %v2411 = vadd.f32 %v2143, %v2410
        %v2412 = vpop.f32.mrb[0].mxu0
        %v2413 = vadd.f32 %v2147, %v2412
        %v2414 = vpop.f32.mrb[0].mxu0
        %v2415 = vadd.f32 %v2147, %v2414
        %2416 = vmatprep.mubr.bf16.mxu0 0
        %2417 = vmatmul.mubr.bf16.gmra.mrb[0].mxu0 %v2210
        %v2418 = vpop.f32.mrb[0].mxu0
        %v2419 = vadd.f32 %v2151, %v2418
        %v2420 = vpop.f32.mrb[0].mxu0
        %v2421 = vadd.f32 %v2151, %v2420
        %v2422 = vpop.f32.mrb[0].mxu0
        %v2423 = vadd.f32 %v2155, %v2422
        %v2424 = vpop.f32.mrb[0].mxu0
        %v2425 = vadd.f32 %v2155, %v2424
        %2426 = vmatprep.mubr.bf16.mxu0 0
        %2427 = vmatmul.mubr.bf16.gmra.mrb[0].mxu0 %v2211
        %v2428 = vpop.f32.mrb[0].mxu0
        %v2429 = vadd.f32 %v2159, %v2428
        %v2430 = vpop.f32.mrb[0].mxu0
        %v2431 = vadd.f32 %v2159, %v2430
        %v2432 = vpop.f32.mrb[0].mxu0
        %v2433 = vadd.f32 %v2163, %v2432
        %v2434 = vpop.f32.mrb[0].mxu0
        %v2435 = vadd.f32 %v2163, %v2434
        %2436 = vmatprep.mubr.bf16.mxu0 0
        %2437 = vmatmul.mubr.bf16.gmra.mrb[0].mxu0 %v2212
        %v2438 = vpop.f32.mrb[0].mxu0
        %v2439 = vadd.f32 %v2167, %v2438
        %v2440 = vpop.f32.mrb[0].mxu0
        %v2441 = vadd.f32 %v2167, %v2440
        %v2442 = vpop.f32.mrb[0].mxu0
        %v2443 = vadd.f32 %v2171, %v2442
        %v2444 = vpop.f32.mrb[0].mxu0
        %v2445 = vadd.f32 %v2171, %v2444
        %2446 = vdwg.mxu0
        %2447 = vmatprep.subr.bf16.mxu0 %v2050
        %2448 = vmatpush1.bf16.msra.mxu0 %v2049
        %2449 = vmatprep.subr.bf16.mxu0 %v2058
        %2450 = vmatpush1.bf16.msra.mxu0 %v2057
        %2451 = vmatprep.subr.bf16.mxu0 %v2066
        %2452 = vmatpush1.bf16.msra.mxu0 %v2065
        %2453 = vmatprep.subr.bf16.mxu0 %v2074
        %2454 = vmatpush1.bf16.msra.mxu0 %v2073
        %2455 = vmatprep.subr.bf16.mxu0 %v2082
        %2456 = vmatpush1.bf16.msra.mxu0 %v2081
        %2457 = vmatprep.subr.bf16.mxu0 %v2090
        %2458 = vmatpush1.bf16.msra.mxu0 %v2089
        %2459 = vmatprep.subr.bf16.mxu0 %v2098
        %2460 = vmatpush1.bf16.msra.mxu0 %v2097
        %2461 = vmatprep.subr.bf16.mxu0 %v2106
        %2462 = vmatpush1.bf16.msra.mxu0 %v2105
        %2463 = vmatprep.subr.bf16.mxu0 0
        %2464 = vmatpush1.bf16.msra.mxu0 0
        %2465 = vmatprep.subr.bf16.mxu0 0
        %2466 = vmatpush1.bf16.msra.mxu0 0
        %2467 = vmatprep.subr.bf16.mxu0 0
        %2468 = vmatpush1.bf16.msra.mxu0 0
        %2469 = vmatprep.subr.bf16.mxu0 0
        %2470 = vmatpush1.bf16.msra.mxu0 0
        %2471 = vmatprep.subr.bf16.mxu0 0
        %2472 = vmatpush1.bf16.msra.mxu0 0
        %2473 = vmatprep.subr.bf16.mxu0 0
        %2474 = vmatpush1.bf16.msra.mxu0 0
        %2475 = vmatprep.subr.bf16.mxu0 0
        %2476 = vmatpush1.bf16.msra.mxu0 0
        %2477 = vmatprep.subr.bf16.mxu0 0
        %2478 = vmatpush1.bf16.msra.mxu0 0
        %2479 = vmatprep.mubr.bf16.mxu0 0
        %2480 = vmatmul.mubr.bf16.gmra.mrb[0].mxu0 %v2205
        %v2481 = vpop.f32.mrb[0].mxu0
        %v2482 = vadd.f32 %v2111, %v2481
        %v2483 = vpop.f32.mrb[0].mxu0
        %v2484 = vadd.f32 %v2111, %v2483
        %v2485 = vpop.f32.mrb[0].mxu0
        %v2486 = vadd.f32 %v2115, %v2485
        %v2487 = vpop.f32.mrb[0].mxu0
        %v2488 = vadd.f32 %v2115, %v2487
        %2489 = vmatprep.mubr.bf16.mxu0 0
        %2490 = vmatmul.mubr.bf16.gmra.mrb[0].mxu0 %v2206
        %v2491 = vpop.f32.mrb[0].mxu0
        %v2492 = vadd.f32 %v2119, %v2491
        %v2493 = vpop.f32.mrb[0].mxu0
        %v2494 = vadd.f32 %v2119, %v2493
        %v2495 = vpop.f32.mrb[0].mxu0
        %v2496 = vadd.f32 %v2123, %v2495
        %v2497 = vpop.f32.mrb[0].mxu0
        %v2498 = vadd.f32 %v2123, %v2497
        %2499 = vmatprep.mubr.bf16.mxu0 0
        %2500 = vmatmul.mubr.bf16.gmra.mrb[0].mxu0 %v2207
        %v2501 = vpop.f32.mrb[0].mxu0
        %v2502 = vadd.f32 %v2127, %v2501
        %v2503 = vpop.f32.mrb[0].mxu0
        %v2504 = vadd.f32 %v2127, %v2503
        %v2505 = vpop.f32.mrb[0].mxu0
        %v2506 = vadd.f32 %v2131, %v2505
        %v2507 = vpop.f32.mrb[0].mxu0
        %v2508 = vadd.f32 %v2131, %v2507
        %2509 = vmatprep.mubr.bf16.mxu0 0
        %2510 = vmatmul.mubr.bf16.gmra.mrb[0].mxu0 %v2208
        %v2511 = vpop.f32.mrb[0].mxu0
        %v2512 = vadd.f32 %v2135, %v2511
        %v2513 = vpop.f32.mrb[0].mxu0
        %v2514 = vadd.f32 %v2135, %v2513
        %v2515 = vpop.f32.mrb[0].mxu0
        %v2516 = vadd.f32 %v2139, %v2515
        %v2517 = vpop.f32.mrb[0].mxu0
        %v2518 = vadd.f32 %v2139, %v2517
        %2519 = vmatprep.mubr.bf16.mxu0 0
        %2520 = vmatmul.mubr.bf16.gmra.mrb[0].mxu0 %v2209
        %v2521 = vpop.f32.mrb[0].mxu0
        %v2522 = vadd.f32 %v2143, %v2521
        %v2523 = vpop.f32.mrb[0].mxu0
        %v2524 = vadd.f32 %v2143, %v2523
        %v2525 = vpop.f32.mrb[0].mxu0
        %v2526 = vadd.f32 %v2147, %v2525
        %v2527 = vpop.f32.mrb[0].mxu0
        %v2528 = vadd.f32 %v2147, %v2527
        %2529 = vmatprep.mubr.bf16.mxu0 0
        %2530 = vmatmul.mubr.bf16.gmra.mrb[0].mxu0 %v2210
        %v2531 = vpop.f32.mrb[0].mxu0
        %v2532 = vadd.f32 %v2151, %v2531
        %v2533 = vpop.f32.mrb[0].mxu0
        %v2534 = vadd.f32 %v2151, %v2533
        %v2535 = vpop.f32.mrb[0].mxu0
        %v2536 = vadd.f32 %v2155, %v2535
        %v2537 = vpop.f32.mrb[0].mxu0
        %v2538 = vadd.f32 %v2155, %v2537
        %2539 = vmatprep.mubr.bf16.mxu0 0
        %2540 = vmatmul.mubr.bf16.gmra.mrb[0].mxu0 %v2211
        %v2541 = vpop.f32.mrb[0].mxu0
        %v2542 = vadd.f32 %v2159, %v2541
        %v2543 = vpop.f32.mrb[0].mxu0
        %v2544 = vadd.f32 %v2159, %v2543
        %v2545 = vpop.f32.mrb[0].mxu0
        %v2546 = vadd.f32 %v2163, %v2545
        %v2547 = vpop.f32.mrb[0].mxu0
        %v2548 = vadd.f32 %v2163, %v2547
        %2549 = vmatprep.mubr.bf16.mxu0 0
        %2550 = vmatmul.mubr.bf16.gmra.mrb[0].mxu0 %v2212
        %v2551 = vpop.f32.mrb[0].mxu0
        %v2552 = vadd.f32 %v2167, %v2551
        %v2553 = vpop.f32.mrb[0].mxu0
        %v2554 = vadd.f32 %v2167, %v2553
        %v2555 = vpop.f32.mrb[0].mxu0
        %v2556 = vadd.f32 %v2171, %v2555
        %v2557 = vpop.f32.mrb[0].mxu0
        %v2558 = vadd.f32 %v2171, %v2557
        %2559 = vdwg.mxu0
        %2560 = vmatprep.subr.bf16.mxu0 %v2052
        %2561 = vmatpush1.bf16.msra.mxu0 %v2051
        %2562 = vmatprep.subr.bf16.mxu0 %v2060
        %2563 = vmatpush1.bf16.msra.mxu0 %v2059
        %2564 = vmatprep.subr.bf16.mxu0 %v2068
        %2565 = vmatpush1.bf16.msra.mxu0 %v2067
        %2566 = vmatprep.subr.bf16.mxu0 %v2076
        %2567 = vmatpush1.bf16.msra.mxu0 %v2075
        %2568 = vmatprep.subr.bf16.mxu0 %v2084
        %2569 = vmatpush1.bf16.msra.mxu0 %v2083
        %2570 = vmatprep.subr.bf16.mxu0 %v2092
        %2571 = vmatpush1.bf16.msra.mxu0 %v2091
        %2572 = vmatprep.subr.bf16.mxu0 %v2100
        %2573 = vmatpush1.bf16.msra.mxu0 %v2099
        %2574 = vmatprep.subr.bf16.mxu0 %v2108
        %2575 = vmatpush1.bf16.msra.mxu0 %v2107
        %2576 = vmatprep.subr.bf16.mxu0 0
        %2577 = vmatpush1.bf16.msra.mxu0 0
        %2578 = vmatprep.subr.bf16.mxu0 0
        %2579 = vmatpush1.bf16.msra.mxu0 0
        %2580 = vmatprep.subr.bf16.mxu0 0
        %2581 = vmatpush1.bf16.msra.mxu0 0
        %2582 = vmatprep.subr.bf16.mxu0 0
        %2583 = vmatpush1.bf16.msra.mxu0 0
        %2584 = vmatprep.subr.bf16.mxu0 0
        %2585 = vmatpush1.bf16.msra.mxu0 0
        %2586 = vmatprep.subr.bf16.mxu0 0
        %2587 = vmatpush1.bf16.msra.mxu0 0
        %2588 = vmatprep.subr.bf16.mxu0 0
        %2589 = vmatpush1.bf16.msra.mxu0 0
        %2590 = vmatprep.subr.bf16.mxu0 0
        %2591 = vmatpush1.bf16.msra.mxu0 0
        %2592 = vmatprep.mubr.bf16.mxu0 0
        %2593 = vmatmul.mubr.bf16.gmra.mrb[0].mxu0 %v2205
        %v2594 = vpop.f32.mrb[0].mxu0
        %v2595 = vadd.f32 %v2111, %v2594
        %v2596 = vpop.f32.mrb[0].mxu0
        %v2597 = vadd.f32 %v2111, %v2596
        %v2598 = vpop.f32.mrb[0].mxu0
        %v2599 = vadd.f32 %v2115, %v2598
        %v2600 = vpop.f32.mrb[0].mxu0
        %v2601 = vadd.f32 %v2115, %v2600
        %2602 = vmatprep.mubr.bf16.mxu0 0
        %2603 = vmatmul.mubr.bf16.gmra.mrb[0].mxu0 %v2206
        %v2604 = vpop.f32.mrb[0].mxu0
        %v2605 = vadd.f32 %v2119, %v2604
        %v2606 = vpop.f32.mrb[0].mxu0
        %v2607 = vadd.f32 %v2119, %v2606
        %v2608 = vpop.f32.mrb[0].mxu0
        %v2609 = vadd.f32 %v2123, %v2608
        %v2610 = vpop.f32.mrb[0].mxu0
        %v2611 = vadd.f32 %v2123, %v2610
        %2612 = vmatprep.mubr.bf16.mxu0 0
        %2613 = vmatmul.mubr.bf16.gmra.mrb[0].mxu0 %v2207
        %v2614 = vpop.f32.mrb[0].mxu0
        %v2615 = vadd.f32 %v2127, %v2614
        %v2616 = vpop.f32.mrb[0].mxu0
        %v2617 = vadd.f32 %v2127, %v2616
        %v2618 = vpop.f32.mrb[0].mxu0
        %v2619 = vadd.f32 %v2131, %v2618
        %v2620 = vpop.f32.mrb[0].mxu0
        %v2621 = vadd.f32 %v2131, %v2620
        %2622 = vmatprep.mubr.bf16.mxu0 0
        %2623 = vmatmul.mubr.bf16.gmra.mrb[0].mxu0 %v2208
        %v2624 = vpop.f32.mrb[0].mxu0
        %v2625 = vadd.f32 %v2135, %v2624
        %v2626 = vpop.f32.mrb[0].mxu0
        %v2627 = vadd.f32 %v2135, %v2626
        %v2628 = vpop.f32.mrb[0].mxu0
        %v2629 = vadd.f32 %v2139, %v2628
        %v2630 = vpop.f32.mrb[0].mxu0
        %v2631 = vadd.f32 %v2139, %v2630
        %2632 = vmatprep.mubr.bf16.mxu0 0
        %2633 = vmatmul.mubr.bf16.gmra.mrb[0].mxu0 %v2209
        %v2634 = vpop.f32.mrb[0].mxu0
        %v2635 = vadd.f32 %v2143, %v2634
        %v2636 = vpop.f32.mrb[0].mxu0
        %v2637 = vadd.f32 %v2143, %v2636
        %v2638 = vpop.f32.mrb[0].mxu0
        %v2639 = vadd.f32 %v2147, %v2638
        %v2640 = vpop.f32.mrb[0].mxu0
        %v2641 = vadd.f32 %v2147, %v2640
        %2642 = vmatprep.mubr.bf16.mxu0 0
        %2643 = vmatmul.mubr.bf16.gmra.mrb[0].mxu0 %v2210
        %v2644 = vpop.f32.mrb[0].mxu0
        %v2645 = vadd.f32 %v2151, %v2644
        %v2646 = vpop.f32.mrb[0].mxu0
        %v2647 = vadd.f32 %v2151, %v2646
        %v2648 = vpop.f32.mrb[0].mxu0
        %v2649 = vadd.f32 %v2155, %v2648
        %v2650 = vpop.f32.mrb[0].mxu0
        %v2651 = vadd.f32 %v2155, %v2650
        %2652 = vmatprep.mubr.bf16.mxu0 0
        %2653 = vmatmul.mubr.bf16.gmra.mrb[0].mxu0 %v2211
        %v2654 = vpop.f32.mrb[0].mxu0
        %v2655 = vadd.f32 %v2159, %v2654
        %v2656 = vpop.f32.mrb[0].mxu0
        %v2657 = vadd.f32 %v2159, %v2656
        %v2658 = vpop.f32.mrb[0].mxu0
        %v2659 = vadd.f32 %v2163, %v2658
        %v2660 = vpop.f32.mrb[0].mxu0
        %v2661 = vadd.f32 %v2163, %v2660
        %2662 = vmatprep.mubr.bf16.mxu0 0
        %2663 = vmatmul.mubr.bf16.gmra.mrb[0].mxu0 %v2212
        %v2664 = vpop.f32.mrb[0].mxu0
        %v2665 = vadd.f32 %v2167, %v2664
        %v2666 = vpop.f32.mrb[0].mxu0
        %v2667 = vadd.f32 %v2167, %v2666
        %v2668 = vpop.f32.mrb[0].mxu0
        %v2669 = vadd.f32 %v2171, %v2668
        %v2670 = vpop.f32.mrb[0].mxu0
        %v2671 = vadd.f32 %v2171, %v2670
        %2672 = vdwg.mxu0
        %v2673 = vsub.f32 0.0, %v2256
        %v2674 = vsub.f32 0.0, %v2258
        %v2675 = vsub.f32 0.0, %v2369
        %v2676 = vsub.f32 0.0, %v2371
        %v2677 = vsub.f32 0.0, %v2482
        %v2678 = vsub.f32 0.0, %v2484
        %v2679 = vsub.f32 0.0, %v2595
        %v2680 = vsub.f32 0.0, %v2597
        %v2681 = vsub.f32 0.0, %v2260
        %v2682 = vsub.f32 0.0, %v2262
        %v2683 = vsub.f32 0.0, %v2373
        %v2684 = vsub.f32 0.0, %v2375
        %v2685 = vsub.f32 0.0, %v2486
        %v2686 = vsub.f32 0.0, %v2488
        %v2687 = vsub.f32 0.0, %v2599
        %v2688 = vsub.f32 0.0, %v2601
        %v2689 = vsub.f32 0.0, %v2266
        %v2690 = vsub.f32 0.0, %v2268
        %v2691 = vsub.f32 0.0, %v2379
        %v2692 = vsub.f32 0.0, %v2381
        %v2693 = vsub.f32 0.0, %v2492
        %v2694 = vsub.f32 0.0, %v2494
        %v2695 = vsub.f32 0.0, %v2605
        %v2696 = vsub.f32 0.0, %v2607
        %v2697 = vsub.f32 0.0, %v2270
        %v2698 = vsub.f32 0.0, %v2272
        %v2699 = vsub.f32 0.0, %v2383
        %v2700 = vsub.f32 0.0, %v2385
        %v2701 = vsub.f32 0.0, %v2496
        %v2702 = vsub.f32 0.0, %v2498
        %v2703 = vsub.f32 0.0, %v2609
        %v2704 = vsub.f32 0.0, %v2611
        %v2705 = vsub.f32 0.0, %v2276
        %v2706 = vsub.f32 0.0, %v2278
        %v2707 = vsub.f32 0.0, %v2389
        %v2708 = vsub.f32 0.0, %v2391
        %v2709 = vsub.f32 0.0, %v2502
        %v2710 = vsub.f32 0.0, %v2504
        %v2711 = vsub.f32 0.0, %v2615
        %v2712 = vsub.f32 0.0, %v2617
        %v2713 = vsub.f32 0.0, %v2280
        %v2714 = vsub.f32 0.0, %v2282
        %v2715 = vsub.f32 0.0, %v2393
        %v2716 = vsub.f32 0.0, %v2395
        %v2717 = vsub.f32 0.0, %v2506
        %v2718 = vsub.f32 0.0, %v2508
        %v2719 = vsub.f32 0.0, %v2619
        %v2720 = vsub.f32 0.0, %v2621
        %v2721 = vsub.f32 0.0, %v2286
        %v2722 = vsub.f32 0.0, %v2288
        %v2723 = vsub.f32 0.0, %v2399
        %v2724 = vsub.f32 0.0, %v2401
        %v2725 = vsub.f32 0.0, %v2512
        %v2726 = vsub.f32 0.0, %v2514
        %v2727 = vsub.f32 0.0, %v2625
        %v2728 = vsub.f32 0.0, %v2627
        %v2729 = vsub.f32 0.0, %v2290
        %v2730 = vsub.f32 0.0, %v2292
        %v2731 = vsub.f32 0.0, %v2403
        %v2732 = vsub.f32 0.0, %v2405
        %v2733 = vsub.f32 0.0, %v2516
        %v2734 = vsub.f32 0.0, %v2518
        %v2735 = vsub.f32 0.0, %v2629
        %v2736 = vsub.f32 0.0, %v2631
        %v2737 = vsub.f32 0.0, %v2296
        %v2738 = vsub.f32 0.0, %v2298
        %v2739 = vsub.f32 0.0, %v2409
        %v2740 = vsub.f32 0.0, %v2411
        %v2741 = vsub.f32 0.0, %v2522
        %v2742 = vsub.f32 0.0, %v2524
        %v2743 = vsub.f32 0.0, %v2635
        %v2744 = vsub.f32 0.0, %v2637
        %v2745 = vsub.f32 0.0, %v2300
        %v2746 = vsub.f32 0.0, %v2302
        %v2747 = vsub.f32 0.0, %v2413
        %v2748 = vsub.f32 0.0, %v2415
        %v2749 = vsub.f32 0.0, %v2526
        %v2750 = vsub.f32 0.0, %v2528
        %v2751 = vsub.f32 0.0, %v2639
        %v2752 = vsub.f32 0.0, %v2641
        %v2753 = vsub.f32 0.0, %v2306
        %v2754 = vsub.f32 0.0, %v2308
        %v2755 = vsub.f32 0.0, %v2419
        %v2756 = vsub.f32 0.0, %v2421
        %v2757 = vsub.f32 0.0, %v2532
        %v2758 = vsub.f32 0.0, %v2534
        %v2759 = vsub.f32 0.0, %v2645
        %v2760 = vsub.f32 0.0, %v2647
        %v2761 = vsub.f32 0.0, %v2310
        %v2762 = vsub.f32 0.0, %v2312
        %v2763 = vsub.f32 0.0, %v2423
        %v2764 = vsub.f32 0.0, %v2425
        %v2765 = vsub.f32 0.0, %v2536
        %v2766 = vsub.f32 0.0, %v2538
        %v2767 = vsub.f32 0.0, %v2649
        %v2768 = vsub.f32 0.0, %v2651
        %v2769 = vsub.f32 0.0, %v2316
        %v2770 = vsub.f32 0.0, %v2318
        %v2771 = vsub.f32 0.0, %v2429
        %v2772 = vsub.f32 0.0, %v2431
        %v2773 = vsub.f32 0.0, %v2542
        %v2774 = vsub.f32 0.0, %v2544
        %v2775 = vsub.f32 0.0, %v2655
        %v2776 = vsub.f32 0.0, %v2657
        %v2777 = vsub.f32 0.0, %v2320
        %v2778 = vsub.f32 0.0, %v2322
        %v2779 = vsub.f32 0.0, %v2433
        %v2780 = vsub.f32 0.0, %v2435
        %v2781 = vsub.f32 0.0, %v2546
        %v2782 = vsub.f32 0.0, %v2548
        %v2783 = vsub.f32 0.0, %v2659
        %v2784 = vsub.f32 0.0, %v2661
        %v2785 = vsub.f32 0.0, %v2326
        %v2786 = vsub.f32 0.0, %v2328
        %v2787 = vsub.f32 0.0, %v2439
        %v2788 = vsub.f32 0.0, %v2441
        %v2789 = vsub.f32 0.0, %v2552
        %v2790 = vsub.f32 0.0, %v2554
        %v2791 = vsub.f32 0.0, %v2665
        %v2792 = vsub.f32 0.0, %v2667
        %v2793 = vsub.f32 0.0, %v2330
        %v2794 = vsub.f32 0.0, %v2332
        %v2795 = vsub.f32 0.0, %v2443
        %v2796 = vsub.f32 0.0, %v2445
        %v2797 = vsub.f32 0.0, %v2556
        %v2798 = vsub.f32 0.0, %v2558
        %v2799 = vsub.f32 0.0, %v2669
        %v2800 = vsub.f32 0.0, %v2671
        %v2801 = vmul.f32 %v2673, 1.442695
        %v2802 = vpow.pop %v2801
        %v2803 = vmul.f32 %v2674, 1.442695
        %v2804 = vpow.pop %v2803
        %v2805 = vmul.f32 %v2675, 1.442695
        %v2806 = vpow.pop %v2805
        %v2807 = vmul.f32 %v2676, 1.442695
        %v2808 = vpow.pop %v2807
        %v2809 = vmul.f32 %v2677, 1.442695
        %v2810 = vpow.pop %v2809
        %v2811 = vmul.f32 %v2678, 1.442695
        %v2812 = vpow.pop %v2811
        %v2813 = vmul.f32 %v2679, 1.442695
        %v2814 = vpow.pop %v2813
        %v2815 = vmul.f32 %v2680, 1.442695
        %v2816 = vpow.pop %v2815
        %v2817 = vmul.f32 %v2681, 1.442695
        %v2818 = vpow.pop %v2817
        %v2819 = vmul.f32 %v2682, 1.442695
        %v2820 = vpow.pop %v2819
        %v2821 = vmul.f32 %v2683, 1.442695
        %v2822 = vpow.pop %v2821
        %v2823 = vmul.f32 %v2684, 1.442695
        %v2824 = vpow.pop %v2823
        %v2825 = vmul.f32 %v2685, 1.442695
        %v2826 = vpow.pop %v2825
        %v2827 = vmul.f32 %v2686, 1.442695
        %v2828 = vpow.pop %v2827
        %v2829 = vmul.f32 %v2687, 1.442695
        %v2830 = vpow.pop %v2829
        %v2831 = vmul.f32 %v2688, 1.442695
        %v2832 = vpow.pop %v2831
        %v2833 = vmul.f32 %v2689, 1.442695
        %v2834 = vpow.pop %v2833
        %v2835 = vmul.f32 %v2690, 1.442695
        %v2836 = vpow.pop %v2835
        %v2837 = vmul.f32 %v2691, 1.442695
        %v2838 = vpow.pop %v2837
        %v2839 = vmul.f32 %v2692, 1.442695
        %v2840 = vpow.pop %v2839
        %v2841 = vmul.f32 %v2693, 1.442695
        %v2842 = vpow.pop %v2841
        %v2843 = vmul.f32 %v2694, 1.442695
        %v2844 = vpow.pop %v2843
        %v2845 = vmul.f32 %v2695, 1.442695
        %v2846 = vpow.pop %v2845
        %v2847 = vmul.f32 %v2696, 1.442695
        %v2848 = vpow.pop %v2847
        %v2849 = vmul.f32 %v2697, 1.442695
        %v2850 = vpow.pop %v2849
        %v2851 = vmul.f32 %v2698, 1.442695
        %v2852 = vpow.pop %v2851
        %v2853 = vmul.f32 %v2699, 1.442695
        %v2854 = vpow.pop %v2853
        %v2855 = vmul.f32 %v2700, 1.442695
        %v2856 = vpow.pop %v2855
        %v2857 = vmul.f32 %v2701, 1.442695
        %v2858 = vpow.pop %v2857
        %v2859 = vmul.f32 %v2702, 1.442695
        %v2860 = vpow.pop %v2859
        %v2861 = vmul.f32 %v2703, 1.442695
        %v2862 = vpow.pop %v2861
        %v2863 = vmul.f32 %v2704, 1.442695
        %v2864 = vpow.pop %v2863
        %v2865 = vmul.f32 %v2705, 1.442695
        %v2866 = vpow.pop %v2865
        %v2867 = vmul.f32 %v2706, 1.442695
        %v2868 = vpow.pop %v2867
        %v2869 = vmul.f32 %v2707, 1.442695
        %v2870 = vpow.pop %v2869
        %v2871 = vmul.f32 %v2708, 1.442695
        %v2872 = vpow.pop %v2871
        %v2873 = vmul.f32 %v2709, 1.442695
        %v2874 = vpow.pop %v2873
        %v2875 = vmul.f32 %v2710, 1.442695
        %v2876 = vpow.pop %v2875
        %v2877 = vmul.f32 %v2711, 1.442695
        %v2878 = vpow.pop %v2877
        %v2879 = vmul.f32 %v2712, 1.442695
        %v2880 = vpow.pop %v2879
        %v2881 = vmul.f32 %v2713, 1.442695
        %v2882 = vpow.pop %v2881
        %v2883 = vmul.f32 %v2714, 1.442695
        %v2884 = vpow.pop %v2883
        %v2885 = vmul.f32 %v2715, 1.442695
        %v2886 = vpow.pop %v2885
        %v2887 = vmul.f32 %v2716, 1.442695
        %v2888 = vpow.pop %v2887
        %v2889 = vmul.f32 %v2717, 1.442695
        %v2890 = vpow.pop %v2889
        %v2891 = vmul.f32 %v2718, 1.442695
        %v2892 = vpow.pop %v2891
        %v2893 = vmul.f32 %v2719, 1.442695
        %v2894 = vpow.pop %v2893
        %v2895 = vmul.f32 %v2720, 1.442695
        %v2896 = vpow.pop %v2895
        %v2897 = vmul.f32 %v2721, 1.442695
        %v2898 = vpow.pop %v2897
        %v2899 = vmul.f32 %v2722, 1.442695
        %v2900 = vpow.pop %v2899
        %v2901 = vmul.f32 %v2723, 1.442695
        %v2902 = vpow.pop %v2901
        %v2903 = vmul.f32 %v2724, 1.442695
        %v2904 = vpow.pop %v2903
        %v2905 = vmul.f32 %v2725, 1.442695
        %v2906 = vpow.pop %v2905
        %v2907 = vmul.f32 %v2726, 1.442695
        %v2908 = vpow.pop %v2907
        %v2909 = vmul.f32 %v2727, 1.442695
        %v2910 = vpow.pop %v2909
        %v2911 = vmul.f32 %v2728, 1.442695
        %v2912 = vpow.pop %v2911
        %v2913 = vmul.f32 %v2729, 1.442695
        %v2914 = vpow.pop %v2913
        %v2915 = vmul.f32 %v2730, 1.442695
        %v2916 = vpow.pop %v2915
        %v2917 = vmul.f32 %v2731, 1.442695
        %v2918 = vpow.pop %v2917
        %v2919 = vmul.f32 %v2732, 1.442695
        %v2920 = vpow.pop %v2919
        %v2921 = vmul.f32 %v2733, 1.442695
        %v2922 = vpow.pop %v2921
        %v2923 = vmul.f32 %v2734, 1.442695
        %v2924 = vpow.pop %v2923
        %v2925 = vmul.f32 %v2735, 1.442695
        %v2926 = vpow.pop %v2925
        %v2927 = vmul.f32 %v2736, 1.442695
        %v2928 = vpow.pop %v2927
        %v2929 = vmul.f32 %v2737, 1.442695
        %v2930 = vpow.pop %v2929
        %v2931 = vmul.f32 %v2738, 1.442695
        %v2932 = vpow.pop %v2931
        %v2933 = vmul.f32 %v2739, 1.442695
        %v2934 = vpow.pop %v2933
        %v2935 = vmul.f32 %v2740, 1.442695
        %v2936 = vpow.pop %v2935
        %v2937 = vmul.f32 %v2741, 1.442695
        %v2938 = vpow.pop %v2937
        %v2939 = vmul.f32 %v2742, 1.442695
        %v2940 = vpow.pop %v2939
        %v2941 = vmul.f32 %v2743, 1.442695
        %v2942 = vpow.pop %v2941
        %v2943 = vmul.f32 %v2744, 1.442695
        %v2944 = vpow.pop %v2943
        %v2945 = vmul.f32 %v2745, 1.442695
        %v2946 = vpow.pop %v2945
        %v2947 = vmul.f32 %v2746, 1.442695
        %v2948 = vpow.pop %v2947
        %v2949 = vmul.f32 %v2747, 1.442695
        %v2950 = vpow.pop %v2949
        %v2951 = vmul.f32 %v2748, 1.442695
        %v2952 = vpow.pop %v2951
        %v2953 = vmul.f32 %v2749, 1.442695
        %v2954 = vpow.pop %v2953
        %v2955 = vmul.f32 %v2750, 1.442695
        %v2956 = vpow.pop %v2955
        %v2957 = vmul.f32 %v2751, 1.442695
        %v2958 = vpow.pop %v2957
        %v2959 = vmul.f32 %v2752, 1.442695
        %v2960 = vpow.pop %v2959
        %v2961 = vmul.f32 %v2753, 1.442695
        %v2962 = vpow.pop %v2961
        %v2963 = vmul.f32 %v2754, 1.442695
        %v2964 = vpow.pop %v2963
        %v2965 = vmul.f32 %v2755, 1.442695
        %v2966 = vpow.pop %v2965
        %v2967 = vmul.f32 %v2756, 1.442695
        %v2968 = vpow.pop %v2967
        %v2969 = vmul.f32 %v2757, 1.442695
        %v2970 = vpow.pop %v2969
        %v2971 = vmul.f32 %v2758, 1.442695
        %v2972 = vpow.pop %v2971
        %v2973 = vmul.f32 %v2759, 1.442695
        %v2974 = vpow.pop %v2973
        %v2975 = vmul.f32 %v2760, 1.442695
        %v2976 = vpow.pop %v2975
        %v2977 = vmul.f32 %v2761, 1.442695
        %v2978 = vpow.pop %v2977
        %v2979 = vmul.f32 %v2762, 1.442695
        %v2980 = vpow.pop %v2979
        %v2981 = vmul.f32 %v2763, 1.442695
        %v2982 = vpow.pop %v2981
        %v2983 = vmul.f32 %v2764, 1.442695
        %v2984 = vpow.pop %v2983
        %v2985 = vmul.f32 %v2765, 1.442695
        %v2986 = vpow.pop %v2985
        %v2987 = vmul.f32 %v2766, 1.442695
        %v2988 = vpow.pop %v2987
        %v2989 = vmul.f32 %v2767, 1.442695
        %v2990 = vpow.pop %v2989
        %v2991 = vmul.f32 %v2768, 1.442695
        %v2992 = vpow.pop %v2991
        %v2993 = vmul.f32 %v2769, 1.442695
        %v2994 = vpow.pop %v2993
        %v2995 = vmul.f32 %v2770, 1.442695
        %v2996 = vpow.pop %v2995
        %v2997 = vmul.f32 %v2771, 1.442695
        %v2998 = vpow.pop %v2997
        %v2999 = vmul.f32 %v2772, 1.442695
        %v3000 = vpow.pop %v2999
        %v3001 = vmul.f32 %v2773, 1.442695
        %v3002 = vpow.pop %v3001
        %v3003 = vmul.f32 %v2774, 1.442695
        %v3004 = vpow.pop %v3003
        %v3005 = vmul.f32 %v2775, 1.442695
        %v3006 = vpow.pop %v3005
        %v3007 = vmul.f32 %v2776, 1.442695
        %v3008 = vpow.pop %v3007
        %v3009 = vmul.f32 %v2777, 1.442695
        %v3010 = vpow.pop %v3009
        %v3011 = vmul.f32 %v2778, 1.442695
        %v3012 = vpow.pop %v3011
        %v3013 = vmul.f32 %v2779, 1.442695
        %v3014 = vpow.pop %v3013
        %v3015 = vmul.f32 %v2780, 1.442695
        %v3016 = vpow.pop %v3015
        %v3017 = vmul.f32 %v2781, 1.442695
        %v3018 = vpow.pop %v3017
        %v3019 = vmul.f32 %v2782, 1.442695
        %v3020 = vpow.pop %v3019
        %v3021 = vmul.f32 %v2783, 1.442695
        %v3022 = vpow.pop %v3021
        %v3023 = vmul.f32 %v2784, 1.442695
        %v3024 = vpow.pop %v3023
        %v3025 = vmul.f32 %v2785, 1.442695
        %v3026 = vpow.pop %v3025
        %v3027 = vmul.f32 %v2786, 1.442695
        %v3028 = vpow.pop %v3027
        %v3029 = vmul.f32 %v2787, 1.442695
        %v3030 = vpow.pop %v3029
        %v3031 = vmul.f32 %v2788, 1.442695
        %v3032 = vpow.pop %v3031
        %v3033 = vmul.f32 %v2789, 1.442695
        %v3034 = vpow.pop %v3033
        %v3035 = vmul.f32 %v2790, 1.442695
        %v3036 = vpow.pop %v3035
        %v3037 = vmul.f32 %v2791, 1.442695
        %v3038 = vpow.pop %v3037
        %v3039 = vmul.f32 %v2792, 1.442695
        %v3040 = vpow.pop %v3039
        %v3041 = vmul.f32 %v2793, 1.442695
        %v3042 = vpow.pop %v3041
        %v3043 = vmul.f32 %v2794, 1.442695
        %v3044 = vpow.pop %v3043
        %v3045 = vmul.f32 %v2795, 1.442695
        %v3046 = vpow.pop %v3045
        %v3047 = vmul.f32 %v2796, 1.442695
        %v3048 = vpow.pop %v3047
        %v3049 = vmul.f32 %v2797, 1.442695
        %v3050 = vpow.pop %v3049
        %v3051 = vmul.f32 %v2798, 1.442695
        %v3052 = vpow.pop %v3051
        %v3053 = vmul.f32 %v2799, 1.442695
        %v3054 = vpow.pop %v3053
        %v3055 = vmul.f32 %v2800, 1.442695
        %v3056 = vpow.pop %v3055
        %v3057 = vadd.f32 %v2802, 1.0
        %v3058 = vadd.f32 %v2804, 1.0
        %v3059 = vadd.f32 %v2806, 1.0
        %v3060 = vadd.f32 %v2808, 1.0
        %v3061 = vadd.f32 %v2810, 1.0
        %v3062 = vadd.f32 %v2812, 1.0
        %v3063 = vadd.f32 %v2814, 1.0
        %v3064 = vadd.f32 %v2816, 1.0
        %v3065 = vadd.f32 %v2818, 1.0
        %v3066 = vadd.f32 %v2820, 1.0
        %v3067 = vadd.f32 %v2822, 1.0
        %v3068 = vadd.f32 %v2824, 1.0
        %v3069 = vadd.f32 %v2826, 1.0
        %v3070 = vadd.f32 %v2828, 1.0
        %v3071 = vadd.f32 %v2830, 1.0
        %v3072 = vadd.f32 %v2832, 1.0
        %v3073 = vadd.f32 %v2834, 1.0
        %v3074 = vadd.f32 %v2836, 1.0
        %v3075 = vadd.f32 %v2838, 1.0
        %v3076 = vadd.f32 %v2840, 1.0
        %v3077 = vadd.f32 %v2842, 1.0
        %v3078 = vadd.f32 %v2844, 1.0
        %v3079 = vadd.f32 %v2846, 1.0
        %v3080 = vadd.f32 %v2848, 1.0
        %v3081 = vadd.f32 %v2850, 1.0
        %v3082 = vadd.f32 %v2852, 1.0
        %v3083 = vadd.f32 %v2854, 1.0
        %v3084 = vadd.f32 %v2856, 1.0
        %v3085 = vadd.f32 %v2858, 1.0
        %v3086 = vadd.f32 %v2860, 1.0
        %v3087 = vadd.f32 %v2862, 1.0
        %v3088 = vadd.f32 %v2864, 1.0
        %v3089 = vadd.f32 %v2866, 1.0
        %v3090 = vadd.f32 %v2868, 1.0
        %v3091 = vadd.f32 %v2870, 1.0
        %v3092 = vadd.f32 %v2872, 1.0
        %v3093 = vadd.f32 %v2874, 1.0
        %v3094 = vadd.f32 %v2876, 1.0
        %v3095 = vadd.f32 %v2878, 1.0
        %v3096 = vadd.f32 %v2880, 1.0
        %v3097 = vadd.f32 %v2882, 1.0
        %v3098 = vadd.f32 %v2884, 1.0
        %v3099 = vadd.f32 %v2886, 1.0
        %v3100 = vadd.f32 %v2888, 1.0
        %v3101 = vadd.f32 %v2890, 1.0
        %v3102 = vadd.f32 %v2892, 1.0
        %v3103 = vadd.f32 %v2894, 1.0
        %v3104 = vadd.f32 %v2896, 1.0
        %v3105 = vadd.f32 %v2898, 1.0
        %v3106 = vadd.f32 %v2900, 1.0
        %v3107 = vadd.f32 %v2902, 1.0
        %v3108 = vadd.f32 %v2904, 1.0
        %v3109 = vadd.f32 %v2906, 1.0
        %v3110 = vadd.f32 %v2908, 1.0
        %v3111 = vadd.f32 %v2910, 1.0
        %v3112 = vadd.f32 %v2912, 1.0
        %v3113 = vadd.f32 %v2914, 1.0
        %v3114 = vadd.f32 %v2916, 1.0
        %v3115 = vadd.f32 %v2918, 1.0
        %v3116 = vadd.f32 %v2920, 1.0
        %v3117 = vadd.f32 %v2922, 1.0
        %v3118 = vadd.f32 %v2924, 1.0
        %v3119 = vadd.f32 %v2926, 1.0
        %v3120 = vadd.f32 %v2928, 1.0
        %v3121 = vadd.f32 %v2930, 1.0
        %v3122 = vadd.f32 %v2932, 1.0
        %v3123 = vadd.f32 %v2934, 1.0
        %v3124 = vadd.f32 %v2936, 1.0
        %v3125 = vadd.f32 %v2938, 1.0
        %v3126 = vadd.f32 %v2940, 1.0
        %v3127 = vadd.f32 %v2942, 1.0
        %v3128 = vadd.f32 %v2944, 1.0
        %v3129 = vadd.f32 %v2946, 1.0
        %v3130 = vadd.f32 %v2948, 1.0
        %v3131 = vadd.f32 %v2950, 1.0
        %v3132 = vadd.f32 %v2952, 1.0
        %v3133 = vadd.f32 %v2954, 1.0
        %v3134 = vadd.f32 %v2956, 1.0
        %v3135 = vadd.f32 %v2958, 1.0
        %v3136 = vadd.f32 %v2960, 1.0
        %v3137 = vadd.f32 %v2962, 1.0
        %v3138 = vadd.f32 %v2964, 1.0
        %v3139 = vadd.f32 %v2966, 1.0
        %v3140 = vadd.f32 %v2968, 1.0
        %v3141 = vadd.f32 %v2970, 1.0
        %v3142 = vadd.f32 %v2972, 1.0
        %v3143 = vadd.f32 %v2974, 1.0
        %v3144 = vadd.f32 %v2976, 1.0
        %v3145 = vadd.f32 %v2978, 1.0
        %v3146 = vadd.f32 %v2980, 1.0
        %v3147 = vadd.f32 %v2982, 1.0
        %v3148 = vadd.f32 %v2984, 1.0
        %v3149 = vadd.f32 %v2986, 1.0
        %v3150 = vadd.f32 %v2988, 1.0
        %v3151 = vadd.f32 %v2990, 1.0
        %v3152 = vadd.f32 %v2992, 1.0
        %v3153 = vadd.f32 %v2994, 1.0
        %v3154 = vadd.f32 %v2996, 1.0
        %v3155 = vadd.f32 %v2998, 1.0
        %v3156 = vadd.f32 %v3000, 1.0
        %v3157 = vadd.f32 %v3002, 1.0
        %v3158 = vadd.f32 %v3004, 1.0
        %v3159 = vadd.f32 %v3006, 1.0
        %v3160 = vadd.f32 %v3008, 1.0
        %v3161 = vadd.f32 %v3010, 1.0
        %v3162 = vadd.f32 %v3012, 1.0
        %v3163 = vadd.f32 %v3014, 1.0
        %v3164 = vadd.f32 %v3016, 1.0
        %v3165 = vadd.f32 %v3018, 1.0
        %v3166 = vadd.f32 %v3020, 1.0
        %v3167 = vadd.f32 %v3022, 1.0
        %v3168 = vadd.f32 %v3024, 1.0
        %v3169 = vadd.f32 %v3026, 1.0
        %v3170 = vadd.f32 %v3028, 1.0
        %v3171 = vadd.f32 %v3030, 1.0
        %v3172 = vadd.f32 %v3032, 1.0
        %v3173 = vadd.f32 %v3034, 1.0
        %v3174 = vadd.f32 %v3036, 1.0
        %v3175 = vadd.f32 %v3038, 1.0
        %v3176 = vadd.f32 %v3040, 1.0
        %v3177 = vadd.f32 %v3042, 1.0
        %v3178 = vadd.f32 %v3044, 1.0
        %v3179 = vadd.f32 %v3046, 1.0
        %v3180 = vadd.f32 %v3048, 1.0
        %v3181 = vadd.f32 %v3050, 1.0
        %v3182 = vadd.f32 %v3052, 1.0
        %v3183 = vadd.f32 %v3054, 1.0
        %v3184 = vadd.f32 %v3056, 1.0
        %v3185 = vrcp.pop %v3057
        %v3186 = vrcp.pop %v3058
        %v3187 = vrcp.pop %v3059
        %v3188 = vrcp.pop %v3060
        %v3189 = vrcp.pop %v3061
        %v3190 = vrcp.pop %v3062
        %v3191 = vrcp.pop %v3063
        %v3192 = vrcp.pop %v3064
        %v3193 = vrcp.pop %v3065
        %v3194 = vrcp.pop %v3066
        %v3195 = vrcp.pop %v3067
        %v3196 = vrcp.pop %v3068
        %v3197 = vrcp.pop %v3069
        %v3198 = vrcp.pop %v3070
        %v3199 = vrcp.pop %v3071
        %v3200 = vrcp.pop %v3072
        %v3201 = vrcp.pop %v3073
        %v3202 = vrcp.pop %v3074
        %v3203 = vrcp.pop %v3075
        %v3204 = vrcp.pop %v3076
        %v3205 = vrcp.pop %v3077
        %v3206 = vrcp.pop %v3078
        %v3207 = vrcp.pop %v3079
        %v3208 = vrcp.pop %v3080
        %v3209 = vrcp.pop %v3081
        %v3210 = vrcp.pop %v3082
        %v3211 = vrcp.pop %v3083
        %v3212 = vrcp.pop %v3084
        %v3213 = vrcp.pop %v3085
        %v3214 = vrcp.pop %v3086
        %v3215 = vrcp.pop %v3087
        %v3216 = vrcp.pop %v3088
        %v3217 = vrcp.pop %v3089
        %v3218 = vrcp.pop %v3090
        %v3219 = vrcp.pop %v3091
        %v3220 = vrcp.pop %v3092
        %v3221 = vrcp.pop %v3093
        %v3222 = vrcp.pop %v3094
        %v3223 = vrcp.pop %v3095
        %v3224 = vrcp.pop %v3096
        %v3225 = vrcp.pop %v3097
        %v3226 = vrcp.pop %v3098
        %v3227 = vrcp.pop %v3099
        %v3228 = vrcp.pop %v3100
        %v3229 = vrcp.pop %v3101
        %v3230 = vrcp.pop %v3102
        %v3231 = vrcp.pop %v3103
        %v3232 = vrcp.pop %v3104
        %v3233 = vrcp.pop %v3105
        %v3234 = vrcp.pop %v3106
        %v3235 = vrcp.pop %v3107
        %v3236 = vrcp.pop %v3108
        %v3237 = vrcp.pop %v3109
        %v3238 = vrcp.pop %v3110
        %v3239 = vrcp.pop %v3111
        %v3240 = vrcp.pop %v3112
        %v3241 = vrcp.pop %v3113
        %v3242 = vrcp.pop %v3114
        %v3243 = vrcp.pop %v3115
        %v3244 = vrcp.pop %v3116
        %v3245 = vrcp.pop %v3117
        %v3246 = vrcp.pop %v3118
        %v3247 = vrcp.pop %v3119
        %v3248 = vrcp.pop %v3120
        %v3249 = vrcp.pop %v3121
        %v3250 = vrcp.pop %v3122
        %v3251 = vrcp.pop %v3123
        %v3252 = vrcp.pop %v3124
        %v3253 = vrcp.pop %v3125
        %v3254 = vrcp.pop %v3126
        %v3255 = vrcp.pop %v3127
        %v3256 = vrcp.pop %v3128
        %v3257 = vrcp.pop %v3129
        %v3258 = vrcp.pop %v3130
        %v3259 = vrcp.pop %v3131
        %v3260 = vrcp.pop %v3132
        %v3261 = vrcp.pop %v3133
        %v3262 = vrcp.pop %v3134
        %v3263 = vrcp.pop %v3135
        %v3264 = vrcp.pop %v3136
        %v3265 = vrcp.pop %v3137
        %v3266 = vrcp.pop %v3138
        %v3267 = vrcp.pop %v3139
        %v3268 = vrcp.pop %v3140
        %v3269 = vrcp.pop %v3141
        %v3270 = vrcp.pop %v3142
        %v3271 = vrcp.pop %v3143
        %v3272 = vrcp.pop %v3144
        %v3273 = vrcp.pop %v3145
        %v3274 = vrcp.pop %v3146
        %v3275 = vrcp.pop %v3147
        %v3276 = vrcp.pop %v3148
        %v3277 = vrcp.pop %v3149
        %v3278 = vrcp.pop %v3150
        %v3279 = vrcp.pop %v3151
        %v3280 = vrcp.pop %v3152
        %v3281 = vrcp.pop %v3153
        %v3282 = vrcp.pop %v3154
        %v3283 = vrcp.pop %v3155
        %v3284 = vrcp.pop %v3156
        %v3285 = vrcp.pop %v3157
        %v3286 = vrcp.pop %v3158
        %v3287 = vrcp.pop %v3159
        %v3288 = vrcp.pop %v3160
        %v3289 = vrcp.pop %v3161
        %v3290 = vrcp.pop %v3162
        %v3291 = vrcp.pop %v3163
        %v3292 = vrcp.pop %v3164
        %v3293 = vrcp.pop %v3165
        %v3294 = vrcp.pop %v3166
        %v3295 = vrcp.pop %v3167
        %v3296 = vrcp.pop %v3168
        %v3297 = vrcp.pop %v3169
        %v3298 = vrcp.pop %v3170
        %v3299 = vrcp.pop %v3171
        %v3300 = vrcp.pop %v3172
        %v3301 = vrcp.pop %v3173
        %v3302 = vrcp.pop %v3174
        %v3303 = vrcp.pop %v3175
        %v3304 = vrcp.pop %v3176
        %v3305 = vrcp.pop %v3177
        %v3306 = vrcp.pop %v3178
        %v3307 = vrcp.pop %v3179
        %v3308 = vrcp.pop %v3180
        %v3309 = vrcp.pop %v3181
        %v3310 = vrcp.pop %v3182
        %v3311 = vrcp.pop %v3183
        %v3312 = vrcp.pop %v3184
        %v3313 = vmul.f32 %v2256, %v3185
        %v3314 = vmul.f32 %v2258, %v3186
        %v3315 = vmul.f32 %v2369, %v3187
        %v3316 = vmul.f32 %v2371, %v3188
        %v3317 = vmul.f32 %v2482, %v3189
        %v3318 = vmul.f32 %v2484, %v3190
        %v3319 = vmul.f32 %v2595, %v3191
        %v3320 = vmul.f32 %v2597, %v3192
        %v3321 = vmul.f32 %v2260, %v3193
        %v3322 = vmul.f32 %v2262, %v3194
        %v3323 = vmul.f32 %v2373, %v3195
        %v3324 = vmul.f32 %v2375, %v3196
        %v3325 = vmul.f32 %v2486, %v3197
        %v3326 = vmul.f32 %v2488, %v3198
        %v3327 = vmul.f32 %v2599, %v3199
        %v3328 = vmul.f32 %v2601, %v3200
        %v3329 = vmul.f32 %v2266, %v3201
        %v3330 = vmul.f32 %v2268, %v3202
        %v3331 = vmul.f32 %v2379, %v3203
        %v3332 = vmul.f32 %v2381, %v3204
        %v3333 = vmul.f32 %v2492, %v3205
        %v3334 = vmul.f32 %v2494, %v3206
        %v3335 = vmul.f32 %v2605, %v3207
        %v3336 = vmul.f32 %v2607, %v3208
        %v3337 = vmul.f32 %v2270, %v3209
        %v3338 = vmul.f32 %v2272, %v3210
        %v3339 = vmul.f32 %v2383, %v3211
        %v3340 = vmul.f32 %v2385, %v3212
        %v3341 = vmul.f32 %v2496, %v3213
        %v3342 = vmul.f32 %v2498, %v3214
        %v3343 = vmul.f32 %v2609, %v3215
        %v3344 = vmul.f32 %v2611, %v3216
        %v3345 = vmul.f32 %v2276, %v3217
        %v3346 = vmul.f32 %v2278, %v3218
        %v3347 = vmul.f32 %v2389, %v3219
        %v3348 = vmul.f32 %v2391, %v3220
        %v3349 = vmul.f32 %v2502, %v3221
        %v3350 = vmul.f32 %v2504, %v3222
        %v3351 = vmul.f32 %v2615, %v3223
        %v3352 = vmul.f32 %v2617, %v3224
        %v3353 = vmul.f32 %v2280, %v3225
        %v3354 = vmul.f32 %v2282, %v3226
        %v3355 = vmul.f32 %v2393, %v3227
        %v3356 = vmul.f32 %v2395, %v3228
        %v3357 = vmul.f32 %v2506, %v3229
        %v3358 = vmul.f32 %v2508, %v3230
        %v3359 = vmul.f32 %v2619, %v3231
        %v3360 = vmul.f32 %v2621, %v3232
        %v3361 = vmul.f32 %v2286, %v3233
        %v3362 = vmul.f32 %v2288, %v3234
        %v3363 = vmul.f32 %v2399, %v3235
        %v3364 = vmul.f32 %v2401, %v3236
        %v3365 = vmul.f32 %v2512, %v3237
        %v3366 = vmul.f32 %v2514, %v3238
        %v3367 = vmul.f32 %v2625, %v3239
        %v3368 = vmul.f32 %v2627, %v3240
        %v3369 = vmul.f32 %v2290, %v3241
        %v3370 = vmul.f32 %v2292, %v3242
        %v3371 = vmul.f32 %v2403, %v3243
        %v3372 = vmul.f32 %v2405, %v3244
        %v3373 = vmul.f32 %v2516, %v3245
        %v3374 = vmul.f32 %v2518, %v3246
        %v3375 = vmul.f32 %v2629, %v3247
        %v3376 = vmul.f32 %v2631, %v3248
        %v3377 = vmul.f32 %v2296, %v3249
        %v3378 = vmul.f32 %v2298, %v3250
        %v3379 = vmul.f32 %v2409, %v3251
        %v3380 = vmul.f32 %v2411, %v3252
        %v3381 = vmul.f32 %v2522, %v3253
        %v3382 = vmul.f32 %v2524, %v3254
        %v3383 = vmul.f32 %v2635, %v3255
        %v3384 = vmul.f32 %v2637, %v3256
        %v3385 = vmul.f32 %v2300, %v3257
        %v3386 = vmul.f32 %v2302, %v3258
        %v3387 = vmul.f32 %v2413, %v3259
        %v3388 = vmul.f32 %v2415, %v3260
        %v3389 = vmul.f32 %v2526, %v3261
        %v3390 = vmul.f32 %v2528, %v3262
        %v3391 = vmul.f32 %v2639, %v3263
        %v3392 = vmul.f32 %v2641, %v3264
        %v3393 = vmul.f32 %v2306, %v3265
        %v3394 = vmul.f32 %v2308, %v3266
        %v3395 = vmul.f32 %v2419, %v3267
        %v3396 = vmul.f32 %v2421, %v3268
        %v3397 = vmul.f32 %v2532, %v3269
        %v3398 = vmul.f32 %v2534, %v3270
        %v3399 = vmul.f32 %v2645, %v3271
        %v3400 = vmul.f32 %v2647, %v3272
        %v3401 = vmul.f32 %v2310, %v3273
        %v3402 = vmul.f32 %v2312, %v3274
        %v3403 = vmul.f32 %v2423, %v3275
        %v3404 = vmul.f32 %v2425, %v3276
        %v3405 = vmul.f32 %v2536, %v3277
        %v3406 = vmul.f32 %v2538, %v3278
        %v3407 = vmul.f32 %v2649, %v3279
        %v3408 = vmul.f32 %v2651, %v3280
        %v3409 = vmul.f32 %v2316, %v3281
        %v3410 = vmul.f32 %v2318, %v3282
        %v3411 = vmul.f32 %v2429, %v3283
        %v3412 = vmul.f32 %v2431, %v3284
        %v3413 = vmul.f32 %v2542, %v3285
        %v3414 = vmul.f32 %v2544, %v3286
        %v3415 = vmul.f32 %v2655, %v3287
        %v3416 = vmul.f32 %v2657, %v3288
        %v3417 = vmul.f32 %v2320, %v3289
        %v3418 = vmul.f32 %v2322, %v3290
        %v3419 = vmul.f32 %v2433, %v3291
        %v3420 = vmul.f32 %v2435, %v3292
        %v3421 = vmul.f32 %v2546, %v3293
        %v3422 = vmul.f32 %v2548, %v3294
        %v3423 = vmul.f32 %v2659, %v3295
        %v3424 = vmul.f32 %v2661, %v3296
        %v3425 = vmul.f32 %v2326, %v3297
        %v3426 = vmul.f32 %v2328, %v3298
        %v3427 = vmul.f32 %v2439, %v3299
        %v3428 = vmul.f32 %v2441, %v3300
        %v3429 = vmul.f32 %v2552, %v3301
        %v3430 = vmul.f32 %v2554, %v3302
        %v3431 = vmul.f32 %v2665, %v3303
        %v3432 = vmul.f32 %v2667, %v3304
        %v3433 = vmul.f32 %v2330, %v3305
        %v3434 = vmul.f32 %v2332, %v3306
        %v3435 = vmul.f32 %v2443, %v3307
        %v3436 = vmul.f32 %v2445, %v3308
        %v3437 = vmul.f32 %v2556, %v3309
        %v3438 = vmul.f32 %v2558, %v3310
        %v3439 = vmul.f32 %v2669, %v3311
        %v3440 = vmul.f32 %v2671, %v3312
        %s3441 = sld [smem:[#allocation2]]
        %v3442 = vstv %s3441
        %3443 = vrot.lane.b32.xlu0 %v456, 126
        %v3444 = vpop.permute.xlu0 %3443
        %3445 = vrot.lane.b32.xlu0 %v457, 126
        %v3446 = vpop.permute.xlu0 %3445
        %3447 = vrot.lane.b32.xlu0 %v458, 126
        %v3448 = vpop.permute.xlu0 %3447
        %3449 = vrot.lane.b32.xlu0 %v459, 126
        %v3450 = vpop.permute.xlu0 %3449
        %3451 = vrot.lane.b32.xlu0 %v460, 126
        %v3452 = vpop.permute.xlu0 %3451
        %3453 = vrot.lane.b32.xlu0 %v461, 126
        %v3454 = vpop.permute.xlu0 %3453
        %3455 = vrot.lane.b32.xlu0 %v462, 126
        %v3456 = vpop.permute.xlu0 %3455
        %3457 = vrot.lane.b32.xlu0 %v463, 126
        %v3458 = vpop.permute.xlu0 %3457
        %3459 = vrot.lane.b32.xlu0 %v464, 126
        %v3460 = vpop.permute.xlu0 %3459
        %3461 = vrot.lane.b32.xlu0 %v465, 126
        %v3462 = vpop.permute.xlu0 %3461
        %3463 = vrot.lane.b32.xlu0 %v466, 126
        %v3464 = vpop.permute.xlu0 %3463
        %3465 = vrot.lane.b32.xlu0 %v467, 126
        %v3466 = vpop.permute.xlu0 %3465
        %3467 = vrot.lane.b32.xlu0 %v468, 126
        %v3468 = vpop.permute.xlu0 %3467
        %3469 = vrot.lane.b32.xlu0 %v469, 126
        %v3470 = vpop.permute.xlu0 %3469
        %3471 = vrot.lane.b32.xlu0 %v470, 126
        %v3472 = vpop.permute.xlu0 %3471
        %3473 = vrot.lane.b32.xlu0 %v471, 126
        %v3474 = vpop.permute.xlu0 %3473
        %3491 = vxpose.xlu0.b32.start [1/16] %v3444, 128
        %3492 = vxpose.xlu0.b32.cont [2/16] %v3446, 128
        %3493 = vxpose.xlu0.b32.cont [3/16] %v3448, 128
        %3494 = vxpose.xlu0.b32.cont [4/16] %v3450, 128
        %3495 = vxpose.xlu0.b32.cont [5/16] %v3452, 128
        %3496 = vxpose.xlu0.b32.cont [6/16] %v3454, 128
        %3497 = vxpose.xlu0.b32.cont [7/16] %v3456, 128
        %3498 = vxpose.xlu0.b32.cont [8/16] %v3458, 128
        %3499 = vxpose.xlu0.b32.cont [9/16] %v3460, 128
        %3500 = vxpose.xlu0.b32.cont [10/16] %v3462, 128
        %3501 = vxpose.xlu0.b32.cont [11/16] %v3464, 128
        %3502 = vxpose.xlu0.b32.cont [12/16] %v3466, 128
        %3503 = vxpose.xlu0.b32.cont [13/16] %v3468, 128
        %3504 = vxpose.xlu0.b32.cont [14/16] %v3470, 128
        %3505 = vxpose.xlu0.b32.cont [15/16] %v3472, 128
        %3506 = vxpose.xlu0.b32.end [16/16] %v3474, 128
        %v3507 = vpop.trf.xlu0
        %v3508 = vpop.trf.xlu0
        %v3509 = vpop.trf.xlu0
        %v3510 = vpop.trf.xlu0
        %v3511 = vpop.trf.xlu0
        %v3512 = vpop.trf.xlu0
        %v3513 = vpop.trf.xlu0
        %v3514 = vpop.trf.xlu0
        %v3515 = vpop.trf.xlu0
        %v3516 = vpop.trf.xlu0
        %v3517 = vpop.trf.xlu0
        %v3518 = vpop.trf.xlu0
        %v3519 = vpop.trf.xlu0
        %v3520 = vpop.trf.xlu0
        %v3521 = vpop.trf.xlu0
        %v3522 = vpop.trf.xlu0
        %3523 = vmatprep.subr.mxu0 %v3314
        %3524 = vmatpush1.msra.mxu0 %v3313
        %3525 = vmatprep.subr.mxu0 %v3322
        %3526 = vmatpush1.msra.mxu0 %v3321
        %3527 = vmatprep.subr.mxu0 %v3330
        %3528 = vmatpush1.msra.mxu0 %v3329
        %3529 = vmatprep.subr.mxu0 %v3338
        %3530 = vmatpush1.msra.mxu0 %v3337
        %3531 = vmatprep.subr.mxu0 %v3346
        %3532 = vmatpush1.msra.mxu0 %v3345
        %3533 = vmatprep.subr.mxu0 %v3354
        %3534 = vmatpush1.msra.mxu0 %v3353
        %3535 = vmatprep.subr.mxu0 %v3362
        %3536 = vmatpush1.msra.mxu0 %v3361
        %3537 = vmatprep.subr.mxu0 %v3370
        %3538 = vmatpush1.msra.mxu0 %v3369
        %3539 = vmatprep.subr.mxu0 %v3378
        %3540 = vmatpush1.msra.mxu0 %v3377
        %3541 = vmatprep.subr.mxu0 %v3386
        %3542 = vmatpush1.msra.mxu0 %v3385
        %3543 = vmatprep.subr.mxu0 %v3394
        %3544 = vmatpush1.msra.mxu0 %v3393
        %3545 = vmatprep.subr.mxu0 %v3402
        %3546 = vmatpush1.msra.mxu0 %v3401
        %3547 = vmatprep.subr.mxu0 %v3410
        %3548 = vmatpush1.msra.mxu0 %v3409
        %3549 = vmatprep.subr.mxu0 %v3418
        %3550 = vmatpush1.msra.mxu0 %v3417
        %3551 = vmatprep.subr.mxu0 %v3426
        %3552 = vmatpush1.msra.mxu0 %v3425
        %3553 = vmatprep.subr.mxu0 %v3434
        %3554 = vmatpush1.msra.mxu0 %v3433
        %3555 = vmatprep.subr.mxu0 0.0
        %3556 = vmatpush1.msra.mxu0 0.0
        %3557 = vmatprep.subr.mxu0 0.0
        %3558 = vmatpush1.msra.mxu0 0.0
        %3559 = vmatprep.subr.mxu0 0.0
        %3560 = vmatpush1.msra.mxu0 0.0
        %3561 = vmatprep.subr.mxu0 0.0
        %3562 = vmatpush1.msra.mxu0 0.0
        %3563 = vmatprep.subr.mxu0 0.0
        %3564 = vmatpush1.msra.mxu0 0.0
        %3565 = vmatprep.subr.mxu0 0.0
        %3566 = vmatpush1.msra.mxu0 0.0
        %3567 = vmatprep.subr.mxu0 0.0
        %3568 = vmatpush1.msra.mxu0 0.0
        %3569 = vmatprep.subr.mxu0 0.0
        %3570 = vmatpush1.msra.mxu0 0.0
        %3571 = vmatprep.subr.mxu0 0.0
        %3572 = vmatpush1.msra.mxu0 0.0
        %3573 = vmatprep.subr.mxu0 0.0
        %3574 = vmatpush1.msra.mxu0 0.0
        %3575 = vmatprep.subr.mxu0 0.0
        %3576 = vmatpush1.msra.mxu0 0.0
        %3577 = vmatprep.subr.mxu0 0.0
        %3578 = vmatpush1.msra.mxu0 0.0
        %3579 = vmatprep.subr.mxu0 0.0
        %3580 = vmatpush1.msra.mxu0 0.0
        %3581 = vmatprep.subr.mxu0 0.0
        %3582 = vmatpush1.msra.mxu0 0.0
        %3583 = vmatprep.subr.mxu0 0.0
        %3584 = vmatpush1.msra.mxu0 0.0
        %3585 = vmatprep.subr.mxu0 0.0
        %3586 = vmatpush1.msra.mxu0 0.0
        %3587 = vmatprep.mubr.f32.mxu0 0.0
        %3588 = vmatmul.mubr.f32.gmra.mrb[0].mxu0 %v3507
        %v3589 = vpop.f32.mrb[0].mxu0
        %v3590 = vadd.f32 %v3442, %v3589
        %v3591 = vpop.f32.mrb[0].mxu0
        %v3592 = vadd.f32 %v3442, %v3591
        %3593 = vdwg.mxu0
        %3594 = vmatprep.subr.mxu0 %v3316
        %3595 = vmatpush1.msra.mxu0 %v3315
        %3596 = vmatprep.subr.mxu0 %v3324
        %3597 = vmatpush1.msra.mxu0 %v3323
        %3598 = vmatprep.subr.mxu0 %v3332
        %3599 = vmatpush1.msra.mxu0 %v3331
        %3600 = vmatprep.subr.mxu0 %v3340
        %3601 = vmatpush1.msra.mxu0 %v3339
        %3602 = vmatprep.subr.mxu0 %v3348
        %3603 = vmatpush1.msra.mxu0 %v3347
        %3604 = vmatprep.subr.mxu0 %v3356
        %3605 = vmatpush1.msra.mxu0 %v3355
        %3606 = vmatprep.subr.mxu0 %v3364
        %3607 = vmatpush1.msra.mxu0 %v3363
        %3608 = vmatprep.subr.mxu0 %v3372
        %3609 = vmatpush1.msra.mxu0 %v3371
        %3610 = vmatprep.subr.mxu0 %v3380
        %3611 = vmatpush1.msra.mxu0 %v3379
        %3612 = vmatprep.subr.mxu0 %v3388
        %3613 = vmatpush1.msra.mxu0 %v3387
        %3614 = vmatprep.subr.mxu0 %v3396
        %3615 = vmatpush1.msra.mxu0 %v3395
        %3616 = vmatprep.subr.mxu0 %v3404
        %3617 = vmatpush1.msra.mxu0 %v3403
        %3618 = vmatprep.subr.mxu0 %v3412
        %3619 = vmatpush1.msra.mxu0 %v3411
        %3620 = vmatprep.subr.mxu0 %v3420
        %3621 = vmatpush1.msra.mxu0 %v3419
        %3622 = vmatprep.subr.mxu0 %v3428
        %3623 = vmatpush1.msra.mxu0 %v3427
        %3624 = vmatprep.subr.mxu0 %v3436
        %3625 = vmatpush1.msra.mxu0 %v3435
        %3626 = vmatprep.subr.mxu0 0.0
        %3627 = vmatpush1.msra.mxu0 0.0
        %3628 = vmatprep.subr.mxu0 0.0
        %3629 = vmatpush1.msra.mxu0 0.0
        %3630 = vmatprep.subr.mxu0 0.0
        %3631 = vmatpush1.msra.mxu0 0.0
        %3632 = vmatprep.subr.mxu0 0.0
        %3633 = vmatpush1.msra.mxu0 0.0
        %3634 = vmatprep.subr.mxu0 0.0
        %3635 = vmatpush1.msra.mxu0 0.0
        %3636 = vmatprep.subr.mxu0 0.0
        %3637 = vmatpush1.msra.mxu0 0.0
        %3638 = vmatprep.subr.mxu0 0.0
        %3639 = vmatpush1.msra.mxu0 0.0
        %3640 = vmatprep.subr.mxu0 0.0
        %3641 = vmatpush1.msra.mxu0 0.0
        %3642 = vmatprep.subr.mxu0 0.0
        %3643 = vmatpush1.msra.mxu0 0.0
        %3644 = vmatprep.subr.mxu0 0.0
        %3645 = vmatpush1.msra.mxu0 0.0
        %3646 = vmatprep.subr.mxu0 0.0
        %3647 = vmatpush1.msra.mxu0 0.0
        %3648 = vmatprep.subr.mxu0 0.0
        %3649 = vmatpush1.msra.mxu0 0.0
        %3650 = vmatprep.subr.mxu0 0.0
        %3651 = vmatpush1.msra.mxu0 0.0
        %3652 = vmatprep.subr.mxu0 0.0
        %3653 = vmatpush1.msra.mxu0 0.0
        %3654 = vmatprep.subr.mxu0 0.0
        %3655 = vmatpush1.msra.mxu0 0.0
        %3656 = vmatprep.subr.mxu0 0.0
        %3657 = vmatpush1.msra.mxu0 0.0
        %3658 = vmatprep.mubr.f32.mxu0 0.0
        %3659 = vmatmul.mubr.f32.gmra.mrb[0].mxu0 %v3507
        %v3660 = vpop.f32.mrb[0].mxu0
        %v3661 = vadd.f32 %v3442, %v3660
        %v3662 = vpop.f32.mrb[0].mxu0
        %v3663 = vadd.f32 %v3442, %v3662
        %3664 = vdwg.mxu0
        %3665 = vmatprep.subr.mxu0 %v3318
        %3666 = vmatpush1.msra.mxu0 %v3317
        %3667 = vmatprep.subr.mxu0 %v3326
        %3668 = vmatpush1.msra.mxu0 %v3325
        %3669 = vmatprep.subr.mxu0 %v3334
        %3670 = vmatpush1.msra.mxu0 %v3333
        %3671 = vmatprep.subr.mxu0 %v3342
        %3672 = vmatpush1.msra.mxu0 %v3341
        %3673 = vmatprep.subr.mxu0 %v3350
        %3674 = vmatpush1.msra.mxu0 %v3349
        %3675 = vmatprep.subr.mxu0 %v3358
        %3676 = vmatpush1.msra.mxu0 %v3357
        %3677 = vmatprep.subr.mxu0 %v3366
        %3678 = vmatpush1.msra.mxu0 %v3365
        %3679 = vmatprep.subr.mxu0 %v3374
        %3680 = vmatpush1.msra.mxu0 %v3373
        %3681 = vmatprep.subr.mxu0 %v3382
        %3682 = vmatpush1.msra.mxu0 %v3381
        %3683 = vmatprep.subr.mxu0 %v3390
        %3684 = vmatpush1.msra.mxu0 %v3389
        %3685 = vmatprep.subr.mxu0 %v3398
        %3686 = vmatpush1.msra.mxu0 %v3397
        %3687 = vmatprep.subr.mxu0 %v3406
        %3688 = vmatpush1.msra.mxu0 %v3405
        %3689 = vmatprep.subr.mxu0 %v3414
        %3690 = vmatpush1.msra.mxu0 %v3413
        %3691 = vmatprep.subr.mxu0 %v3422
        %3692 = vmatpush1.msra.mxu0 %v3421
        %3693 = vmatprep.subr.mxu0 %v3430
        %3694 = vmatpush1.msra.mxu0 %v3429
        %3695 = vmatprep.subr.mxu0 %v3438
        %3696 = vmatpush1.msra.mxu0 %v3437
        %3697 = vmatprep.subr.mxu0 0.0
        %3698 = vmatpush1.msra.mxu0 0.0
        %3699 = vmatprep.subr.mxu0 0.0
        %3700 = vmatpush1.msra.mxu0 0.0
        %3701 = vmatprep.subr.mxu0 0.0
        %3702 = vmatpush1.msra.mxu0 0.0
        %3703 = vmatprep.subr.mxu0 0.0
        %3704 = vmatpush1.msra.mxu0 0.0
        %3705 = vmatprep.subr.mxu0 0.0
        %3706 = vmatpush1.msra.mxu0 0.0
        %3707 = vmatprep.subr.mxu0 0.0
        %3708 = vmatpush1.msra.mxu0 0.0
        %3709 = vmatprep.subr.mxu0 0.0
        %3710 = vmatpush1.msra.mxu0 0.0
        %3711 = vmatprep.subr.mxu0 0.0
        %3712 = vmatpush1.msra.mxu0 0.0
        %3713 = vmatprep.subr.mxu0 0.0
        %3714 = vmatpush1.msra.mxu0 0.0
        %3715 = vmatprep.subr.mxu0 0.0
        %3716 = vmatpush1.msra.mxu0 0.0
        %3717 = vmatprep.subr.mxu0 0.0
        %3718 = vmatpush1.msra.mxu0 0.0
        %3719 = vmatprep.subr.mxu0 0.0
        %3720 = vmatpush1.msra.mxu0 0.0
        %3721 = vmatprep.subr.mxu0 0.0
        %3722 = vmatpush1.msra.mxu0 0.0
        %3723 = vmatprep.subr.mxu0 0.0
        %3724 = vmatpush1.msra.mxu0 0.0
        %3725 = vmatprep.subr.mxu0 0.0
        %3726 = vmatpush1.msra.mxu0 0.0
        %3727 = vmatprep.subr.mxu0 0.0
        %3728 = vmatpush1.msra.mxu0 0.0
        %3729 = vmatprep.mubr.f32.mxu0 0.0
        %3730 = vmatmul.mubr.f32.gmra.mrb[0].mxu0 %v3507
        %v3731 = vpop.f32.mrb[0].mxu0
        %v3732 = vadd.f32 %v3442, %v3731
        %v3733 = vpop.f32.mrb[0].mxu0
        %v3734 = vadd.f32 %v3442, %v3733
        %3735 = vdwg.mxu0
        %3736 = vmatprep.subr.mxu0 %v3320
        %3737 = vmatpush1.msra.mxu0 %v3319
        %3738 = vmatprep.subr.mxu0 %v3328
        %3739 = vmatpush1.msra.mxu0 %v3327
        %3740 = vmatprep.subr.mxu0 %v3336
        %3741 = vmatpush1.msra.mxu0 %v3335
        %3742 = vmatprep.subr.mxu0 %v3344
        %3743 = vmatpush1.msra.mxu0 %v3343
        %3744 = vmatprep.subr.mxu0 %v3352
        %3745 = vmatpush1.msra.mxu0 %v3351
        %3746 = vmatprep.subr.mxu0 %v3360
        %3747 = vmatpush1.msra.mxu0 %v3359
        %3748 = vmatprep.subr.mxu0 %v3368
        %3749 = vmatpush1.msra.mxu0 %v3367
        %3750 = vmatprep.subr.mxu0 %v3376
        %3751 = vmatpush1.msra.mxu0 %v3375
        %3752 = vmatprep.subr.mxu0 %v3384
        %3753 = vmatpush1.msra.mxu0 %v3383
        %3754 = vmatprep.subr.mxu0 %v3392
        %3755 = vmatpush1.msra.mxu0 %v3391
        %3756 = vmatprep.subr.mxu0 %v3400
        %3757 = vmatpush1.msra.mxu0 %v3399
        %3758 = vmatprep.subr.mxu0 %v3408
        %3759 = vmatpush1.msra.mxu0 %v3407
        %3760 = vmatprep.subr.mxu0 %v3416
        %3761 = vmatpush1.msra.mxu0 %v3415
        %3762 = vmatprep.subr.mxu0 %v3424
        %3763 = vmatpush1.msra.mxu0 %v3423
        %3764 = vmatprep.subr.mxu0 %v3432
        %3765 = vmatpush1.msra.mxu0 %v3431
        %3766 = vmatprep.subr.mxu0 %v3440
        %3767 = vmatpush1.msra.mxu0 %v3439
        %3768 = vmatprep.subr.mxu0 0.0
        %3769 = vmatpush1.msra.mxu0 0.0
        %3770 = vmatprep.subr.mxu0 0.0
        %3771 = vmatpush1.msra.mxu0 0.0
        %3772 = vmatprep.subr.mxu0 0.0
        %3773 = vmatpush1.msra.mxu0 0.0
        %3774 = vmatprep.subr.mxu0 0.0
        %3775 = vmatpush1.msra.mxu0 0.0
        %3776 = vmatprep.subr.mxu0 0.0
        %3777 = vmatpush1.msra.mxu0 0.0
        %3778 = vmatprep.subr.mxu0 0.0
        %3779 = vmatpush1.msra.mxu0 0.0
        %3780 = vmatprep.subr.mxu0 0.0
        %3781 = vmatpush1.msra.mxu0 0.0
        %3782 = vmatprep.subr.mxu0 0.0
        %3783 = vmatpush1.msra.mxu0 0.0
        %3784 = vmatprep.subr.mxu0 0.0
        %3785 = vmatpush1.msra.mxu0 0.0
        %3786 = vmatprep.subr.mxu0 0.0
        %3787 = vmatpush1.msra.mxu0 0.0
        %3788 = vmatprep.subr.mxu0 0.0
        %3789 = vmatpush1.msra.mxu0 0.0
        %3790 = vmatprep.subr.mxu0 0.0
        %3791 = vmatpush1.msra.mxu0 0.0
        %3792 = vmatprep.subr.mxu0 0.0
        %3793 = vmatpush1.msra.mxu0 0.0
        %3794 = vmatprep.subr.mxu0 0.0
        %3795 = vmatpush1.msra.mxu0 0.0
        %3796 = vmatprep.subr.mxu0 0.0
        %3797 = vmatpush1.msra.mxu0 0.0
        %3798 = vmatprep.subr.mxu0 0.0
        %3799 = vmatpush1.msra.mxu0 0.0
        %3800 = vmatprep.mubr.f32.mxu0 0.0
        %3801 = vmatmul.mubr.f32.gmra.mrb[0].mxu0 %v3507
        %v3802 = vpop.f32.mrb[0].mxu0
        %v3803 = vadd.f32 %v3442, %v3802
        %v3804 = vpop.f32.mrb[0].mxu0
        %v3805 = vadd.f32 %v3442, %v3804
        %3806 = vdwg.mxu0
        %v3815 = vcombine.low %v3590, %v3592
        %v3816 = vcombine.low %v3661, %v3663
        %v3817 = vcombine.low %v3732, %v3734
        %v3818 = vcombine.low %v3803, %v3805
        %v3820 = vunpack.c.l.s4 1966171168
        %v3821 = vunpack.c.0.s8 %v3820
        %v3822 = vlaneseq
        %v3823 = vshrl.u32 %v3822, 7
        %v3824 = vsub.s32 %v3821, %v3823
        %v3825 = vrot.slane %v3815, %v3824
        %v3827 = vunpack.c.l.s4 1966171168
        %v3828 = vunpack.c.0.s8 %v3827
        %v3829 = vlaneseq
        %v3830 = vshrl.u32 %v3829, 7
        %v3831 = vsub.s32 %v3828, %v3830
        %v3832 = vrot.slane %v3816, %v3831
        %v3834 = vunpack.c.l.s4 1966171168
        %v3835 = vunpack.c.0.s8 %v3834
        %v3836 = vlaneseq
        %v3837 = vshrl.u32 %v3836, 7
        %v3838 = vsub.s32 %v3835, %v3837
        %v3839 = vrot.slane %v3817, %v3838
        %v3841 = vunpack.c.l.s4 1966171168
        %v3842 = vunpack.c.0.s8 %v3841
        %v3843 = vlaneseq
        %v3844 = vshrl.u32 %v3843, 7
        %v3845 = vsub.s32 %v3842, %v3844
        %v3846 = vrot.slane %v3818, %v3845
        %v3847 = vcombine.low %v3825, %v3832
        %v3848 = vcombine.low %v3839, %v3846
        %v3850 = vunpack.c.l.s4 1966171168
        %v3851 = vunpack.c.0.s8 %v3850
        %v3852 = vlaneseq
        %v3853 = vshrl.u32 %v3852, 7
        %v3854 = vsub.s32 %v3851, %v3853
        %v3855 = vrot.slane %v3847, %v3854
        %v3857 = vunpack.c.l.s4 1966171168
        %v3858 = vunpack.c.0.s8 %v3857
        %v3859 = vlaneseq
        %v3860 = vshrl.u32 %v3859, 7
        %v3861 = vsub.s32 %v3858, %v3860
        %v3862 = vrot.slane %v3848, %v3861
        %v3863 = vcombine.low %v3855, %v3862
        %3865 = vst [vmem:[%s231] sm:$0xff] %v3863
        %s3866 = sand.u32 %s138, 1
        %s3867 = scalar_lea.sflag [#allocation4], %s3866
        %s3868 = sand.u32 %s138, 1
        %s3869 = smul.addr %s3868, 8
        %s3870 = scalar_lea.vmem [#allocation3], %s3869
        // Predicated region
        $region41: #{dual_graph_bond_reactivity.1} parent=39 // pred_check
          %p3871 = pneg %p148
        $region42: #{dual_graph_bond_reactivity.1} parent=39 // pred_check_branch
          %3873 = sbr.rel (%p3871) target = $region44
        $region43: #{dual_graph_bond_reactivity.1} parent=39 // pred_region
          %s3874 = smul.u32 8, %s20
          %s3876 = ssub.s32 128, 128
          %3877 = vsyncadd %s3867, %s3876
          %s3878 = smul.addr %s3874, 16
          %s3879 = scalar_lea.hbm %s5, %s3878
          %s3881 = sshll.u32 %s3870, 4
          %s3882 = int_to_ptr.vmem [resolvable:$true] %s3881
          %3884 = dma.vmem_to_hbm [thread:$0]  %s3882, 128, %s3879, %s3867
        $region44: #{dual_graph_bond_reactivity.1} parent=39 // pred_fallthru
          _
      $region40: #{dual_graph_bond_reactivity.1} parent=5 // pred_fallthru
        _
      %p3885 = scmp.le.s32.totalorder 2, %s15
      // Predicated region
      $region45: #{dual_graph_bond_reactivity.1} parent=5 // pred_check
        %p3886 = pneg %p3885
      $region46: #{dual_graph_bond_reactivity.1} parent=5 // pred_check_branch
        %3888 = sbr.rel (%p3886) target = $region48
      $region47: #{dual_graph_bond_reactivity.1} parent=5 // pred_region
        %s3889 = ssub.s32 %s15, 2
        // Predicated region
        $region49: #{dual_graph_bond_reactivity.1} parent=47 // pred_check
          %p3890 = pneg %p154
        $region50: #{dual_graph_bond_reactivity.1} parent=47 // pred_check_branch
          %3892 = sbr.rel (%p3890) target = $region52
        $region51: #{dual_graph_bond_reactivity.1} parent=47 // pred_region
          %s3893 = sand.u32 %s139, 1
          %s3894 = scalar_lea.sflag [#allocation4], %s3893
          %s3895 = sand.u32 %s139, 1
          %s3896 = smul.addr %s3895, 8
          %s3897 = scalar_lea.vmem [#allocation3], %s3896
          %3898 = dma.done %s3894, 128
        $region52: #{dual_graph_bond_reactivity.1} parent=47 // pred_fallthru
          _
      $region48: #{dual_graph_bond_reactivity.1} parent=5 // pred_fallthru
        _
    $region6: #{dual_graph_bond_reactivity.1} parent=1 // loop_footer
      %s19 = sadd.s32 1, %s15
    $region7: #{dual_graph_bond_reactivity.1} parent=1 // loop_footer_branch
      %14 = sbr.rel target = $region3
    $region8: #{dual_graph_bond_reactivity.1} parent=1 // loop_exit
      _
    %3899 = vsyncpa [#allocation4], 1
    %s3900 = scalar_lea.sflag [#allocation4], 1
    %3901 = vsyncpa %s3900, 1

</llo_original>
